<compile_context>
chip_gen: v5e
topology: v5e:2x2
jax: 0.10.0
libtpu: 0.0.40
codegen_flags: <defaults>
</compile_context>

<pallas_src>
from functools import partial

import jax
import jax.numpy as jnp
from jax.experimental import pallas as pl
from jax.experimental.pallas import tpu as pltpu


# --------------------------- generation-aware sizing ------------------------

def _vmem_limit_bytes():
    """Scoped-VMEM limit ~3/4 of physical capacity (capped at 100 MiB)."""
    cap = 64 * 1024 * 1024                     # conservative fallback (v7x-sized)
    try:
        cap = int(pltpu.get_tpu_info().vmem_capacity_bytes)
    except Exception:
        pass
    return max(32 * 1024 * 1024, min(cap * 3 // 4, 100 * 1024 * 1024))


VMEM_LIMIT = _vmem_limit_bytes()


def _mlp_row_target(D):
    """Row-tile target for the token-parallel kernels (MLP / qkv proj)."""
    # resident bf16 c_fc + c_proj weights ~16*D^2 B; per-row activations
    # (x/out double-buffered f32 + h,g f32 hidden) ~48*D B.
    budget = VMEM_LIMIT - 16 * D * D - (4 << 20)
    if budget <= 0:
        return 128
    tm = budget // (48 * max(D, 1))
    tm = int(max(128, min(1024, tm)))
    return max(8, (tm // 8) * 8)


def _row_tile(M, target):
    """8-aligned row tile; grid uses cdiv + padding (no divisor search)."""
    target = max(8, min(int(target), M))
    n_tiles = pl.cdiv(M, target)
    t = pl.cdiv(M, n_tiles)
    return ((t + 7) // 8) * 8


def _q_tile(S, D, H):
    """Query tile for the attention core: per-step scores are (H, TQ, S)."""
    # scores f32 + probs bf16 ~6*H*S B per query row; resident double-buffered
    # bf16 K/V ~8*S*D B; resident wo bf16 ~2*D^2 B.
    budget = VMEM_LIMIT - 8 * S * D - 2 * D * D - (4 << 20)
    per_row = 6 * H * S + 24 * D
    tq = budget // per_row if budget > 0 else 8
    target = int(max(128, min(512, tq)))
    target -= target % 8
    if S <= target:
        return S
    for t in range(target, 7, -8):             # largest 8-aligned divisor of S
        if S % t == 0:
            return t
    # TODO(synk): pad query rows / online-softmax KV blocking for awkward S.
    return S


def _const_spec(shape, index_map, single_buffer):
    """BlockSpec for a grid-invariant (weight) input; single-buffer if allowed."""
    if single_buffer:
        return pl.BlockSpec(shape, index_map,
                            pipeline_mode=pl.Buffered(buffer_count=1))
    return pl.BlockSpec(shape, index_map)


# ----------------------------- kernel helpers ------------------------------

def _layernorm(x, w, b, eps=1e-5):
    # PyTorch LayerNorm semantics: fp32 compute, biased variance.
    xf = x.astype(jnp.float32)
    mu = jnp.mean(xf, axis=-1, keepdims=True)
    var = jnp.mean((xf - mu) ** 2, axis=-1, keepdims=True)
    y = (xf - mu) * jax.lax.rsqrt(var + eps)
    return (y * w + b).astype(x.dtype)


def _softmax_lastdim(s):
    m = jnp.max(s, axis=-1, keepdims=True)
    e = jnp.exp(s - m)
    return e * pl.reciprocal(jnp.sum(e, axis=-1, keepdims=True), approx=True)


# ------------------------------ Pallas kernels ------------------------------

def qkv_proj_kernel(x_ref, ln1w_ref, ln1b_ref, wqkv_ref, bqkv_ref,
                    q_ref, k_ref, v_ref, *, scale):
    """q,k,v = split(ln_1(x) @ Wqkv + b); q pre-scaled; for one row tile."""
    D = x_ref.shape[-1]
    x = x_ref[...]                                            # (TM, D) f32
    xn = _layernorm(x, ln1w_ref[...], ln1b_ref[...])
    qkv = jnp.dot(xn.astype(jnp.bfloat16), wqkv_ref[...],
                  preferred_element_type=jnp.float32) + bqkv_ref[...]
    q_ref[...] = (qkv[:, 0 * D:1 * D] * scale).astype(q_ref.dtype)
    k_ref[...] = qkv[:, 1 * D:2 * D].astype(k_ref.dtype)
    v_ref[...] = qkv[:, 2 * D:3 * D].astype(v_ref.dtype)


def attn_core_kernel(x_ref, q_ref, k_ref, v_ref, *refs, n_head, has_mask):
    """x = x + out_proj(softmax(q k^T + mask) v) for one (batch, q-tile)."""
    if has_mask:
        mask_ref = refs[0]
        wo_ref, bo_ref, o_ref = refs[1:]
    else:
        mask_ref = None
        wo_ref, bo_ref, o_ref = refs

    _, TQ, D = x_ref.shape
    S = k_ref.shape[1]
    H = n_head
    dh = D // H

    x = x_ref[0]                                              # (TQ, D) f32
    qh = jnp.swapaxes(q_ref[0].reshape(TQ, H, dh), 0, 1)      # (H, TQ, dh) bf16
    kh = jnp.swapaxes(k_ref[0].reshape(S, H, dh), 0, 1)       # (H, S, dh)  bf16
    vh = jnp.swapaxes(v_ref[0].reshape(S, H, dh), 0, 1)       # (H, S, dh)  bf16

    s = jnp.einsum('hqd,hkd->hqk', qh, kh,
                   preferred_element_type=jnp.float32)        # (H, TQ, S) f32
    if has_mask:
        s = s + mask_ref[...][None, :, :]
    p = _softmax_lastdim(s)                                   # f32
    ctx = jnp.einsum('hqk,hkd->hqd', p.astype(jnp.bfloat16), vh,
                     preferred_element_type=jnp.float32)      # (H, TQ, dh)
    ctx = jnp.swapaxes(ctx, 0, 1).reshape(TQ, D)

    out = jnp.dot(ctx.astype(jnp.bfloat16), wo_ref[...],
                  preferred_element_type=jnp.float32) + bo_ref[...]
    o_ref[0] = (x + out).astype(o_ref.dtype)


def mlp_block_kernel(x_ref, ln2w_ref, ln2b_ref, wfc_ref, bfc_ref,
                     wproj_ref, bproj_ref, o_ref):
    """x = x + c_proj(QuickGELU(c_fc(ln_2(x)))) for one tile of token rows."""
    x = x_ref[...]                                            # (TM, D) f32
    xn = _layernorm(x, ln2w_ref[...], ln2b_ref[...])
    h = jnp.dot(xn.astype(jnp.bfloat16), wfc_ref[...],
                preferred_element_type=jnp.float32) + bfc_ref[...]   # (TM, 4D)
    g = h * jax.nn.sigmoid(1.702 * h)                         # QuickGELU (f32)
    m = jnp.dot(g.astype(jnp.bfloat16), wproj_ref[...],
                preferred_element_type=jnp.float32) + bproj_ref[...]
    o_ref[...] = (x + m).astype(o_ref.dtype)


# ------------------------------ JAX wrappers -------------------------------

def qkv_proj_forward(x_bsd, p, n_head, single_buffer_weights):
    B, S, D = x_bsd.shape
    dh = D // n_head
    M = B * S
    TM = _row_tile(M, _mlp_row_target(D))
    Mp = pl.cdiv(M, TM) * TM
    x2 = x_bsd.reshape(M, D)
    if Mp != M:
        x2 = jnp.pad(x2, ((0, Mp - M), (0, 0)))

    weights = (p["ln1w"], p["ln1b"], p["wqkv_t"], p["bqkv"])
    in_specs = [pl.BlockSpec((TM, D), lambda i: (i, 0))]
    in_specs += [_const_spec(w.shape, lambda i, n=w.ndim: (0,) * n,
                             single_buffer_weights) for w in weights]

    q, k, v = pl.pallas_call(
        partial(qkv_proj_kernel, scale=1.0 / (dh ** 0.5)),
        out_shape=tuple(jax.ShapeDtypeStruct((Mp, D), jnp.bfloat16)
                        for _ in range(3)),
        grid=(Mp // TM,),
        in_specs=in_specs,
        out_specs=tuple(pl.BlockSpec((TM, D), lambda i: (i, 0))
                        for _ in range(3)),
        compiler_params=pltpu.CompilerParams(
            dimension_semantics=("parallel",),
            vmem_limit_bytes=VMEM_LIMIT),
    )(x2, *weights)

    def unflat(a):
        if Mp != M:
            a = a[:M]
        return a.reshape(B, S, D)
    return unflat(q), unflat(k), unflat(v)


def attn_core_forward(x_bsd, q, k, v, mask, p, n_head, single_buffer_weights):
    B, S, D = x_bsd.shape
    TQ = _q_tile(S, D, n_head)
    QT = S // TQ
    has_mask = mask is not None
    kernel = partial(attn_core_kernel, n_head=n_head, has_mask=has_mask)

    in_specs = [
        pl.BlockSpec((1, TQ, D), lambda b, qi: (b, qi, 0)),   # residual x
        pl.BlockSpec((1, TQ, D), lambda b, qi: (b, qi, 0)),   # q tile
        pl.BlockSpec((1, S, D), lambda b, qi: (b, 0, 0)),     # K (re-DMA skipped)
        pl.BlockSpec((1, S, D), lambda b, qi: (b, 0, 0)),     # V (re-DMA skipped)
    ]
    args = [x_bsd, q, k, v]
    if has_mask:
        in_specs.append(pl.BlockSpec((TQ, S), lambda b, qi: (qi, 0)))
        args.append(mask)
    weights = (p["wo_t"], p["bo"])
    in_specs += [_const_spec(w.shape, lambda b, qi, n=w.ndim: (0,) * n,
                             single_buffer_weights) for w in weights]
    args += list(weights)

    return pl.pallas_call(
        kernel,
        out_shape=jax.ShapeDtypeStruct((B, S, D), x_bsd.dtype),
        grid=(B, QT),
        in_specs=in_specs,
        out_specs=pl.BlockSpec((1, TQ, D), lambda b, qi: (b, qi, 0)),
        input_output_aliases={0: 0},
        compiler_params=pltpu.CompilerParams(
            dimension_semantics=("parallel", "parallel"),
            vmem_limit_bytes=VMEM_LIMIT),
    )(*args)


def mlp_block_forward(x_bsd, p, single_buffer_weights):
    B, S, D = x_bsd.shape
    M = B * S
    TM = _row_tile(M, _mlp_row_target(D))
    Mp = pl.cdiv(M, TM) * TM
    x2 = x_bsd.reshape(M, D)
    if Mp != M:
        x2 = jnp.pad(x2, ((0, Mp - M), (0, 0)))

    weights = (p["ln2w"], p["ln2b"], p["wfc_t"], p["bfc"],
               p["wproj_t"], p["bproj"])
    in_specs = [pl.BlockSpec((TM, D), lambda i: (i, 0))]
    in_specs += [_const_spec(w.shape, lambda i, n=w.ndim: (0,) * n,
                             single_buffer_weights) for w in weights]

    out = pl.pallas_call(
        mlp_block_kernel,
        out_shape=jax.ShapeDtypeStruct((Mp, D), x_bsd.dtype),
        grid=(Mp // TM,),
        in_specs=in_specs,
        out_specs=pl.BlockSpec((TM, D), lambda i: (i, 0)),
        input_output_aliases={0: 0},
        compiler_params=pltpu.CompilerParams(
            dimension_semantics=("parallel",),
            vmem_limit_bytes=VMEM_LIMIT),
    )(x2, *weights)
    if Mp != M:
        out = out[:M]
    return out.reshape(B, S, D)


def transformer_forward(x_sbd, params, attn_mask=None, *, n_head,
                        single_buffer_weights=True):
    """x_sbd: (S, B, D) like PyTorch; attn_mask: additive (S, S) float or None."""
    x = jnp.transpose(x_sbd, (1, 0, 2))                  # -> (B, S, D)
    mask = None if attn_mask is None else attn_mask.astype(jnp.float32)
    # TODO(synk): overlap next layer's weight DMA with this layer's compute.
    for p in params:
        q, k, v = qkv_proj_forward(x, p, n_head, single_buffer_weights)
        x = attn_core_forward(x, q, k, v, mask, p, n_head, single_buffer_weights)
        x = mlp_block_forward(x, p, single_buffer_weights)
    return jnp.transpose(x, (1, 0, 2))                   # back to (S, B, D)


def init_params(key, width, layers):
    """Deterministic synthetic parameters.

    PyTorch-shaped (out, in) weights are pre-transposed so kernels compute
    x @ W, and matmul weights are pre-cast to bf16 (halves weight HBM/VMEM
    traffic); biases / LN params stay f32 (added to f32 accumulators).
    """
    D = width
    params = []
    for _ in range(layers):
        key, k0, k1, k2, k3, k4, k5, k6, k7 = jax.random.split(key, 9)
        w_in = 0.02 * jax.random.normal(k0, (3 * D, D), jnp.float32)
        b_in = 0.01 * jax.random.normal(k1, (3 * D,), jnp.float32)
        w_out = 0.02 * jax.random.normal(k2, (D, D), jnp.float32)
        b_out = 0.01 * jax.random.normal(k3, (D,), jnp.float32)
        w_fc = 0.02 * jax.random.normal(k4, (4 * D, D), jnp.float32)
        b_fc = 0.01 * jax.random.normal(k5, (4 * D,), jnp.float32)
        w_pr = 0.02 * jax.random.normal(k6, (D, 4 * D), jnp.float32)
        b_pr = 0.01 * jax.random.normal(k7, (D,), jnp.float32)
        params.append(dict(
            ln1w=jnp.ones((1, D), jnp.float32),
            ln1b=jnp.zeros((1, D), jnp.float32),
            wqkv_t=w_in.T.astype(jnp.bfloat16),        # (D, 3D) bf16
            bqkv=b_in.reshape(1, 3 * D),
            wo_t=w_out.T.astype(jnp.bfloat16),         # (D, D)  bf16
            bo=b_out.reshape(1, D),
            ln2w=jnp.ones((1, D), jnp.float32),
            ln2b=jnp.zeros((1, D), jnp.float32),
            wfc_t=w_fc.T.astype(jnp.bfloat16),         # (D, 4D) bf16
            bfc=b_fc.reshape(1, 4 * D),
            wproj_t=w_pr.T.astype(jnp.bfloat16),       # (4D, D) bf16
            bproj=b_pr.reshape(1, D),
        ))
    return params


if __name__ == "__main__":
    S, B, D, H, L = 8, 2, 32, 4, 2      # seq, batch, width, heads, layers
    key = jax.random.PRNGKey(0)
    kx, kp = jax.random.split(key)
    x = jax.random.normal(kx, (S, B, D), jnp.float32)   # PyTorch layout (S, B, D)
    params = init_params(kp, D, L)
    causal = jnp.triu(jnp.full((S, S), -jnp.inf, jnp.float32), k=1)

    def _run(single_buffer):
        fwd = jax.jit(partial(transformer_forward, n_head=H,
                              single_buffer_weights=single_buffer))
        out = jax.block_until_ready(fwd(x, params))              # no-mask path
        out_m = jax.block_until_ready(fwd(x, params, causal))    # causal mask path
        return out, out_m

    try:
        out, out_m = _run(True)
    except Exception:
        # Fallback: some JAX versions may reject single-buffered weight specs.
        out, out_m = _run(False)

    assert out.shape == (S, B, D) and out.dtype == jnp.float32
    assert bool(jnp.isfinite(out).all())
    assert out_m.shape == (S, B, D) and out_m.dtype == jnp.float32
    assert bool(jnp.isfinite(out_m).all())

    print("KERNEL_OK")
</pallas_src>

<mosaic_0001>
module attributes {stable_mosaic.version = 11 : i64} {
  func.func @attn_core_kernel(%arg0: i32, %arg1: i32, %arg2: memref<1x8x32xf32, #tpu.memory_space<vmem>>, %arg3: memref<1x8x32xbf16, #tpu.memory_space<vmem>>, %arg4: memref<1x8x32xbf16, #tpu.memory_space<vmem>>, %arg5: memref<1x8x32xbf16, #tpu.memory_space<vmem>>, %arg6: memref<32x32xbf16, #tpu.memory_space<vmem>>, %arg7: memref<1x32xf32, #tpu.memory_space<vmem>>, %arg8: memref<1x8x32xf32, #tpu.memory_space<vmem>>) attributes {dimension_semantics = [#tpu.dimension_semantics<parallel>, #tpu.dimension_semantics<parallel>], iteration_bounds = array<i64: 2, 1>, scalar_prefetch = 0 : i64, scratch_operands = 0 : i64, tpu.core_type = #tpu.core_type<tc>, window_params = [{transform_indices = @transform_0, window_bounds = array<i64: 1, 8, 32>}, {transform_indices = @transform_1, window_bounds = array<i64: 1, 8, 32>}, {transform_indices = @transform_2, window_bounds = array<i64: 1, 8, 32>}, {transform_indices = @transform_3, window_bounds = array<i64: 1, 8, 32>}, {pipeline_mode = #tpu.pipeline_mode<synchronous>, transform_indices = @transform_4, window_bounds = array<i64: 32, 32>}, {pipeline_mode = #tpu.pipeline_mode<synchronous>, transform_indices = @transform_5, window_bounds = array<i64: 1, 32>}, {transform_indices = @transform_6, window_bounds = array<i64: 1, 8, 32>}]} {
    %c0 = arith.constant 0 : index
    %c0_0 = arith.constant 0 : index
    %c0_1 = arith.constant 0 : index
    %0 = vector.load %arg2[%c0, %c0_0, %c0_1] : memref<1x8x32xf32, #tpu.memory_space<vmem>>, vector<1x8x32xf32>
    %1 = vector.shape_cast %0 : vector<1x8x32xf32> to vector<8x32xf32>
    %c0_2 = arith.constant 0 : index
    %c0_3 = arith.constant 0 : index
    %c0_4 = arith.constant 0 : index
    %2 = vector.load %arg3[%c0_2, %c0_3, %c0_4] : memref<1x8x32xbf16, #tpu.memory_space<vmem>>, vector<1x8x32xbf16>
    %3 = vector.shape_cast %2 : vector<1x8x32xbf16> to vector<8x32xbf16>
    %4 = vector.shape_cast %3 : vector<8x32xbf16> to vector<8x4x8xbf16>
    %5 = tpu.transpose %4, [1, 0, 2] : vector<8x4x8xbf16> -> vector<4x8x8xbf16>
    %c0_5 = arith.constant 0 : index
    %c0_6 = arith.constant 0 : index
    %c0_7 = arith.constant 0 : index
    %6 = vector.load %arg4[%c0_5, %c0_6, %c0_7] : memref<1x8x32xbf16, #tpu.memory_space<vmem>>, vector<1x8x32xbf16>
    %7 = vector.shape_cast %6 : vector<1x8x32xbf16> to vector<8x32xbf16>
    %8 = vector.shape_cast %7 : vector<8x32xbf16> to vector<8x4x8xbf16>
    %9 = tpu.transpose %8, [1, 0, 2] : vector<8x4x8xbf16> -> vector<4x8x8xbf16>
    %c0_8 = arith.constant 0 : index
    %c0_9 = arith.constant 0 : index
    %c0_10 = arith.constant 0 : index
    %10 = vector.load %arg5[%c0_8, %c0_9, %c0_10] : memref<1x8x32xbf16, #tpu.memory_space<vmem>>, vector<1x8x32xbf16>
    %11 = vector.shape_cast %10 : vector<1x8x32xbf16> to vector<8x32xbf16>
    %12 = vector.shape_cast %11 : vector<8x32xbf16> to vector<8x4x8xbf16>
    %13 = tpu.transpose %12, [1, 0, 2] : vector<8x4x8xbf16> -> vector<4x8x8xbf16>
    "tpu.trace_start"() <{level = 10 : i32, message = "hqd,hkd->hqk"}> : () -> ()
    %cst = arith.constant dense<0.000000e+00> : vector<4x8x8xf32>
    %14 = tpu.matmul %5, %9, %cst {dimension_numbers = #tpu.dot_dimension_numbers<[2], [2], [1], [1], [0, 0, 0, 1, 1, 1], [0], [0]>} : vector<4x8x8xbf16>, vector<4x8x8xbf16>, vector<4x8x8xf32> -> vector<4x8x8xf32>
    "tpu.trace_stop"() : () -> ()
    %cst_11 = arith.constant dense<0xFF800000> : vector<4x8xf32>
    %15 = vector.multi_reduction <maximumf>, %14, %cst_11 [2] : vector<4x8x8xf32> to vector<4x8xf32>
    %16 = vector.shape_cast %15 : vector<4x8xf32> to vector<4x8x1xf32>
    %17 = vector.broadcast %16 : vector<4x8x1xf32> to vector<4x8x8xf32>
    %18 = arith.subf %14, %17 : vector<4x8x8xf32>
    %19 = math.exp %18 : vector<4x8x8xf32>
    %cst_12 = arith.constant dense<0.000000e+00> : vector<4x8xf32>
    %20 = vector.multi_reduction <add>, %19, %cst_12 [2] : vector<4x8x8xf32> to vector<4x8xf32>
    %21 = vector.shape_cast %20 : vector<4x8xf32> to vector<4x8x1xf32>
    %22 = tpu.reciprocal %21 {approx = true} : vector<4x8x1xf32> -> vector<4x8x1xf32>
    %23 = vector.broadcast %22 : vector<4x8x1xf32> to vector<4x8x8xf32>
    %24 = arith.mulf %19, %23 : vector<4x8x8xf32>
    %25 = arith.truncf %24 : vector<4x8x8xf32> to vector<4x8x8xbf16>
    "tpu.trace_start"() <{level = 10 : i32, message = "hqk,hkd->hqd"}> : () -> ()
    %cst_13 = arith.constant dense<0.000000e+00> : vector<4x8x8xf32>
    %26 = tpu.matmul %25, %13, %cst_13 {dimension_numbers = #tpu.dot_dimension_numbers<[2], [1], [1], [2], [0, 0, 0, 1, 1, 2], [0], [0]>} : vector<4x8x8xbf16>, vector<4x8x8xbf16>, vector<4x8x8xf32> -> vector<4x8x8xf32>
    "tpu.trace_stop"() : () -> ()
    %27 = tpu.transpose %26, [1, 0, 2] : vector<4x8x8xf32> -> vector<8x4x8xf32>
    %28 = vector.shape_cast %27 : vector<8x4x8xf32> to vector<8x32xf32>
    %29 = arith.truncf %28 : vector<8x32xf32> to vector<8x32xbf16>
    %c0_14 = arith.constant 0 : index
    %c0_15 = arith.constant 0 : index
    %30 = vector.load %arg6[%c0_14, %c0_15] : memref<32x32xbf16, #tpu.memory_space<vmem>>, vector<32x32xbf16>
    %cst_16 = arith.constant dense<0.000000e+00> : vector<8x32xf32>
    %31 = tpu.matmul %29, %30, %cst_16 {dimension_numbers = #tpu.dot_dimension_numbers<[1], [0], [0], [1], [0, 0, 1, 1], [], []>} : vector<8x32xbf16>, vector<32x32xbf16>, vector<8x32xf32> -> vector<8x32xf32>
    %c0_17 = arith.constant 0 : index
    %c0_18 = arith.constant 0 : index
    %32 = vector.load %arg7[%c0_17, %c0_18] : memref<1x32xf32, #tpu.memory_space<vmem>>, vector<1x32xf32>
    %33 = vector.broadcast %32 : vector<1x32xf32> to vector<8x32xf32>
    %34 = arith.addf %31, %33 : vector<8x32xf32>
    %35 = arith.addf %1, %34 : vector<8x32xf32>
    %c0_19 = arith.constant 0 : index
    %c0_20 = arith.constant 0 : index
    %c0_21 = arith.constant 0 : index
    %36 = vector.load %arg8[%c0_19, %c0_20, %c0_21] : memref<1x8x32xf32, #tpu.memory_space<vmem>>, vector<1x8x32xf32>
    %37 = vector.shape_cast %36 : vector<1x8x32xf32> to vector<8x32xf32>
    %38 = vector.shape_cast %35 : vector<8x32xf32> to vector<1x8x32xf32>
    tpu.vector_store %arg8[%c0_19, %c0_20, %c0_21], %38 {strides = array<i32>} : memref<1x8x32xf32, #tpu.memory_space<vmem>>, vector<1x8x32xf32>,
    return
  }
  func.func @transform_0(%arg0: i32, %arg1: i32) -> (i32, i32, i32) {
    %c0_i32 = arith.constant 0 : i32
    %c0_i32_0 = arith.constant 0 : i32
    return %arg0, %arg1, %c0_i32 : i32, i32, i32
  }
  func.func @transform_1(%arg0: i32, %arg1: i32) -> (i32, i32, i32) {
    %c0_i32 = arith.constant 0 : i32
    %c0_i32_0 = arith.constant 0 : i32
    return %arg0, %arg1, %c0_i32 : i32, i32, i32
  }
  func.func @transform_2(%arg0: i32, %arg1: i32) -> (i32, i32, i32) {
    %c0_i32 = arith.constant 0 : i32
    %c0_i32_0 = arith.constant 0 : i32
    %c0_i32_1 = arith.constant 0 : i32
    return %arg0, %c0_i32, %c0_i32_0 : i32, i32, i32
  }
  func.func @transform_3(%arg0: i32, %arg1: i32) -> (i32, i32, i32) {
    %c0_i32 = arith.constant 0 : i32
    %c0_i32_0 = arith.constant 0 : i32
    %c0_i32_1 = arith.constant 0 : i32
    return %arg0, %c0_i32, %c0_i32_0 : i32, i32, i32
  }
  func.func @transform_4(%arg0: i32, %arg1: i32) -> (i32, i32) {
    %c0_i32 = arith.constant 0 : i32
    %c0_i32_0 = arith.constant 0 : i32
    %c0_i32_1 = arith.constant 0 : i32
    return %c0_i32, %c0_i32_0 : i32, i32
  }
  func.func @transform_5(%arg0: i32, %arg1: i32) -> (i32, i32) {
    %c0_i32 = arith.constant 0 : i32
    %c0_i32_0 = arith.constant 0 : i32
    %c0_i32_1 = arith.constant 0 : i32
    return %c0_i32, %c0_i32_0 : i32, i32
  }
  func.func @transform_6(%arg0: i32, %arg1: i32) -> (i32, i32, i32) {
    %c0_i32 = arith.constant 0 : i32
    %c0_i32_0 = arith.constant 0 : i32
    return %arg0, %arg1, %c0_i32 : i32, i32, i32
  }
}

module attributes {stable_mosaic.version = 11 : i64} {
  func.func @qkv_proj_kernel(%arg0: i32, %arg1: memref<16x32xf32, #tpu.memory_space<vmem>>, %arg2: memref<1x32xf32, #tpu.memory_space<vmem>>, %arg3: memref<1x32xf32, #tpu.memory_space<vmem>>, %arg4: memref<32x96xbf16, #tpu.memory_space<vmem>>, %arg5: memref<1x96xf32, #tpu.memory_space<vmem>>, %arg6: memref<16x32xbf16, #tpu.memory_space<vmem>>, %arg7: memref<16x32xbf16, #tpu.memory_space<vmem>>, %arg8: memref<16x32xbf16, #tpu.memory_space<vmem>>) attributes {dimension_semantics = [#tpu.dimension_semantics<parallel>], iteration_bounds = array<i64: 1>, scalar_prefetch = 0 : i64, scratch_operands = 0 : i64, tpu.core_type = #tpu.core_type<tc>, window_params = [{transform_indices = @transform_0, window_bounds = array<i64: 16, 32>}, {pipeline_mode = #tpu.pipeline_mode<synchronous>, transform_indices = @transform_1, window_bounds = array<i64: 1, 32>}, {pipeline_mode = #tpu.pipeline_mode<synchronous>, transform_indices = @transform_2, window_bounds = array<i64: 1, 32>}, {pipeline_mode = #tpu.pipeline_mode<synchronous>, transform_indices = @transform_3, window_bounds = array<i64: 32, 96>}, {pipeline_mode = #tpu.pipeline_mode<synchronous>, transform_indices = @transform_4, window_bounds = array<i64: 1, 96>}, {transform_indices = @transform_5, window_bounds = array<i64: 16, 32>}, {transform_indices = @transform_6, window_bounds = array<i64: 16, 32>}, {transform_indices = @transform_7, window_bounds = array<i64: 16, 32>}]} {
    %c0 = arith.constant 0 : index
    %c0_0 = arith.constant 0 : index
    %0 = vector.load %arg1[%c0, %c0_0] : memref<16x32xf32, #tpu.memory_space<vmem>>, vector<16x32xf32>
    %c0_1 = arith.constant 0 : index
    %c0_2 = arith.constant 0 : index
    %1 = vector.load %arg2[%c0_1, %c0_2] : memref<1x32xf32, #tpu.memory_space<vmem>>, vector<1x32xf32>
    %c0_3 = arith.constant 0 : index
    %c0_4 = arith.constant 0 : index
    %2 = vector.load %arg3[%c0_3, %c0_4] : memref<1x32xf32, #tpu.memory_space<vmem>>, vector<1x32xf32>
    %cst = arith.constant dense<0.000000e+00> : vector<16xf32>
    %3 = vector.multi_reduction <add>, %0, %cst [1] : vector<16x32xf32> to vector<16xf32>
    %4 = vector.shape_cast %3 : vector<16xf32> to vector<16x1xf32>
    %cst_5 = arith.constant 3.200000e+01 : f32
    %5 = vector.broadcast %cst_5 : f32 to vector<16x1xf32>
    %6 = arith.divf %4, %5 : vector<16x1xf32>
    %7 = vector.broadcast %6 : vector<16x1xf32> to vector<16x32xf32>
    %8 = arith.subf %0, %7 : vector<16x32xf32>
    %9 = arith.mulf %8, %8 : vector<16x32xf32>
    %cst_6 = arith.constant dense<0.000000e+00> : vector<16xf32>
    %10 = vector.multi_reduction <add>, %9, %cst_6 [1] : vector<16x32xf32> to vector<16xf32>
    %11 = vector.shape_cast %10 : vector<16xf32> to vector<16x1xf32>
    %cst_7 = arith.constant 3.200000e+01 : f32
    %12 = vector.broadcast %cst_7 : f32 to vector<16x1xf32>
    %13 = arith.divf %11, %12 : vector<16x1xf32>
    %14 = vector.broadcast %6 : vector<16x1xf32> to vector<16x32xf32>
    %15 = arith.subf %0, %14 : vector<16x32xf32>
    %cst_8 = arith.constant 9.99999974E-6 : f32
    %16 = vector.broadcast %cst_8 : f32 to vector<16x1xf32>
    %17 = arith.addf %13, %16 : vector<16x1xf32>
    %18 = math.rsqrt %17 : vector<16x1xf32>
    %19 = vector.broadcast %18 : vector<16x1xf32> to vector<16x32xf32>
    %20 = arith.mulf %15, %19 : vector<16x32xf32>
    %21 = vector.broadcast %1 : vector<1x32xf32> to vector<16x32xf32>
    %22 = arith.mulf %20, %21 : vector<16x32xf32>
    %23 = vector.broadcast %2 : vector<1x32xf32> to vector<16x32xf32>
    %24 = arith.addf %22, %23 : vector<16x32xf32>
    %25 = arith.truncf %24 : vector<16x32xf32> to vector<16x32xbf16>
    %c0_9 = arith.constant 0 : index
    %c0_10 = arith.constant 0 : index
    %26 = vector.load %arg4[%c0_9, %c0_10] : memref<32x96xbf16, #tpu.memory_space<vmem>>, vector<32x96xbf16>
    %cst_11 = arith.constant dense<0.000000e+00> : vector<16x96xf32>
    %27 = tpu.matmul %25, %26, %cst_11 {dimension_numbers = #tpu.dot_dimension_numbers<[1], [0], [0], [1], [0, 0, 1, 1], [], []>} : vector<16x32xbf16>, vector<32x96xbf16>, vector<16x96xf32> -> vector<16x96xf32>
    %c0_12 = arith.constant 0 : index
    %c0_13 = arith.constant 0 : index
    %28 = vector.load %arg5[%c0_12, %c0_13] : memref<1x96xf32, #tpu.memory_space<vmem>>, vector<1x96xf32>
    %29 = vector.broadcast %28 : vector<1x96xf32> to vector<16x96xf32>
    %30 = arith.addf %27, %29 : vector<16x96xf32>
    %31 = vector.extract_strided_slice %30 {offsets = [0, 0], sizes = [16, 32], strides = [1, 1]} : vector<16x96xf32> to vector<16x32xf32>
    %cst_14 = arith.constant 0.353553385 : f32
    %32 = vector.broadcast %cst_14 : f32 to vector<16x32xf32>
    %33 = arith.mulf %31, %32 : vector<16x32xf32>
    %34 = arith.truncf %33 : vector<16x32xf32> to vector<16x32xbf16>
    %c0_15 = arith.constant 0 : index
    %c0_16 = arith.constant 0 : index
    %35 = vector.load %arg6[%c0_15, %c0_16] : memref<16x32xbf16, #tpu.memory_space<vmem>>, vector<16x32xbf16>
    tpu.vector_store %arg6[%c0_15, %c0_16], %34 {strides = array<i32>} : memref<16x32xbf16, #tpu.memory_space<vmem>>, vector<16x32xbf16>,
    %36 = vector.extract_strided_slice %30 {offsets = [0, 32], sizes = [16, 32], strides = [1, 1]} : vector<16x96xf32> to vector<16x32xf32>
    %37 = arith.truncf %36 : vector<16x32xf32> to vector<16x32xbf16>
    %c0_17 = arith.constant 0 : index
    %c0_18 = arith.constant 0 : index
    %38 = vector.load %arg7[%c0_17, %c0_18] : memref<16x32xbf16, #tpu.memory_space<vmem>>, vector<16x32xbf16>
    tpu.vector_store %arg7[%c0_17, %c0_18], %37 {strides = array<i32>} : memref<16x32xbf16, #tpu.memory_space<vmem>>, vector<16x32xbf16>,
    %39 = vector.extract_strided_slice %30 {offsets = [0, 64], sizes = [16, 32], strides = [1, 1]} : vector<16x96xf32> to vector<16x32xf32>
    %40 = arith.truncf %39 : vector<16x32xf32> to vector<16x32xbf16>
    %c0_19 = arith.constant 0 : index
    %c0_20 = arith.constant 0 : index
    %41 = vector.load %arg8[%c0_19, %c0_20] : memref<16x32xbf16, #tpu.memory_space<vmem>>, vector<16x32xbf16>
    tpu.vector_store %arg8[%c0_19, %c0_20], %40 {strides = array<i32>} : memref<16x32xbf16, #tpu.memory_space<vmem>>, vector<16x32xbf16>,
    return
  }
  func.func @transform_0(%arg0: i32) -> (i32, i32) {
    %c0_i32 = arith.constant 0 : i32
    %c0_i32_0 = arith.constant 0 : i32
    return %arg0, %c0_i32 : i32, i32
  }
  func.func @transform_1(%arg0: i32) -> (i32, i32) {
    %c0_i32 = arith.constant 0 : i32
    %c0_i32_0 = arith.constant 0 : i32
    %c0_i32_1 = arith.constant 0 : i32
    return %c0_i32, %c0_i32_0 : i32, i32
  }
  func.func @transform_2(%arg0: i32) -> (i32, i32) {
    %c0_i32 = arith.constant 0 : i32
    %c0_i32_0 = arith.constant 0 : i32
    %c0_i32_1 = arith.constant 0 : i32
    return %c0_i32, %c0_i32_0 : i32, i32
  }
  func.func @transform_3(%arg0: i32) -> (i32, i32) {
    %c0_i32 = arith.constant 0 : i32
    %c0_i32_0 = arith.constant 0 : i32
    %c0_i32_1 = arith.constant 0 : i32
    return %c0_i32, %c0_i32_0 : i32, i32
  }
  func.func @transform_4(%arg0: i32) -> (i32, i32) {
    %c0_i32 = arith.constant 0 : i32
    %c0_i32_0 = arith.constant 0 : i32
    %c0_i32_1 = arith.constant 0 : i32
    return %c0_i32, %c0_i32_0 : i32, i32
  }
  func.func @transform_5(%arg0: i32) -> (i32, i32) {
    %c0_i32 = arith.constant 0 : i32
    %c0_i32_0 = arith.constant 0 : i32
    return %arg0, %c0_i32 : i32, i32
  }
  func.func @transform_6(%arg0: i32) -> (i32, i32) {
    %c0_i32 = arith.constant 0 : i32
    %c0_i32_0 = arith.constant 0 : i32
    return %arg0, %c0_i32 : i32, i32
  }
  func.func @transform_7(%arg0: i32) -> (i32, i32) {
    %c0_i32 = arith.constant 0 : i32
    %c0_i32_0 = arith.constant 0 : i32
    return %arg0, %c0_i32 : i32, i32
  }
}

module attributes {stable_mosaic.version = 11 : i64} {
  func.func @mlp_block_kernel(%arg0: i32, %arg1: memref<16x32xf32, #tpu.memory_space<vmem>>, %arg2: memref<1x32xf32, #tpu.memory_space<vmem>>, %arg3: memref<1x32xf32, #tpu.memory_space<vmem>>, %arg4: memref<32x128xbf16, #tpu.memory_space<vmem>>, %arg5: memref<1x128xf32, #tpu.memory_space<vmem>>, %arg6: memref<128x32xbf16, #tpu.memory_space<vmem>>, %arg7: memref<1x32xf32, #tpu.memory_space<vmem>>, %arg8: memref<16x32xf32, #tpu.memory_space<vmem>>) attributes {dimension_semantics = [#tpu.dimension_semantics<parallel>], iteration_bounds = array<i64: 1>, scalar_prefetch = 0 : i64, scratch_operands = 0 : i64, tpu.core_type = #tpu.core_type<tc>, window_params = [{transform_indices = @transform_0, window_bounds = array<i64: 16, 32>}, {pipeline_mode = #tpu.pipeline_mode<synchronous>, transform_indices = @transform_1, window_bounds = array<i64: 1, 32>}, {pipeline_mode = #tpu.pipeline_mode<synchronous>, transform_indices = @transform_2, window_bounds = array<i64: 1, 32>}, {pipeline_mode = #tpu.pipeline_mode<synchronous>, transform_indices = @transform_3, window_bounds = array<i64: 32, 128>}, {pipeline_mode = #tpu.pipeline_mode<synchronous>, transform_indices = @transform_4, window_bounds = array<i64: 1, 128>}, {pipeline_mode = #tpu.pipeline_mode<synchronous>, transform_indices = @transform_5, window_bounds = array<i64: 128, 32>}, {pipeline_mode = #tpu.pipeline_mode<synchronous>, transform_indices = @transform_6, window_bounds = array<i64: 1, 32>}, {transform_indices = @transform_7, window_bounds = array<i64: 16, 32>}]} {
    %c0 = arith.constant 0 : index
    %c0_0 = arith.constant 0 : index
    %0 = vector.load %arg1[%c0, %c0_0] : memref<16x32xf32, #tpu.memory_space<vmem>>, vector<16x32xf32>
    %c0_1 = arith.constant 0 : index
    %c0_2 = arith.constant 0 : index
    %1 = vector.load %arg2[%c0_1, %c0_2] : memref<1x32xf32, #tpu.memory_space<vmem>>, vector<1x32xf32>
    %c0_3 = arith.constant 0 : index
    %c0_4 = arith.constant 0 : index
    %2 = vector.load %arg3[%c0_3, %c0_4] : memref<1x32xf32, #tpu.memory_space<vmem>>, vector<1x32xf32>
    %cst = arith.constant dense<0.000000e+00> : vector<16xf32>
    %3 = vector.multi_reduction <add>, %0, %cst [1] : vector<16x32xf32> to vector<16xf32>
    %4 = vector.shape_cast %3 : vector<16xf32> to vector<16x1xf32>
    %cst_5 = arith.constant 3.200000e+01 : f32
    %5 = vector.broadcast %cst_5 : f32 to vector<16x1xf32>
    %6 = arith.divf %4, %5 : vector<16x1xf32>
    %7 = vector.broadcast %6 : vector<16x1xf32> to vector<16x32xf32>
    %8 = arith.subf %0, %7 : vector<16x32xf32>
    %9 = arith.mulf %8, %8 : vector<16x32xf32>
    %cst_6 = arith.constant dense<0.000000e+00> : vector<16xf32>
    %10 = vector.multi_reduction <add>, %9, %cst_6 [1] : vector<16x32xf32> to vector<16xf32>
    %11 = vector.shape_cast %10 : vector<16xf32> to vector<16x1xf32>
    %cst_7 = arith.constant 3.200000e+01 : f32
    %12 = vector.broadcast %cst_7 : f32 to vector<16x1xf32>
    %13 = arith.divf %11, %12 : vector<16x1xf32>
    %14 = vector.broadcast %6 : vector<16x1xf32> to vector<16x32xf32>
    %15 = arith.subf %0, %14 : vector<16x32xf32>
    %cst_8 = arith.constant 9.99999974E-6 : f32
    %16 = vector.broadcast %cst_8 : f32 to vector<16x1xf32>
    %17 = arith.addf %13, %16 : vector<16x1xf32>
    %18 = math.rsqrt %17 : vector<16x1xf32>
    %19 = vector.broadcast %18 : vector<16x1xf32> to vector<16x32xf32>
    %20 = arith.mulf %15, %19 : vector<16x32xf32>
    %21 = vector.broadcast %1 : vector<1x32xf32> to vector<16x32xf32>
    %22 = arith.mulf %20, %21 : vector<16x32xf32>
    %23 = vector.broadcast %2 : vector<1x32xf32> to vector<16x32xf32>
    %24 = arith.addf %22, %23 : vector<16x32xf32>
    %25 = arith.truncf %24 : vector<16x32xf32> to vector<16x32xbf16>
    %c0_9 = arith.constant 0 : index
    %c0_10 = arith.constant 0 : index
    %26 = vector.load %arg4[%c0_9, %c0_10] : memref<32x128xbf16, #tpu.memory_space<vmem>>, vector<32x128xbf16>
    %cst_11 = arith.constant dense<0.000000e+00> : vector<16x128xf32>
    %27 = tpu.matmul %25, %26, %cst_11 {dimension_numbers = #tpu.dot_dimension_numbers<[1], [0], [0], [1], [0, 0, 1, 1], [], []>} : vector<16x32xbf16>, vector<32x128xbf16>, vector<16x128xf32> -> vector<16x128xf32>
    %c0_12 = arith.constant 0 : index
    %c0_13 = arith.constant 0 : index
    %28 = vector.load %arg5[%c0_12, %c0_13] : memref<1x128xf32, #tpu.memory_space<vmem>>, vector<1x128xf32>
    %29 = vector.broadcast %28 : vector<1x128xf32> to vector<16x128xf32>
    %30 = arith.addf %27, %29 : vector<16x128xf32>
    %cst_14 = arith.constant 1.702000e+00 : f32
    %31 = vector.broadcast %cst_14 : f32 to vector<16x128xf32>
    %32 = arith.mulf %31, %30 : vector<16x128xf32>
    %33 = arith.negf %32 : vector<16x128xf32>
    %34 = math.exp %33 : vector<16x128xf32>
    %cst_15 = arith.constant 1.000000e+00 : f32
    %35 = vector.broadcast %cst_15 : f32 to vector<16x128xf32>
    %36 = arith.addf %35, %34 : vector<16x128xf32>
    %37 = arith.divf %35, %36 : vector<16x128xf32>
    %38 = arith.mulf %30, %37 : vector<16x128xf32>
    %39 = arith.truncf %38 : vector<16x128xf32> to vector<16x128xbf16>
    %c0_16 = arith.constant 0 : index
    %c0_17 = arith.constant 0 : index
    %40 = vector.load %arg6[%c0_16, %c0_17] : memref<128x32xbf16, #tpu.memory_space<vmem>>, vector<128x32xbf16>
    %cst_18 = arith.constant dense<0.000000e+00> : vector<16x32xf32>
    %41 = tpu.matmul %39, %40, %cst_18 {dimension_numbers = #tpu.dot_dimension_numbers<[1], [0], [0], [1], [0, 0, 1, 1], [], []>} : vector<16x128xbf16>, vector<128x32xbf16>, vector<16x32xf32> -> vector<16x32xf32>
    %c0_19 = arith.constant 0 : index
    %c0_20 = arith.constant 0 : index
    %42 = vector.load %arg7[%c0_19, %c0_20] : memref<1x32xf32, #tpu.memory_space<vmem>>, vector<1x32xf32>
    %43 = vector.broadcast %42 : vector<1x32xf32> to vector<16x32xf32>
    %44 = arith.addf %41, %43 : vector<16x32xf32>
    %45 = arith.addf %0, %44 : vector<16x32xf32>
    %c0_21 = arith.constant 0 : index
    %c0_22 = arith.constant 0 : index
    %46 = vector.load %arg8[%c0_21, %c0_22] : memref<16x32xf32, #tpu.memory_space<vmem>>, vector<16x32xf32>
    tpu.vector_store %arg8[%c0_21, %c0_22], %45 {strides = array<i32>} : memref<16x32xf32, #tpu.memory_space<vmem>>, vector<16x32xf32>,
    return
  }
  func.func @transform_0(%arg0: i32) -> (i32, i32) {
    %c0_i32 = arith.constant 0 : i32
    %c0_i32_0 = arith.constant 0 : i32
    return %arg0, %c0_i32 : i32, i32
  }
  func.func @transform_1(%arg0: i32) -> (i32, i32) {
    %c0_i32 = arith.constant 0 : i32
    %c0_i32_0 = arith.constant 0 : i32
    %c0_i32_1 = arith.constant 0 : i32
    return %c0_i32, %c0_i32_0 : i32, i32
  }
  func.func @transform_2(%arg0: i32) -> (i32, i32) {
    %c0_i32 = arith.constant 0 : i32
    %c0_i32_0 = arith.constant 0 : i32
    %c0_i32_1 = arith.constant 0 : i32
    return %c0_i32, %c0_i32_0 : i32, i32
  }
  func.func @transform_3(%arg0: i32) -> (i32, i32) {
    %c0_i32 = arith.constant 0 : i32
    %c0_i32_0 = arith.constant 0 : i32
    %c0_i32_1 = arith.constant 0 : i32
    return %c0_i32, %c0_i32_0 : i32, i32
  }
  func.func @transform_4(%arg0: i32) -> (i32, i32) {
    %c0_i32 = arith.constant 0 : i32
    %c0_i32_0 = arith.constant 0 : i32
    %c0_i32_1 = arith.constant 0 : i32
    return %c0_i32, %c0_i32_0 : i32, i32
  }
  func.func @transform_5(%arg0: i32) -> (i32, i32) {
    %c0_i32 = arith.constant 0 : i32
    %c0_i32_0 = arith.constant 0 : i32
    %c0_i32_1 = arith.constant 0 : i32
    return %c0_i32, %c0_i32_0 : i32, i32
  }
  func.func @transform_6(%arg0: i32) -> (i32, i32) {
    %c0_i32 = arith.constant 0 : i32
    %c0_i32_0 = arith.constant 0 : i32
    %c0_i32_1 = arith.constant 0 : i32
    return %c0_i32, %c0_i32_0 : i32, i32
  }
  func.func @transform_7(%arg0: i32) -> (i32, i32) {
    %c0_i32 = arith.constant 0 : i32
    %c0_i32_0 = arith.constant 0 : i32
    return %arg0, %c0_i32 : i32, i32
  }
}

module attributes {stable_mosaic.version = 11 : i64} {
  func.func @qkv_proj_kernel(%arg0: i32, %arg1: memref<16x32xf32, #tpu.memory_space<vmem>>, %arg2: memref<1x32xf32, #tpu.memory_space<vmem>>, %arg3: memref<1x32xf32, #tpu.memory_space<vmem>>, %arg4: memref<32x96xbf16, #tpu.memory_space<vmem>>, %arg5: memref<1x96xf32, #tpu.memory_space<vmem>>, %arg6: memref<16x32xbf16, #tpu.memory_space<vmem>>, %arg7: memref<16x32xbf16, #tpu.memory_space<vmem>>, %arg8: memref<16x32xbf16, #tpu.memory_space<vmem>>) attributes {dimension_semantics = [#tpu.dimension_semantics<parallel>], iteration_bounds = array<i64: 1>, scalar_prefetch = 0 : i64, scratch_operands = 0 : i64, tpu.core_type = #tpu.core_type<tc>, window_params = [{transform_indices = @transform_0, window_bounds = array<i64: 16, 32>}, {pipeline_mode = #tpu.pipeline_mode<synchronous>, transform_indices = @transform_1, window_bounds = array<i64: 1, 32>}, {pipeline_mode = #tpu.pipeline_mode<synchronous>, transform_indices = @transform_2, window_bounds = array<i64: 1, 32>}, {pipeline_mode = #tpu.pipeline_mode<synchronous>, transform_indices = @transform_3, window_bounds = array<i64: 32, 96>}, {pipeline_mode = #tpu.pipeline_mode<synchronous>, transform_indices = @transform_4, window_bounds = array<i64: 1, 96>}, {transform_indices = @transform_5, window_bounds = array<i64: 16, 32>}, {transform_indices = @transform_6, window_bounds = array<i64: 16, 32>}, {transform_indices = @transform_7, window_bounds = array<i64: 16, 32>}]} {
    %c0 = arith.constant 0 : index
    %c0_0 = arith.constant 0 : index
    %0 = vector.load %arg1[%c0, %c0_0] : memref<16x32xf32, #tpu.memory_space<vmem>>, vector<16x32xf32>
    %c0_1 = arith.constant 0 : index
    %c0_2 = arith.constant 0 : index
    %1 = vector.load %arg2[%c0_1, %c0_2] : memref<1x32xf32, #tpu.memory_space<vmem>>, vector<1x32xf32>
    %c0_3 = arith.constant 0 : index
    %c0_4 = arith.constant 0 : index
    %2 = vector.load %arg3[%c0_3, %c0_4] : memref<1x32xf32, #tpu.memory_space<vmem>>, vector<1x32xf32>
    %cst = arith.constant dense<0.000000e+00> : vector<16xf32>
    %3 = vector.multi_reduction <add>, %0, %cst [1] : vector<16x32xf32> to vector<16xf32>
    %4 = vector.shape_cast %3 : vector<16xf32> to vector<16x1xf32>
    %cst_5 = arith.constant 3.200000e+01 : f32
    %5 = vector.broadcast %cst_5 : f32 to vector<16x1xf32>
    %6 = arith.divf %4, %5 : vector<16x1xf32>
    %7 = vector.broadcast %6 : vector<16x1xf32> to vector<16x32xf32>
    %8 = arith.subf %0, %7 : vector<16x32xf32>
    %9 = arith.mulf %8, %8 : vector<16x32xf32>
    %cst_6 = arith.constant dense<0.000000e+00> : vector<16xf32>
    %10 = vector.multi_reduction <add>, %9, %cst_6 [1] : vector<16x32xf32> to vector<16xf32>
    %11 = vector.shape_cast %10 : vector<16xf32> to vector<16x1xf32>
    %cst_7 = arith.constant 3.200000e+01 : f32
    %12 = vector.broadcast %cst_7 : f32 to vector<16x1xf32>
    %13 = arith.divf %11, %12 : vector<16x1xf32>
    %14 = vector.broadcast %6 : vector<16x1xf32> to vector<16x32xf32>
    %15 = arith.subf %0, %14 : vector<16x32xf32>
    %cst_8 = arith.constant 9.99999974E-6 : f32
    %16 = vector.broadcast %cst_8 : f32 to vector<16x1xf32>
    %17 = arith.addf %13, %16 : vector<16x1xf32>
    %18 = math.rsqrt %17 : vector<16x1xf32>
    %19 = vector.broadcast %18 : vector<16x1xf32> to vector<16x32xf32>
    %20 = arith.mulf %15, %19 : vector<16x32xf32>
    %21 = vector.broadcast %1 : vector<1x32xf32> to vector<16x32xf32>
    %22 = arith.mulf %20, %21 : vector<16x32xf32>
    %23 = vector.broadcast %2 : vector<1x32xf32> to vector<16x32xf32>
    %24 = arith.addf %22, %23 : vector<16x32xf32>
    %25 = arith.truncf %24 : vector<16x32xf32> to vector<16x32xbf16>
    %c0_9 = arith.constant 0 : index
    %c0_10 = arith.constant 0 : index
    %26 = vector.load %arg4[%c0_9, %c0_10] : memref<32x96xbf16, #tpu.memory_space<vmem>>, vector<32x96xbf16>
    %cst_11 = arith.constant dense<0.000000e+00> : vector<16x96xf32>
    %27 = tpu.matmul %25, %26, %cst_11 {dimension_numbers = #tpu.dot_dimension_numbers<[1], [0], [0], [1], [0, 0, 1, 1], [], []>} : vector<16x32xbf16>, vector<32x96xbf16>, vector<16x96xf32> -> vector<16x96xf32>
    %c0_12 = arith.constant 0 : index
    %c0_13 = arith.constant 0 : index
    %28 = vector.load %arg5[%c0_12, %c0_13] : memref<1x96xf32, #tpu.memory_space<vmem>>, vector<1x96xf32>
    %29 = vector.broadcast %28 : vector<1x96xf32> to vector<16x96xf32>
    %30 = arith.addf %27, %29 : vector<16x96xf32>
    %31 = vector.extract_strided_slice %30 {offsets = [0, 0], sizes = [16, 32], strides = [1, 1]} : vector<16x96xf32> to vector<16x32xf32>
    %cst_14 = arith.constant 0.353553385 : f32
    %32 = vector.broadcast %cst_14 : f32 to vector<16x32xf32>
    %33 = arith.mulf %31, %32 : vector<16x32xf32>
    %34 = arith.truncf %33 : vector<16x32xf32> to vector<16x32xbf16>
    %c0_15 = arith.constant 0 : index
    %c0_16 = arith.constant 0 : index
    %35 = vector.load %arg6[%c0_15, %c0_16] : memref<16x32xbf16, #tpu.memory_space<vmem>>, vector<16x32xbf16>
    tpu.vector_store %arg6[%c0_15, %c0_16], %34 {strides = array<i32>} : memref<16x32xbf16, #tpu.memory_space<vmem>>, vector<16x32xbf16>,
    %36 = vector.extract_strided_slice %30 {offsets = [0, 32], sizes = [16, 32], strides = [1, 1]} : vector<16x96xf32> to vector<16x32xf32>
    %37 = arith.truncf %36 : vector<16x32xf32> to vector<16x32xbf16>
    %c0_17 = arith.constant 0 : index
    %c0_18 = arith.constant 0 : index
    %38 = vector.load %arg7[%c0_17, %c0_18] : memref<16x32xbf16, #tpu.memory_space<vmem>>, vector<16x32xbf16>
    tpu.vector_store %arg7[%c0_17, %c0_18], %37 {strides = array<i32>} : memref<16x32xbf16, #tpu.memory_space<vmem>>, vector<16x32xbf16>,
    %39 = vector.extract_strided_slice %30 {offsets = [0, 64], sizes = [16, 32], strides = [1, 1]} : vector<16x96xf32> to vector<16x32xf32>
    %40 = arith.truncf %39 : vector<16x32xf32> to vector<16x32xbf16>
    %c0_19 = arith.constant 0 : index
    %c0_20 = arith.constant 0 : index
    %41 = vector.load %arg8[%c0_19, %c0_20] : memref<16x32xbf16, #tpu.memory_space<vmem>>, vector<16x32xbf16>
    tpu.vector_store %arg8[%c0_19, %c0_20], %40 {strides = array<i32>} : memref<16x32xbf16, #tpu.memory_space<vmem>>, vector<16x32xbf16>,
    return
  }
  func.func @transform_0(%arg0: i32) -> (i32, i32) {
    %c0_i32 = arith.constant 0 : i32
    %c0_i32_0 = arith.constant 0 : i32
    return %arg0, %c0_i32 : i32, i32
  }
  func.func @transform_1(%arg0: i32) -> (i32, i32) {
    %c0_i32 = arith.constant 0 : i32
    %c0_i32_0 = arith.constant 0 : i32
    %c0_i32_1 = arith.constant 0 : i32
    return %c0_i32, %c0_i32_0 : i32, i32
  }
  func.func @transform_2(%arg0: i32) -> (i32, i32) {
    %c0_i32 = arith.constant 0 : i32
    %c0_i32_0 = arith.constant 0 : i32
    %c0_i32_1 = arith.constant 0 : i32
    return %c0_i32, %c0_i32_0 : i32, i32
  }
  func.func @transform_3(%arg0: i32) -> (i32, i32) {
    %c0_i32 = arith.constant 0 : i32
    %c0_i32_0 = arith.constant 0 : i32
    %c0_i32_1 = arith.constant 0 : i32
    return %c0_i32, %c0_i32_0 : i32, i32
  }
  func.func @transform_4(%arg0: i32) -> (i32, i32) {
    %c0_i32 = arith.constant 0 : i32
    %c0_i32_0 = arith.constant 0 : i32
    %c0_i32_1 = arith.constant 0 : i32
    return %c0_i32, %c0_i32_0 : i32, i32
  }
  func.func @transform_5(%arg0: i32) -> (i32, i32) {
    %c0_i32 = arith.constant 0 : i32
    %c0_i32_0 = arith.constant 0 : i32
    return %arg0, %c0_i32 : i32, i32
  }
  func.func @transform_6(%arg0: i32) -> (i32, i32) {
    %c0_i32 = arith.constant 0 : i32
    %c0_i32_0 = arith.constant 0 : i32
    return %arg0, %c0_i32 : i32, i32
  }
  func.func @transform_7(%arg0: i32) -> (i32, i32) {
    %c0_i32 = arith.constant 0 : i32
    %c0_i32_0 = arith.constant 0 : i32
    return %arg0, %c0_i32 : i32, i32
  }
}

module attributes {stable_mosaic.version = 11 : i64} {
  func.func @attn_core_kernel(%arg0: i32, %arg1: i32, %arg2: memref<1x8x32xf32, #tpu.memory_space<vmem>>, %arg3: memref<1x8x32xbf16, #tpu.memory_space<vmem>>, %arg4: memref<1x8x32xbf16, #tpu.memory_space<vmem>>, %arg5: memref<1x8x32xbf16, #tpu.memory_space<vmem>>, %arg6: memref<32x32xbf16, #tpu.memory_space<vmem>>, %arg7: memref<1x32xf32, #tpu.memory_space<vmem>>, %arg8: memref<1x8x32xf32, #tpu.memory_space<vmem>>) attributes {dimension_semantics = [#tpu.dimension_semantics<parallel>, #tpu.dimension_semantics<parallel>], iteration_bounds = array<i64: 2, 1>, scalar_prefetch = 0 : i64, scratch_operands = 0 : i64, tpu.core_type = #tpu.core_type<tc>, window_params = [{transform_indices = @transform_0, window_bounds = array<i64: 1, 8, 32>}, {transform_indices = @transform_1, window_bounds = array<i64: 1, 8, 32>}, {transform_indices = @transform_2, window_bounds = array<i64: 1, 8, 32>}, {transform_indices = @transform_3, window_bounds = array<i64: 1, 8, 32>}, {pipeline_mode = #tpu.pipeline_mode<synchronous>, transform_indices = @transform_4, window_bounds = array<i64: 32, 32>}, {pipeline_mode = #tpu.pipeline_mode<synchronous>, transform_indices = @transform_5, window_bounds = array<i64: 1, 32>}, {transform_indices = @transform_6, window_bounds = array<i64: 1, 8, 32>}]} {
    %c0 = arith.constant 0 : index
    %c0_0 = arith.constant 0 : index
    %c0_1 = arith.constant 0 : index
    %0 = vector.load %arg2[%c0, %c0_0, %c0_1] : memref<1x8x32xf32, #tpu.memory_space<vmem>>, vector<1x8x32xf32>
    %1 = vector.shape_cast %0 : vector<1x8x32xf32> to vector<8x32xf32>
    %c0_2 = arith.constant 0 : index
    %c0_3 = arith.constant 0 : index
    %c0_4 = arith.constant 0 : index
    %2 = vector.load %arg3[%c0_2, %c0_3, %c0_4] : memref<1x8x32xbf16, #tpu.memory_space<vmem>>, vector<1x8x32xbf16>
    %3 = vector.shape_cast %2 : vector<1x8x32xbf16> to vector<8x32xbf16>
    %4 = vector.shape_cast %3 : vector<8x32xbf16> to vector<8x4x8xbf16>
    %5 = tpu.transpose %4, [1, 0, 2] : vector<8x4x8xbf16> -> vector<4x8x8xbf16>
    %c0_5 = arith.constant 0 : index
    %c0_6 = arith.constant 0 : index
    %c0_7 = arith.constant 0 : index
    %6 = vector.load %arg4[%c0_5, %c0_6, %c0_7] : memref<1x8x32xbf16, #tpu.memory_space<vmem>>, vector<1x8x32xbf16>
    %7 = vector.shape_cast %6 : vector<1x8x32xbf16> to vector<8x32xbf16>
    %8 = vector.shape_cast %7 : vector<8x32xbf16> to vector<8x4x8xbf16>
    %9 = tpu.transpose %8, [1, 0, 2] : vector<8x4x8xbf16> -> vector<4x8x8xbf16>
    %c0_8 = arith.constant 0 : index
    %c0_9 = arith.constant 0 : index
    %c0_10 = arith.constant 0 : index
    %10 = vector.load %arg5[%c0_8, %c0_9, %c0_10] : memref<1x8x32xbf16, #tpu.memory_space<vmem>>, vector<1x8x32xbf16>
    %11 = vector.shape_cast %10 : vector<1x8x32xbf16> to vector<8x32xbf16>
    %12 = vector.shape_cast %11 : vector<8x32xbf16> to vector<8x4x8xbf16>
    %13 = tpu.transpose %12, [1, 0, 2] : vector<8x4x8xbf16> -> vector<4x8x8xbf16>
    "tpu.trace_start"() <{level = 10 : i32, message = "hqd,hkd->hqk"}> : () -> ()
    %cst = arith.constant dense<0.000000e+00> : vector<4x8x8xf32>
    %14 = tpu.matmul %5, %9, %cst {dimension_numbers = #tpu.dot_dimension_numbers<[2], [2], [1], [1], [0, 0, 0, 1, 1, 1], [0], [0]>} : vector<4x8x8xbf16>, vector<4x8x8xbf16>, vector<4x8x8xf32> -> vector<4x8x8xf32>
    "tpu.trace_stop"() : () -> ()
    %cst_11 = arith.constant dense<0xFF800000> : vector<4x8xf32>
    %15 = vector.multi_reduction <maximumf>, %14, %cst_11 [2] : vector<4x8x8xf32> to vector<4x8xf32>
    %16 = vector.shape_cast %15 : vector<4x8xf32> to vector<4x8x1xf32>
    %17 = vector.broadcast %16 : vector<4x8x1xf32> to vector<4x8x8xf32>
    %18 = arith.subf %14, %17 : vector<4x8x8xf32>
    %19 = math.exp %18 : vector<4x8x8xf32>
    %cst_12 = arith.constant dense<0.000000e+00> : vector<4x8xf32>
    %20 = vector.multi_reduction <add>, %19, %cst_12 [2] : vector<4x8x8xf32> to vector<4x8xf32>
    %21 = vector.shape_cast %20 : vector<4x8xf32> to vector<4x8x1xf32>
    %22 = tpu.reciprocal %21 {approx = true} : vector<4x8x1xf32> -> vector<4x8x1xf32>
    %23 = vector.broadcast %22 : vector<4x8x1xf32> to vector<4x8x8xf32>
    %24 = arith.mulf %19, %23 : vector<4x8x8xf32>
    %25 = arith.truncf %24 : vector<4x8x8xf32> to vector<4x8x8xbf16>
    "tpu.trace_start"() <{level = 10 : i32, message = "hqk,hkd->hqd"}> : () -> ()
    %cst_13 = arith.constant dense<0.000000e+00> : vector<4x8x8xf32>
    %26 = tpu.matmul %25, %13, %cst_13 {dimension_numbers = #tpu.dot_dimension_numbers<[2], [1], [1], [2], [0, 0, 0, 1, 1, 2], [0], [0]>} : vector<4x8x8xbf16>, vector<4x8x8xbf16>, vector<4x8x8xf32> -> vector<4x8x8xf32>
    "tpu.trace_stop"() : () -> ()
    %27 = tpu.transpose %26, [1, 0, 2] : vector<4x8x8xf32> -> vector<8x4x8xf32>
    %28 = vector.shape_cast %27 : vector<8x4x8xf32> to vector<8x32xf32>
    %29 = arith.truncf %28 : vector<8x32xf32> to vector<8x32xbf16>
    %c0_14 = arith.constant 0 : index
    %c0_15 = arith.constant 0 : index
    %30 = vector.load %arg6[%c0_14, %c0_15] : memref<32x32xbf16, #tpu.memory_space<vmem>>, vector<32x32xbf16>
    %cst_16 = arith.constant dense<0.000000e+00> : vector<8x32xf32>
    %31 = tpu.matmul %29, %30, %cst_16 {dimension_numbers = #tpu.dot_dimension_numbers<[1], [0], [0], [1], [0, 0, 1, 1], [], []>} : vector<8x32xbf16>, vector<32x32xbf16>, vector<8x32xf32> -> vector<8x32xf32>
    %c0_17 = arith.constant 0 : index
    %c0_18 = arith.constant 0 : index
    %32 = vector.load %arg7[%c0_17, %c0_18] : memref<1x32xf32, #tpu.memory_space<vmem>>, vector<1x32xf32>
    %33 = vector.broadcast %32 : vector<1x32xf32> to vector<8x32xf32>
    %34 = arith.addf %31, %33 : vector<8x32xf32>
    %35 = arith.addf %1, %34 : vector<8x32xf32>
    %c0_19 = arith.constant 0 : index
    %c0_20 = arith.constant 0 : index
    %c0_21 = arith.constant 0 : index
    %36 = vector.load %arg8[%c0_19, %c0_20, %c0_21] : memref<1x8x32xf32, #tpu.memory_space<vmem>>, vector<1x8x32xf32>
    %37 = vector.shape_cast %36 : vector<1x8x32xf32> to vector<8x32xf32>
    %38 = vector.shape_cast %35 : vector<8x32xf32> to vector<1x8x32xf32>
    tpu.vector_store %arg8[%c0_19, %c0_20, %c0_21], %38 {strides = array<i32>} : memref<1x8x32xf32, #tpu.memory_space<vmem>>, vector<1x8x32xf32>,
    return
  }
  func.func @transform_0(%arg0: i32, %arg1: i32) -> (i32, i32, i32) {
    %c0_i32 = arith.constant 0 : i32
    %c0_i32_0 = arith.constant 0 : i32
    return %arg0, %arg1, %c0_i32 : i32, i32, i32
  }
  func.func @transform_1(%arg0: i32, %arg1: i32) -> (i32, i32, i32) {
    %c0_i32 = arith.constant 0 : i32
    %c0_i32_0 = arith.constant 0 : i32
    return %arg0, %arg1, %c0_i32 : i32, i32, i32
  }
  func.func @transform_2(%arg0: i32, %arg1: i32) -> (i32, i32, i32) {
    %c0_i32 = arith.constant 0 : i32
    %c0_i32_0 = arith.constant 0 : i32
    %c0_i32_1 = arith.constant 0 : i32
    return %arg0, %c0_i32, %c0_i32_0 : i32, i32, i32
  }
  func.func @transform_3(%arg0: i32, %arg1: i32) -> (i32, i32, i32) {
    %c0_i32 = arith.constant 0 : i32
    %c0_i32_0 = arith.constant 0 : i32
    %c0_i32_1 = arith.constant 0 : i32
    return %arg0, %c0_i32, %c0_i32_0 : i32, i32, i32
  }
  func.func @transform_4(%arg0: i32, %arg1: i32) -> (i32, i32) {
    %c0_i32 = arith.constant 0 : i32
    %c0_i32_0 = arith.constant 0 : i32
    %c0_i32_1 = arith.constant 0 : i32
    return %c0_i32, %c0_i32_0 : i32, i32
  }
  func.func @transform_5(%arg0: i32, %arg1: i32) -> (i32, i32) {
    %c0_i32 = arith.constant 0 : i32
    %c0_i32_0 = arith.constant 0 : i32
    %c0_i32_1 = arith.constant 0 : i32
    return %c0_i32, %c0_i32_0 : i32, i32
  }
  func.func @transform_6(%arg0: i32, %arg1: i32) -> (i32, i32, i32) {
    %c0_i32 = arith.constant 0 : i32
    %c0_i32_0 = arith.constant 0 : i32
    return %arg0, %arg1, %c0_i32 : i32, i32, i32
  }
}

module attributes {stable_mosaic.version = 11 : i64} {
  func.func @mlp_block_kernel(%arg0: i32, %arg1: memref<16x32xf32, #tpu.memory_space<vmem>>, %arg2: memref<1x32xf32, #tpu.memory_space<vmem>>, %arg3: memref<1x32xf32, #tpu.memory_space<vmem>>, %arg4: memref<32x128xbf16, #tpu.memory_space<vmem>>, %arg5: memref<1x128xf32, #tpu.memory_space<vmem>>, %arg6: memref<128x32xbf16, #tpu.memory_space<vmem>>, %arg7: memref<1x32xf32, #tpu.memory_space<vmem>>, %arg8: memref<16x32xf32, #tpu.memory_space<vmem>>) attributes {dimension_semantics = [#tpu.dimension_semantics<parallel>], iteration_bounds = array<i64: 1>, scalar_prefetch = 0 : i64, scratch_operands = 0 : i64, tpu.core_type = #tpu.core_type<tc>, window_params = [{transform_indices = @transform_0, window_bounds = array<i64: 16, 32>}, {pipeline_mode = #tpu.pipeline_mode<synchronous>, transform_indices = @transform_1, window_bounds = array<i64: 1, 32>}, {pipeline_mode = #tpu.pipeline_mode<synchronous>, transform_indices = @transform_2, window_bounds = array<i64: 1, 32>}, {pipeline_mode = #tpu.pipeline_mode<synchronous>, transform_indices = @transform_3, window_bounds = array<i64: 32, 128>}, {pipeline_mode = #tpu.pipeline_mode<synchronous>, transform_indices = @transform_4, window_bounds = array<i64: 1, 128>}, {pipeline_mode = #tpu.pipeline_mode<synchronous>, transform_indices = @transform_5, window_bounds = array<i64: 128, 32>}, {pipeline_mode = #tpu.pipeline_mode<synchronous>, transform_indices = @transform_6, window_bounds = array<i64: 1, 32>}, {transform_indices = @transform_7, window_bounds = array<i64: 16, 32>}]} {
    %c0 = arith.constant 0 : index
    %c0_0 = arith.constant 0 : index
    %0 = vector.load %arg1[%c0, %c0_0] : memref<16x32xf32, #tpu.memory_space<vmem>>, vector<16x32xf32>
    %c0_1 = arith.constant 0 : index
    %c0_2 = arith.constant 0 : index
    %1 = vector.load %arg2[%c0_1, %c0_2] : memref<1x32xf32, #tpu.memory_space<vmem>>, vector<1x32xf32>
    %c0_3 = arith.constant 0 : index
    %c0_4 = arith.constant 0 : index
    %2 = vector.load %arg3[%c0_3, %c0_4] : memref<1x32xf32, #tpu.memory_space<vmem>>, vector<1x32xf32>
    %cst = arith.constant dense<0.000000e+00> : vector<16xf32>
    %3 = vector.multi_reduction <add>, %0, %cst [1] : vector<16x32xf32> to vector<16xf32>
    %4 = vector.shape_cast %3 : vector<16xf32> to vector<16x1xf32>
    %cst_5 = arith.constant 3.200000e+01 : f32
    %5 = vector.broadcast %cst_5 : f32 to vector<16x1xf32>
    %6 = arith.divf %4, %5 : vector<16x1xf32>
    %7 = vector.broadcast %6 : vector<16x1xf32> to vector<16x32xf32>
    %8 = arith.subf %0, %7 : vector<16x32xf32>
    %9 = arith.mulf %8, %8 : vector<16x32xf32>
    %cst_6 = arith.constant dense<0.000000e+00> : vector<16xf32>
    %10 = vector.multi_reduction <add>, %9, %cst_6 [1] : vector<16x32xf32> to vector<16xf32>
    %11 = vector.shape_cast %10 : vector<16xf32> to vector<16x1xf32>
    %cst_7 = arith.constant 3.200000e+01 : f32
    %12 = vector.broadcast %cst_7 : f32 to vector<16x1xf32>
    %13 = arith.divf %11, %12 : vector<16x1xf32>
    %14 = vector.broadcast %6 : vector<16x1xf32> to vector<16x32xf32>
    %15 = arith.subf %0, %14 : vector<16x32xf32>
    %cst_8 = arith.constant 9.99999974E-6 : f32
    %16 = vector.broadcast %cst_8 : f32 to vector<16x1xf32>
    %17 = arith.addf %13, %16 : vector<16x1xf32>
    %18 = math.rsqrt %17 : vector<16x1xf32>
    %19 = vector.broadcast %18 : vector<16x1xf32> to vector<16x32xf32>
    %20 = arith.mulf %15, %19 : vector<16x32xf32>
    %21 = vector.broadcast %1 : vector<1x32xf32> to vector<16x32xf32>
    %22 = arith.mulf %20, %21 : vector<16x32xf32>
    %23 = vector.broadcast %2 : vector<1x32xf32> to vector<16x32xf32>
    %24 = arith.addf %22, %23 : vector<16x32xf32>
    %25 = arith.truncf %24 : vector<16x32xf32> to vector<16x32xbf16>
    %c0_9 = arith.constant 0 : index
    %c0_10 = arith.constant 0 : index
    %26 = vector.load %arg4[%c0_9, %c0_10] : memref<32x128xbf16, #tpu.memory_space<vmem>>, vector<32x128xbf16>
    %cst_11 = arith.constant dense<0.000000e+00> : vector<16x128xf32>
    %27 = tpu.matmul %25, %26, %cst_11 {dimension_numbers = #tpu.dot_dimension_numbers<[1], [0], [0], [1], [0, 0, 1, 1], [], []>} : vector<16x32xbf16>, vector<32x128xbf16>, vector<16x128xf32> -> vector<16x128xf32>
    %c0_12 = arith.constant 0 : index
    %c0_13 = arith.constant 0 : index
    %28 = vector.load %arg5[%c0_12, %c0_13] : memref<1x128xf32, #tpu.memory_space<vmem>>, vector<1x128xf32>
    %29 = vector.broadcast %28 : vector<1x128xf32> to vector<16x128xf32>
    %30 = arith.addf %27, %29 : vector<16x128xf32>
    %cst_14 = arith.constant 1.702000e+00 : f32
    %31 = vector.broadcast %cst_14 : f32 to vector<16x128xf32>
    %32 = arith.mulf %31, %30 : vector<16x128xf32>
    %33 = arith.negf %32 : vector<16x128xf32>
    %34 = math.exp %33 : vector<16x128xf32>
    %cst_15 = arith.constant 1.000000e+00 : f32
    %35 = vector.broadcast %cst_15 : f32 to vector<16x128xf32>
    %36 = arith.addf %35, %34 : vector<16x128xf32>
    %37 = arith.divf %35, %36 : vector<16x128xf32>
    %38 = arith.mulf %30, %37 : vector<16x128xf32>
    %39 = arith.truncf %38 : vector<16x128xf32> to vector<16x128xbf16>
    %c0_16 = arith.constant 0 : index
    %c0_17 = arith.constant 0 : index
    %40 = vector.load %arg6[%c0_16, %c0_17] : memref<128x32xbf16, #tpu.memory_space<vmem>>, vector<128x32xbf16>
    %cst_18 = arith.constant dense<0.000000e+00> : vector<16x32xf32>
    %41 = tpu.matmul %39, %40, %cst_18 {dimension_numbers = #tpu.dot_dimension_numbers<[1], [0], [0], [1], [0, 0, 1, 1], [], []>} : vector<16x128xbf16>, vector<128x32xbf16>, vector<16x32xf32> -> vector<16x32xf32>
    %c0_19 = arith.constant 0 : index
    %c0_20 = arith.constant 0 : index
    %42 = vector.load %arg7[%c0_19, %c0_20] : memref<1x32xf32, #tpu.memory_space<vmem>>, vector<1x32xf32>
    %43 = vector.broadcast %42 : vector<1x32xf32> to vector<16x32xf32>
    %44 = arith.addf %41, %43 : vector<16x32xf32>
    %45 = arith.addf %0, %44 : vector<16x32xf32>
    %c0_21 = arith.constant 0 : index
    %c0_22 = arith.constant 0 : index
    %46 = vector.load %arg8[%c0_21, %c0_22] : memref<16x32xf32, #tpu.memory_space<vmem>>, vector<16x32xf32>
    tpu.vector_store %arg8[%c0_21, %c0_22], %45 {strides = array<i32>} : memref<16x32xf32, #tpu.memory_space<vmem>>, vector<16x32xf32>,
    return
  }
  func.func @transform_0(%arg0: i32) -> (i32, i32) {
    %c0_i32 = arith.constant 0 : i32
    %c0_i32_0 = arith.constant 0 : i32
    return %arg0, %c0_i32 : i32, i32
  }
  func.func @transform_1(%arg0: i32) -> (i32, i32) {
    %c0_i32 = arith.constant 0 : i32
    %c0_i32_0 = arith.constant 0 : i32
    %c0_i32_1 = arith.constant 0 : i32
    return %c0_i32, %c0_i32_0 : i32, i32
  }
  func.func @transform_2(%arg0: i32) -> (i32, i32) {
    %c0_i32 = arith.constant 0 : i32
    %c0_i32_0 = arith.constant 0 : i32
    %c0_i32_1 = arith.constant 0 : i32
    return %c0_i32, %c0_i32_0 : i32, i32
  }
  func.func @transform_3(%arg0: i32) -> (i32, i32) {
    %c0_i32 = arith.constant 0 : i32
    %c0_i32_0 = arith.constant 0 : i32
    %c0_i32_1 = arith.constant 0 : i32
    return %c0_i32, %c0_i32_0 : i32, i32
  }
  func.func @transform_4(%arg0: i32) -> (i32, i32) {
    %c0_i32 = arith.constant 0 : i32
    %c0_i32_0 = arith.constant 0 : i32
    %c0_i32_1 = arith.constant 0 : i32
    return %c0_i32, %c0_i32_0 : i32, i32
  }
  func.func @transform_5(%arg0: i32) -> (i32, i32) {
    %c0_i32 = arith.constant 0 : i32
    %c0_i32_0 = arith.constant 0 : i32
    %c0_i32_1 = arith.constant 0 : i32
    return %c0_i32, %c0_i32_0 : i32, i32
  }
  func.func @transform_6(%arg0: i32) -> (i32, i32) {
    %c0_i32 = arith.constant 0 : i32
    %c0_i32_0 = arith.constant 0 : i32
    %c0_i32_1 = arith.constant 0 : i32
    return %c0_i32, %c0_i32_0 : i32, i32
  }
  func.func @transform_7(%arg0: i32) -> (i32, i32) {
    %c0_i32 = arith.constant 0 : i32
    %c0_i32_0 = arith.constant 0 : i32
    return %arg0, %c0_i32 : i32, i32
  }
}

</mosaic_0001>

<llo_original>
// kernel: transformer_forward.6
$region0: #{transformer_forward.6}
  #allocation0 [shape = 'u32[]', space=smem, size = 0x4, offset = 0x4, fixed_abs, tag = 'smem constant byte address 0x4 - core index']
  #allocation1 [shape = 'u32[72,128]{1,0:T(1,128)}', space=vmem, size = 0x9000, scoped, tag = 'internal scratch']
  %s0 = inlined_call_operand.vmem [shape: f32[16,32], index: 0, kind: input, shape index: {}]
  %s1 = inlined_call_operand.vmem [shape: f32[1,32], index: 1, kind: input, shape index: {}]
  %s2 = inlined_call_operand.vmem [shape: f32[1,32], index: 2, kind: input, shape index: {}]
  %s3 = inlined_call_operand.vmem [shape: bf16[32,96], index: 3, kind: input, shape index: {}]
  %s4 = inlined_call_operand.vmem [shape: f32[1,96], index: 4, kind: input, shape index: {}]
  %s5 = inlined_call_operand.vmem [shape: bf16[16,32], index: 5, kind: output, shape index: {0}]
  %s6 = inlined_call_operand.vmem [shape: bf16[16,32], index: 6, kind: output, shape index: {1}]
  %s7 = inlined_call_operand.vmem [shape: bf16[16,32], index: 7, kind: output, shape index: {2}]
  %8 = xla_tuple %s5, %s6, %s7
  %s9 = sld [smem:[#allocation0]]
  $region46: #{transformer_forward.6} parent=0
    _
  %s11 = ssub.s32 1, %s9
  %s12 = scalar_select 0, %s11, %s9
  // Predicated region
  $region2: #{transformer_forward.6} parent=0 // pred_check
    _
  $region3: #{transformer_forward.6} parent=0 // pred_check_branch
    %14 = sbr.rel (0) target = $region5
  $region4: #{transformer_forward.6} parent=0 // pred_region
    _
  $region5: #{transformer_forward.6} parent=0 // pred_fallthru
    _
  // Predicated region
  $region6: #{transformer_forward.6} parent=0 // pred_check
    _
  $region7: #{transformer_forward.6} parent=0 // pred_check_branch
    %16 = sbr.rel (0) target = $region9
  $region8: #{transformer_forward.6} parent=0 // pred_region
    _
  $region9: #{transformer_forward.6} parent=0 // pred_fallthru
    _
  // Predicated region
  $region10: #{transformer_forward.6} parent=0 // pred_check
    _
  $region11: #{transformer_forward.6} parent=0 // pred_check_branch
    %18 = sbr.rel (0) target = $region13
  $region12: #{transformer_forward.6} parent=0 // pred_region
    _
  $region13: #{transformer_forward.6} parent=0 // pred_fallthru
    _
  // Predicated region
  $region14: #{transformer_forward.6} parent=0 // pred_check
    _
  $region15: #{transformer_forward.6} parent=0 // pred_check_branch
    %20 = sbr.rel (0) target = $region17
  $region16: #{transformer_forward.6} parent=0 // pred_region
    _
  $region17: #{transformer_forward.6} parent=0 // pred_fallthru
    _
  // Predicated region
  $region18: #{transformer_forward.6} parent=0 // pred_check
    _
  $region19: #{transformer_forward.6} parent=0 // pred_check_branch
    %22 = sbr.rel (0) target = $region21
  $region20: #{transformer_forward.6} parent=0 // pred_region
    _
  $region21: #{transformer_forward.6} parent=0 // pred_fallthru
    _
  %v24 = vld [vmem:[%s0] sm:$0xff]
  %v25 = vld [vmem:[%s0 + $0x8] sm:$0xff]
  %v26 = vld [vmem:[%s1] sm:$0x1]
  %v27 = vld [vmem:[%s2] sm:$0x1]
  %vm28 = vcmask 261120
  %v29 = vsel %vm28, %v24, 0.0
  %30 = vadd.xlane.f32.xlu0 %v29
  %v31 = vpop.xlane.xlu0 %30
  %v32 = vsel %vm28, %v25, 0.0
  %33 = vadd.xlane.f32.xlu0 %v32
  %v34 = vpop.xlane.xlu0 %33
  %v35 = vrcp.pop 32.0
  %v36 = vmul.f32 32.0, %v35
  %v37 = vsub.f32 1.0, %v36
  %v38 = vmul.f32 %v35, %v37
  %v39 = vadd.f32 %v35, %v38
  %vm40 = vweird.f32 %v35
  %v41 = vsel %vm40, %v35, %v39
  %v42 = vmul.f32 %v31, %v41
  %v43 = vmul.f32 %v34, %v41
  %v44 = vsub.f32 %v24, %v42
  %v45 = vsub.f32 %v25, %v43
  %v46 = vmul.f32 %v44, %v44
  %v47 = vmul.f32 %v45, %v45
  %v48 = vsel %vm28, %v46, 0.0
  %49 = vadd.xlane.f32.xlu0 %v48
  %v50 = vpop.xlane.xlu0 %49
  %v51 = vsel %vm28, %v47, 0.0
  %52 = vadd.xlane.f32.xlu0 %v51
  %v53 = vpop.xlane.xlu0 %52
  %v54 = vmul.f32 %v50, %v41
  %v55 = vmul.f32 %v53, %v41
  %v56 = vadd.f32 %v54, 1e-05
  %v57 = vadd.f32 %v55, 1e-05
  %v58 = vrsqrt.pop %v56
  %v59 = vmul.f32 %v58, %v56
  %v60 = vmul.f32 %v59, %v58
  %v61 = vmul.f32 0.5, %v60
  %v62 = vsub.f32 1.5, %v61
  %v63 = vmul.f32 %v58, %v62
  %vm64 = vweird.f32 %v56
  %vm65 = vweird.f32 %v58
  %vm66 = vmor %vm64, %vm65
  %v67 = vsel %vm66, %v58, %v63
  %v68 = vrsqrt.pop %v57
  %v69 = vmul.f32 %v68, %v57
  %v70 = vmul.f32 %v69, %v68
  %v71 = vmul.f32 0.5, %v70
  %v72 = vsub.f32 1.5, %v71
  %v73 = vmul.f32 %v68, %v72
  %vm74 = vweird.f32 %v57
  %vm75 = vweird.f32 %v68
  %vm76 = vmor %vm74, %vm75
  %v77 = vsel %vm76, %v68, %v73
  %v78 = vmul.f32 %v44, %v67
  %v79 = vmul.f32 %v45, %v77
  %v81 = vperm.slane %v26, 0
  %v83 = vmul.f32 %v78, %v81
  %v84 = vmul.f32 %v79, %v81
  %v86 = vperm.slane %v27, 0
  %v88 = vadd.f32 %v83, %v86
  %v89 = vadd.f32 %v84, %v86
  %v90 = vpack.c.bf16 %v89, %v88
  %v91 = vld [vmem:[%s3] sm:$0xf]
  %v92 = vld [vmem:[%s3 + $0x4] sm:$0xf]
  %v93 = vld [vmem:[%s3 + $0x8] sm:$0xf]
  %v94 = vld [vmem:[%s3 + $0xc] sm:$0xf]
  %v95 = vld [vmem:[%s4] sm:$0x1]
  %v97 = vperm.slane %v95, 0
  %v103 = vunpack.c.l.b16 %v91
  %v104 = vunpack.c.l.b16 %v92
  %v105 = vunpack.c.l.b16 %v93
  %v106 = vunpack.c.l.b16 %v94
  %v107 = vpack.c.b16 %v104, %v103
  %v108 = vpack.c.b16 %v106, %v105
  %v112 = vsel %vm28, %v90, 0
  %114 = vmatpush.bf16.msra.mxu0 0
  %115 = vmatpush.bf16.msra.mxu0 0
  %116 = vmatpush.bf16.msra.mxu0 0
  %117 = vmatpush.bf16.msra.mxu0 0
  %118 = vmatpush.bf16.msra.mxu0 0
  %119 = vmatpush.bf16.msra.mxu0 0
  %120 = vmatpush.bf16.msra.mxu0 %v108
  %121 = vmatpush.bf16.msra.mxu0 %v107
  %122 = vmatmul.bf16.gmra.mxu0 %v112
  %v123 = vpop.f32.mrf.mxu0
  %v124 = vadd.f32 %v97, %v123
  %v125 = vpop.f32.mrf.mxu0
  %v126 = vadd.f32 %v97, %v125
  %127 = vdwg.mxu0
  %v128 = vmul.f32 %v124, 0.35355338
  %v129 = vmul.f32 %v126, 0.35355338
  %v130 = vpack.c.bf16 %v128, %v128
  %v131 = vpack.c.bf16 %v129, %v129
  %vm132 = vcmask 257024
  %133 = vst.msk [vmem:[%s5] sm:$0xf] %vm132, %v130
  %134 = vst.msk [vmem:[%s5 + $0x4] sm:$0xf] %vm132, %v131
  %v135 = vpack.c.bf16 %v124, %v124
  %v136 = vpack.c.bf16 %v126, %v126
  %139 = vrot.lane.b32.xlu0 %v135, 96
  %v140 = vpop.permute.xlu0 %139
  %141 = vrot.lane.b32.xlu0 %v136, 96
  %v142 = vpop.permute.xlu0 %141
  %145 = vst.msk [vmem:[%s6] sm:$0xf] %vm132, %v140
  %146 = vst.msk [vmem:[%s6 + $0x4] sm:$0xf] %vm132, %v142
  %147 = vrot.lane.b32.xlu0 %v135, 64
  %v148 = vpop.permute.xlu0 %147
  %149 = vrot.lane.b32.xlu0 %v136, 64
  %v150 = vpop.permute.xlu0 %149
  %153 = vst.msk [vmem:[%s7] sm:$0xf] %vm132, %v148
  %154 = vst.msk [vmem:[%s7 + $0x4] sm:$0xf] %vm132, %v150
  // Predicated region
  $region22: #{transformer_forward.6} parent=0 // pred_check
    _
  $region23: #{transformer_forward.6} parent=0 // pred_check_branch
    %156 = sbr.rel (0) target = $region25
  $region24: #{transformer_forward.6} parent=0 // pred_region
    _
  $region25: #{transformer_forward.6} parent=0 // pred_fallthru
    _
  // Predicated region
  $region26: #{transformer_forward.6} parent=0 // pred_check
    _
  $region27: #{transformer_forward.6} parent=0 // pred_check_branch
    %158 = sbr.rel (0) target = $region29
  $region28: #{transformer_forward.6} parent=0 // pred_region
    _
  $region29: #{transformer_forward.6} parent=0 // pred_fallthru
    _
  // Predicated region
  $region30: #{transformer_forward.6} parent=0 // pred_check
    _
  $region31: #{transformer_forward.6} parent=0 // pred_check_branch
    %160 = sbr.rel (0) target = $region33
  $region32: #{transformer_forward.6} parent=0 // pred_region
    _
  $region33: #{transformer_forward.6} parent=0 // pred_fallthru
    _
  // Predicated region
  $region34: #{transformer_forward.6} parent=0 // pred_check
    _
  $region35: #{transformer_forward.6} parent=0 // pred_check_branch
    %162 = sbr.rel (0) target = $region37
  $region36: #{transformer_forward.6} parent=0 // pred_region
    _
  $region37: #{transformer_forward.6} parent=0 // pred_fallthru
    _
  // Predicated region
  $region38: #{transformer_forward.6} parent=0 // pred_check
    _
  $region39: #{transformer_forward.6} parent=0 // pred_check_branch
    %164 = sbr.rel (0) target = $region41
  $region40: #{transformer_forward.6} parent=0 // pred_region
    _
  $region41: #{transformer_forward.6} parent=0 // pred_fallthru
    _
  // Predicated region
  $region42: #{transformer_forward.6} parent=0 // pred_check
    _
  $region43: #{transformer_forward.6} parent=0 // pred_check_branch
    %166 = sbr.rel (0) target = $region45
  $region44: #{transformer_forward.6} parent=0 // pred_region
    _
  $region45: #{transformer_forward.6} parent=0 // pred_fallthru
    _

// kernel: transformer_forward.7
$region0: #{transformer_forward.7}
  #allocation0 [shape = 'u32[]', space=smem, size = 0x4, offset = 0x4, fixed_abs, tag = 'smem constant byte address 0x4 - core index']
  #allocation1 [shape = 'u32[72,128]{1,0:T(1,128)}', space=vmem, size = 0x9000, scoped, tag = 'internal scratch']
  %s0 = inlined_call_operand.vmem [shape: f32[2,8,32], index: 0, kind: input, shape index: {}, may-alias: {0,6}]
  %s1 = inlined_call_operand.vmem [shape: bf16[2,8,32], index: 1, kind: input, shape index: {}]
  %s2 = inlined_call_operand.vmem [shape: bf16[2,8,32], index: 2, kind: input, shape index: {}]
  %s3 = inlined_call_operand.vmem [shape: bf16[2,8,32], index: 3, kind: input, shape index: {}]
  %s4 = inlined_call_operand.vmem [shape: bf16[32,32], index: 4, kind: input, shape index: {}]
  %s5 = inlined_call_operand.vmem [shape: f32[1,32], index: 5, kind: input, shape index: {}]
  %s6 = inlined_call_operand.vmem [shape: f32[2,8,32], index: 6, kind: output, shape index: {}, may-alias: {0,6}]
  %s7 = sld [smem:[#allocation0]]
  $region57: #{transformer_forward.7} parent=0
    _
  %s9 = ssub.s32 1, %s7
  %s10 = scalar_select 0, %s9, %s7
  loop: start=0, step=1, limit=4
  $region2: #{transformer_forward.7} parent=0 // loop_pre_header
    _
  $region3: #{transformer_forward.7} parent=0 // loop_header
    %s12 = sphi 0, %s16
    %p13 = scmp.ge.s32.totalorder %s12, 4
    %s19 = sphi 0, %s31
    %s20 = sphi 0, %s27
    %s21 = sphi 0, %s19
    %s22 = sphi 0, %s20
    %s23 = sphi 0, %s21
    %s24 = sphi 0, %s22
    %s36 = sphi 0, %s38
    %s39 = sphi 0, %s36
    %s40 = sphi 0, %s39
    %s56 = sphi 0, %s40
    %s64 = sphi 0, %s66
    %s67 = sphi 0, %s64
    %s68 = sphi 0, %s67
    %s84 = sphi 0, %s68
    %s90 = sphi 0, %s92
    %s93 = sphi 0, %s90
    %s94 = sphi 0, %s93
    %s110 = sphi 0, %s94
    %s116 = sphi 0, %s118
    %s119 = sphi 0, %s116
    %s120 = sphi 0, %s119
    %s136 = sphi 0, %s120
    %s140 = sphi 0, %s140
    %s142 = sphi 0, %s140
    %s143 = sphi 0, %s142
    %s157 = sphi 0, %s143
    %s161 = sphi 0, %s161
    %s163 = sphi 0, %s161
    %s164 = sphi 0, %s163
    %s178 = sphi 0, %s164
    %s186 = sphi 0, %s188
    %s189 = sphi 0, %s186
    %s190 = sphi 0, %s189
    %s206 = sphi 0, %s190
  $region4: #{transformer_forward.7} parent=0 // loop_header_branch
    %15 = sbr.rel (%p13) target = $region8
  $region5: #{transformer_forward.7} parent=0 // loop_body
    %s17 = ssub.s32 %s12, 1
    %s18 = ssub.s32 %s12, 2
    %s25 = sadd.s32 1, %s20
    %p26 = scmp.ge.s32.totalorder %s25, 1
    %s27 = scalar_select %p26, 0, %s25
    %s28 = sadd.s32 1, %s19
    %s29 = scalar_select %p26, %s28, %s19
    %p30 = scmp.ge.s32.totalorder %s29, 2
    %s31 = scalar_select %p30, 0, %s29
    %s32 = ssub.s32 %s19, %s31
    %s33 = ssub.s32 %s20, %s27
    %s34 = sor.u32 %s32, %s33
    %p35 = scmp.eq.s32.totalorder %s34, 0
    %s37 = sadd.s32 %s36, 1
    %s38 = scalar_select %p35, %s36, %s37
    %p41 = pneg %p35
    %p42 = scmp.eq.s32.totalorder %s12, 1
    %p43 = por %p41, %p42
    %p44 = scmp.ne.s32.totalorder %s36, %s39
    %p45 = scmp.eq.s32.totalorder %s12, 0
    %p46 = por %p44, %p45
    %p47 = scmp.ne.s32.totalorder %s36, %s39
    %p48 = scmp.eq.s32.totalorder %s17, 1
    %p49 = por %p47, %p48
    %p50 = scmp.ne.s32.totalorder %s39, %s40
    %p51 = scmp.eq.s32.totalorder %s17, 0
    %p52 = por %p50, %p51
    %p53 = scmp.ne.s32.totalorder %s39, %s40
    %p54 = scmp.eq.s32.totalorder %s18, 1
    %p55 = por %p53, %p54
    %p57 = scmp.ne.s32.totalorder %s40, %s56
    %p58 = scmp.eq.s32.totalorder %s18, 0
    %p59 = por %p57, %p58
    %s60 = ssub.s32 %s19, %s31
    %s61 = ssub.s32 %s20, %s27
    %s62 = sor.u32 %s60, %s61
    %p63 = scmp.eq.s32.totalorder %s62, 0
    %s65 = sadd.s32 %s64, 1
    %s66 = scalar_select %p63, %s64, %s65
    %p69 = pneg %p63
    %p70 = scmp.eq.s32.totalorder %s12, 1
    %p71 = por %p69, %p70
    %p72 = scmp.ne.s32.totalorder %s64, %s67
    %p73 = scmp.eq.s32.totalorder %s12, 0
    %p74 = por %p72, %p73
    %p75 = scmp.ne.s32.totalorder %s64, %s67
    %p76 = scmp.eq.s32.totalorder %s17, 1
    %p77 = por %p75, %p76
    %p78 = scmp.ne.s32.totalorder %s67, %s68
    %p79 = scmp.eq.s32.totalorder %s17, 0
    %p80 = por %p78, %p79
    %p81 = scmp.ne.s32.totalorder %s67, %s68
    %p82 = scmp.eq.s32.totalorder %s18, 1
    %p83 = por %p81, %p82
    %p85 = scmp.ne.s32.totalorder %s68, %s84
    %p86 = scmp.eq.s32.totalorder %s18, 0
    %p87 = por %p85, %p86
    %s88 = ssub.s32 %s19, %s31
    %p89 = scmp.eq.s32.totalorder %s88, 0
    %s91 = sadd.s32 %s90, 1
    %s92 = scalar_select %p89, %s90, %s91
    %p95 = pneg %p89
    %p96 = scmp.eq.s32.totalorder %s12, 1
    %p97 = por %p95, %p96
    %p98 = scmp.ne.s32.totalorder %s90, %s93
    %p99 = scmp.eq.s32.totalorder %s12, 0
    %p100 = por %p98, %p99
    %p101 = scmp.ne.s32.totalorder %s90, %s93
    %p102 = scmp.eq.s32.totalorder %s17, 1
    %p103 = por %p101, %p102
    %p104 = scmp.ne.s32.totalorder %s93, %s94
    %p105 = scmp.eq.s32.totalorder %s17, 0
    %p106 = por %p104, %p105
    %p107 = scmp.ne.s32.totalorder %s93, %s94
    %p108 = scmp.eq.s32.totalorder %s18, 1
    %p109 = por %p107, %p108
    %p111 = scmp.ne.s32.totalorder %s94, %s110
    %p112 = scmp.eq.s32.totalorder %s18, 0
    %p113 = por %p111, %p112
    %s114 = ssub.s32 %s19, %s31
    %p115 = scmp.eq.s32.totalorder %s114, 0
    %s117 = sadd.s32 %s116, 1
    %s118 = scalar_select %p115, %s116, %s117
    %p121 = pneg %p115
    %p122 = scmp.eq.s32.totalorder %s12, 1
    %p123 = por %p121, %p122
    %p124 = scmp.ne.s32.totalorder %s116, %s119
    %p125 = scmp.eq.s32.totalorder %s12, 0
    %p126 = por %p124, %p125
    %p127 = scmp.ne.s32.totalorder %s116, %s119
    %p128 = scmp.eq.s32.totalorder %s17, 1
    %p129 = por %p127, %p128
    %p130 = scmp.ne.s32.totalorder %s119, %s120
    %p131 = scmp.eq.s32.totalorder %s17, 0
    %p132 = por %p130, %p131
    %p133 = scmp.ne.s32.totalorder %s119, %s120
    %p134 = scmp.eq.s32.totalorder %s18, 1
    %p135 = por %p133, %p134
    %p137 = scmp.ne.s32.totalorder %s120, %s136
    %p138 = scmp.eq.s32.totalorder %s18, 0
    %p139 = por %p137, %p138
    %s141 = sadd.s32 %s140, 1
    %p144 = scmp.eq.s32.totalorder %s12, 1
    %p145 = scmp.ne.s32.totalorder %s140, %s142
    %p146 = scmp.eq.s32.totalorder %s12, 0
    %p147 = por %p145, %p146
    %p148 = scmp.ne.s32.totalorder %s140, %s142
    %p149 = scmp.eq.s32.totalorder %s17, 1
    %p150 = por %p148, %p149
    %p151 = scmp.ne.s32.totalorder %s142, %s143
    %p152 = scmp.eq.s32.totalorder %s17, 0
    %p153 = por %p151, %p152
    %p154 = scmp.ne.s32.totalorder %s142, %s143
    %p155 = scmp.eq.s32.totalorder %s18, 1
    %p156 = por %p154, %p155
    %p158 = scmp.ne.s32.totalorder %s143, %s157
    %p159 = scmp.eq.s32.totalorder %s18, 0
    %p160 = por %p158, %p159
    %s162 = sadd.s32 %s161, 1
    %p165 = scmp.eq.s32.totalorder %s12, 1
    %p166 = scmp.ne.s32.totalorder %s161, %s163
    %p167 = scmp.eq.s32.totalorder %s12, 0
    %p168 = por %p166, %p167
    %p169 = scmp.ne.s32.totalorder %s161, %s163
    %p170 = scmp.eq.s32.totalorder %s17, 1
    %p171 = por %p169, %p170
    %p172 = scmp.ne.s32.totalorder %s163, %s164
    %p173 = scmp.eq.s32.totalorder %s17, 0
    %p174 = por %p172, %p173
    %p175 = scmp.ne.s32.totalorder %s163, %s164
    %p176 = scmp.eq.s32.totalorder %s18, 1
    %p177 = por %p175, %p176
    %p179 = scmp.ne.s32.totalorder %s164, %s178
    %p180 = scmp.eq.s32.totalorder %s18, 0
    %p181 = por %p179, %p180
    %s182 = ssub.s32 %s19, %s31
    %s183 = ssub.s32 %s20, %s27
    %s184 = sor.u32 %s182, %s183
    %p185 = scmp.eq.s32.totalorder %s184, 0
    %s187 = sadd.s32 %s186, 1
    %s188 = scalar_select %p185, %s186, %s187
    %p191 = pneg %p185
    %p192 = scmp.eq.s32.totalorder %s12, 1
    %p193 = por %p191, %p192
    %p194 = scmp.ne.s32.totalorder %s186, %s189
    %p195 = scmp.eq.s32.totalorder %s12, 0
    %p196 = por %p194, %p195
    %p197 = scmp.ne.s32.totalorder %s186, %s189
    %p198 = scmp.eq.s32.totalorder %s17, 1
    %p199 = por %p197, %p198
    %p200 = scmp.ne.s32.totalorder %s189, %s190
    %p201 = scmp.eq.s32.totalorder %s17, 0
    %p202 = por %p200, %p201
    %p203 = scmp.ne.s32.totalorder %s189, %s190
    %p204 = scmp.eq.s32.totalorder %s18, 1
    %p205 = por %p203, %p204
    %p207 = scmp.ne.s32.totalorder %s190, %s206
    %p208 = scmp.eq.s32.totalorder %s18, 0
    %p209 = por %p207, %p208
    %p210 = scmp.le.s32.totalorder 1, %s12
    %p211 = scmp.lt.s32.totalorder %s12, 3
    %p212 = pnand %p210, %p211
    %p213 = pneg %p212
    // Predicated region
    $region9: #{transformer_forward.7} parent=5 // pred_check
      _
    $region10: #{transformer_forward.7} parent=5 // pred_check_branch
      %215 = sbr.rel (%p212) target = $region12
    $region11: #{transformer_forward.7} parent=5 // pred_region
      %s216 = ssub.s32 %s12, 1
      // Predicated region
      $region13: #{transformer_forward.7} parent=11 // pred_check
        %p217 = pneg %p153
      $region14: #{transformer_forward.7} parent=11 // pred_check_branch
        %219 = sbr.rel (%p217) target = $region16
      $region15: #{transformer_forward.7} parent=11 // pred_region
        _
      $region16: #{transformer_forward.7} parent=11 // pred_fallthru
        _
      // Predicated region
      $region17: #{transformer_forward.7} parent=11 // pred_check
        %p220 = pneg %p174
      $region18: #{transformer_forward.7} parent=11 // pred_check_branch
        %222 = sbr.rel (%p220) target = $region20
      $region19: #{transformer_forward.7} parent=11 // pred_region
        _
      $region20: #{transformer_forward.7} parent=11 // pred_fallthru
        _
    $region12: #{transformer_forward.7} parent=5 // pred_fallthru
      _
    %p223 = scmp.lt.s32.totalorder %s12, 2
    // Predicated region
    $region21: #{transformer_forward.7} parent=5 // pred_check
      %p224 = pneg %p223
    $region22: #{transformer_forward.7} parent=5 // pred_check_branch
      %226 = sbr.rel (%p224) target = $region24
    $region23: #{transformer_forward.7} parent=5 // pred_region
      // Predicated region
      $region25: #{transformer_forward.7} parent=23 // pred_check
        %p227 = pneg %p46
      $region26: #{transformer_forward.7} parent=23 // pred_check_branch
        %229 = sbr.rel (%p227) target = $region28
      $region27: #{transformer_forward.7} parent=23 // pred_region
        %p230 = scmp.lt.s32.totalorder %s19, 1
        %s231 = scalar_select %p230, %s19, 1
        %p232 = scmp.lt.s32.totalorder %s20, 0
        %s233 = scalar_select %p232, %s20, 0
        %s234 = sadd.s32 %s233, %s231
        %s235 = smul.addr %s234, 8
        %s236 = scalar_lea.vmem %s0, %s235
      $region28: #{transformer_forward.7} parent=23 // pred_fallthru
        _
      // Predicated region
      $region29: #{transformer_forward.7} parent=23 // pred_check
        %p237 = pneg %p74
      $region30: #{transformer_forward.7} parent=23 // pred_check_branch
        %239 = sbr.rel (%p237) target = $region32
      $region31: #{transformer_forward.7} parent=23 // pred_region
        %p240 = scmp.lt.s32.totalorder %s19, 1
        %s241 = scalar_select %p240, %s19, 1
        %p242 = scmp.lt.s32.totalorder %s20, 0
        %s243 = scalar_select %p242, %s20, 0
        %s244 = sadd.s32 %s243, %s241
        %s245 = smul.addr %s244, 4
        %s246 = scalar_lea.vmem %s1, %s245
      $region32: #{transformer_forward.7} parent=23 // pred_fallthru
        _
      // Predicated region
      $region33: #{transformer_forward.7} parent=23 // pred_check
        %p247 = pneg %p100
      $region34: #{transformer_forward.7} parent=23 // pred_check_branch
        %249 = sbr.rel (%p247) target = $region36
      $region35: #{transformer_forward.7} parent=23 // pred_region
        %p250 = scmp.lt.s32.totalorder %s19, 1
        %s251 = scalar_select %p250, %s19, 1
        %s252 = smul.addr %s251, 4
        %s253 = scalar_lea.vmem %s2, %s252
      $region36: #{transformer_forward.7} parent=23 // pred_fallthru
        _
      // Predicated region
      $region37: #{transformer_forward.7} parent=23 // pred_check
        %p254 = pneg %p126
      $region38: #{transformer_forward.7} parent=23 // pred_check_branch
        %256 = sbr.rel (%p254) target = $region40
      $region39: #{transformer_forward.7} parent=23 // pred_region
        %p257 = scmp.lt.s32.totalorder %s19, 1
        %s258 = scalar_select %p257, %s19, 1
        %s259 = smul.addr %s258, 4
        %s260 = scalar_lea.vmem %s3, %s259
      $region40: #{transformer_forward.7} parent=23 // pred_fallthru
        _
    $region24: #{transformer_forward.7} parent=5 // pred_fallthru
      _
    %p261 = scmp.le.s32.totalorder 1, %s12
    %p262 = scmp.lt.s32.totalorder %s12, 3
    %p263 = pnand %p261, %p262
    %p264 = pneg %p263
    // Predicated region
    $region41: #{transformer_forward.7} parent=5 // pred_check
      _
    $region42: #{transformer_forward.7} parent=5 // pred_check_branch
      %266 = sbr.rel (%p263) target = $region44
    $region43: #{transformer_forward.7} parent=5 // pred_region
      %s267 = ssub.s32 %s12, 1
      %p268 = scmp.lt.s32.totalorder %s21, 1
      %s269 = scalar_select %p268, %s21, 1
      %p270 = scmp.lt.s32.totalorder %s22, 0
      %s271 = scalar_select %p270, %s22, 0
      %s272 = sadd.s32 %s271, %s269
      %s273 = smul.addr %s272, 8
      %s274 = scalar_lea.vmem %s0, %s273
      %p275 = pneg %p52
      %p276 = pneg %p49
      %p277 = scmp.lt.s32.totalorder %s21, 1
      %s278 = scalar_select %p277, %s21, 1
      %p279 = scmp.lt.s32.totalorder %s22, 0
      %s280 = scalar_select %p279, %s22, 0
      %s281 = sadd.s32 %s280, %s278
      %s282 = smul.addr %s281, 4
      %s283 = scalar_lea.vmem %s1, %s282
      %p284 = pneg %p80
      %p285 = pneg %p77
      %p286 = scmp.lt.s32.totalorder %s21, 1
      %s287 = scalar_select %p286, %s21, 1
      %s288 = smul.addr %s287, 4
      %s289 = scalar_lea.vmem %s2, %s288
      %p290 = pneg %p106
      %p291 = pneg %p103
      %p292 = scmp.lt.s32.totalorder %s21, 1
      %s293 = scalar_select %p292, %s21, 1
      %s294 = smul.addr %s293, 4
      %s295 = scalar_lea.vmem %s3, %s294
      %p296 = pneg %p132
      %p297 = pneg %p129
      %p298 = pneg %p153
      %p299 = pneg %p150
      %p300 = pneg %p174
      %p301 = pneg %p171
      %p302 = pneg %p202
      %p303 = pneg %p199
      %p304 = scmp.lt.s32.totalorder %s21, 1
      %s305 = scalar_select %p304, %s21, 1
      %p306 = scmp.lt.s32.totalorder %s22, 0
      %s307 = scalar_select %p306, %s22, 0
      %s308 = sadd.s32 %s307, %s305
      %s309 = smul.addr %s308, 8
      %s310 = scalar_lea.vmem %s6, %s309
      %p311 = scmp.lt.s32.totalorder %s21, 1
      %s312 = scalar_select %p311, %s21, 1
      %p313 = scmp.lt.s32.totalorder %s22, 0
      %s314 = scalar_select %p313, %s22, 0
      %s315 = sadd.s32 %s314, %s312
      %s316 = smul.addr %s315, 8
      %s317 = scalar_lea.vmem %s0, %s316
      %p318 = scmp.lt.s32.totalorder %s21, 1
      %s319 = scalar_select %p318, %s21, 1
      %p320 = scmp.lt.s32.totalorder %s22, 0
      %s321 = scalar_select %p320, %s22, 0
      %s322 = sadd.s32 %s321, %s319
      %s323 = smul.addr %s322, 4
      %s324 = scalar_lea.vmem %s1, %s323
      %p325 = scmp.lt.s32.totalorder %s21, 1
      %s326 = scalar_select %p325, %s21, 1
      %s327 = smul.addr %s326, 4
      %s328 = scalar_lea.vmem %s2, %s327
      %p329 = scmp.lt.s32.totalorder %s21, 1
      %s330 = scalar_select %p329, %s21, 1
      %s331 = smul.addr %s330, 4
      %s332 = scalar_lea.vmem %s3, %s331
      %p333 = scmp.lt.s32.totalorder %s21, 1
      %s334 = scalar_select %p333, %s21, 1
      %p335 = scmp.lt.s32.totalorder %s22, 0
      %s336 = scalar_select %p335, %s22, 0
      %s337 = sadd.s32 %s336, %s334
      %s338 = smul.addr %s337, 8
      %s339 = scalar_lea.vmem %s6, %s338
      %v341 = vld [vmem:[%s317] sm:$0xff]
      %v342 = vld [vmem:[%s324] sm:$0xf]
      %344 = vrot.lane.b32.xlu0 %v342, 120
      %v345 = vpop.permute.xlu0 %344
      %346 = vrot.lane.b32.xlu0 %v342, 112
      %v347 = vpop.permute.xlu0 %346
      %348 = vrot.lane.b32.xlu0 %v342, 104
      %v349 = vpop.permute.xlu0 %348
      %v352 = vpack.i.b16 %v345, %v342
      %v353 = vshrl.u32 %v342, 16
      %v354 = vshrl.u32 %v345, 16
      %v355 = vpack.i.b16 %v354, %v353
      %v358 = vpack.i.b16 %v349, %v347
      %v359 = vshrl.u32 %v347, 16
      %v360 = vshrl.u32 %v349, 16
      %v361 = vpack.i.b16 %v360, %v359
      %v364 = vunpack.c.l.s4 1983009808
      %v365 = vunpack.c.0.s8 %v364
      %v366 = vperm.slane %v352, %v365
      %v369 = vunpack.c.l.s4 1983009808
      %v370 = vunpack.c.0.s8 %v369
      %v371 = vperm.slane %v358, %v370
      %v372 = vrot.slane %v371, 4
      %vm373 = vcmask 1047556
      %v374 = vsel %vm373, %v372, %v366
      %v375 = vrot.slane %v366, 4
      %v376 = vsel %vm373, %v371, %v375
      %v378 = vunpack.c.l.s4 1934713408
      %v379 = vunpack.c.0.s8 %v378
      %v380 = vperm.slane %v374, %v379
      %v382 = vunpack.c.l.s4 1934713408
      %v383 = vunpack.c.0.s8 %v382
      %v384 = vperm.slane %v376, %v383
      %v385 = vrot.slane %v380, 4
      %v386 = vsel %vm373, 0, %v385
      %v387 = vrot.slane %v384, 4
      %v388 = vsel %vm373, 0, %v387
      %v391 = vunpack.c.l.s4 1983009808
      %v392 = vunpack.c.0.s8 %v391
      %v393 = vperm.slane %v355, %v392
      %v396 = vunpack.c.l.s4 1983009808
      %v397 = vunpack.c.0.s8 %v396
      %v398 = vperm.slane %v361, %v397
      %v399 = vrot.slane %v398, 4
      %v400 = vsel %vm373, %v399, %v393
      %v401 = vrot.slane %v393, 4
      %v402 = vsel %vm373, %v398, %v401
      %v404 = vunpack.c.l.s4 1934713408
      %v405 = vunpack.c.0.s8 %v404
      %v406 = vperm.slane %v400, %v405
      %v408 = vunpack.c.l.s4 1934713408
      %v409 = vunpack.c.0.s8 %v408
      %v410 = vperm.slane %v402, %v409
      %v411 = vrot.slane %v406, 4
      %v412 = vsel %vm373, 0, %v411
      %v413 = vrot.slane %v410, 4
      %v414 = vsel %vm373, 0, %v413
      %v415 = vsel %vm373, %v387, %v380
      %v417 = vunpack.c.l.s4 1983009808
      %v418 = vunpack.c.0.s8 %v417
      %v419 = vperm.slane %v415, %v418
      %v420 = vrot.slane %v388, 4
      %v421 = vsel %vm373, %v420, %v386
      %v423 = vunpack.c.l.s4 1983009808
      %v424 = vunpack.c.0.s8 %v423
      %v425 = vperm.slane %v421, %v424
      %v426 = vrot.slane %v425, 4
      %v427 = vsel %vm373, %v426, %v419
      %v429 = vunpack.c.l.s4 1934713408
      %v430 = vunpack.c.0.s8 %v429
      %v431 = vperm.slane %v427, %v430
      %v432 = vrot.slane %v431, 4
      %v433 = vsel %vm373, 0, %v432
      %v434 = vsel %vm373, %v413, %v406
      %v436 = vunpack.c.l.s4 1983009808
      %v437 = vunpack.c.0.s8 %v436
      %v438 = vperm.slane %v434, %v437
      %v439 = vrot.slane %v414, 4
      %v440 = vsel %vm373, %v439, %v412
      %v442 = vunpack.c.l.s4 1983009808
      %v443 = vunpack.c.0.s8 %v442
      %v444 = vperm.slane %v440, %v443
      %v445 = vrot.slane %v444, 4
      %v446 = vsel %vm373, %v445, %v438
      %v448 = vunpack.c.l.s4 1934713408
      %v449 = vunpack.c.0.s8 %v448
      %v450 = vperm.slane %v446, %v449
      %v451 = vrot.slane %v450, 4
      %v452 = vsel %vm373, 0, %v451
      %v455 = vpack.i.b16 %v450, %v431
      %v456 = vshrl.u32 %v431, 16
      %v457 = vshrl.u32 %v450, 16
      %v458 = vpack.i.b16 %v457, %v456
      %v461 = vpack.i.b16 %v452, %v433
      %v462 = vshrl.u32 %v433, 16
      %v463 = vshrl.u32 %v452, 16
      %v464 = vpack.i.b16 %v463, %v462
      %v465 = vld [vmem:[%s328] sm:$0xf]
      %467 = vrot.lane.b32.xlu0 %v465, 120
      %v468 = vpop.permute.xlu0 %467
      %469 = vrot.lane.b32.xlu0 %v465, 112
      %v470 = vpop.permute.xlu0 %469
      %471 = vrot.lane.b32.xlu0 %v465, 104
      %v472 = vpop.permute.xlu0 %471
      %v475 = vpack.i.b16 %v468, %v465
      %v476 = vshrl.u32 %v465, 16
      %v477 = vshrl.u32 %v468, 16
      %v478 = vpack.i.b16 %v477, %v476
      %v481 = vpack.i.b16 %v472, %v470
      %v482 = vshrl.u32 %v470, 16
      %v483 = vshrl.u32 %v472, 16
      %v484 = vpack.i.b16 %v483, %v482
      %v487 = vunpack.c.l.s4 1983009808
      %v488 = vunpack.c.0.s8 %v487
      %v489 = vperm.slane %v475, %v488
      %v492 = vunpack.c.l.s4 1983009808
      %v493 = vunpack.c.0.s8 %v492
      %v494 = vperm.slane %v481, %v493
      %v495 = vrot.slane %v494, 4
      %v496 = vsel %vm373, %v495, %v489
      %v497 = vrot.slane %v489, 4
      %v498 = vsel %vm373, %v494, %v497
      %v500 = vunpack.c.l.s4 1934713408
      %v501 = vunpack.c.0.s8 %v500
      %v502 = vperm.slane %v496, %v501
      %v504 = vunpack.c.l.s4 1934713408
      %v505 = vunpack.c.0.s8 %v504
      %v506 = vperm.slane %v498, %v505
      %v507 = vrot.slane %v502, 4
      %v508 = vsel %vm373, 0, %v507
      %v509 = vrot.slane %v506, 4
      %v510 = vsel %vm373, 0, %v509
      %v513 = vunpack.c.l.s4 1983009808
      %v514 = vunpack.c.0.s8 %v513
      %v515 = vperm.slane %v478, %v514
      %v518 = vunpack.c.l.s4 1983009808
      %v519 = vunpack.c.0.s8 %v518
      %v520 = vperm.slane %v484, %v519
      %v521 = vrot.slane %v520, 4
      %v522 = vsel %vm373, %v521, %v515
      %v523 = vrot.slane %v515, 4
      %v524 = vsel %vm373, %v520, %v523
      %v526 = vunpack.c.l.s4 1934713408
      %v527 = vunpack.c.0.s8 %v526
      %v528 = vperm.slane %v522, %v527
      %v530 = vunpack.c.l.s4 1934713408
      %v531 = vunpack.c.0.s8 %v530
      %v532 = vperm.slane %v524, %v531
      %v533 = vrot.slane %v528, 4
      %v534 = vsel %vm373, 0, %v533
      %v535 = vrot.slane %v532, 4
      %v536 = vsel %vm373, 0, %v535
      %v537 = vsel %vm373, %v509, %v502
      %v539 = vunpack.c.l.s4 1983009808
      %v540 = vunpack.c.0.s8 %v539
      %v541 = vperm.slane %v537, %v540
      %v542 = vrot.slane %v510, 4
      %v543 = vsel %vm373, %v542, %v508
      %v545 = vunpack.c.l.s4 1983009808
      %v546 = vunpack.c.0.s8 %v545
      %v547 = vperm.slane %v543, %v546
      %v548 = vrot.slane %v547, 4
      %v549 = vsel %vm373, %v548, %v541
      %v551 = vunpack.c.l.s4 1934713408
      %v552 = vunpack.c.0.s8 %v551
      %v553 = vperm.slane %v549, %v552
      %v554 = vrot.slane %v553, 4
      %v555 = vsel %vm373, 0, %v554
      %v556 = vsel %vm373, %v535, %v528
      %v558 = vunpack.c.l.s4 1983009808
      %v559 = vunpack.c.0.s8 %v558
      %v560 = vperm.slane %v556, %v559
      %v561 = vrot.slane %v536, 4
      %v562 = vsel %vm373, %v561, %v534
      %v564 = vunpack.c.l.s4 1983009808
      %v565 = vunpack.c.0.s8 %v564
      %v566 = vperm.slane %v562, %v565
      %v567 = vrot.slane %v566, 4
      %v568 = vsel %vm373, %v567, %v560
      %v570 = vunpack.c.l.s4 1934713408
      %v571 = vunpack.c.0.s8 %v570
      %v572 = vperm.slane %v568, %v571
      %v573 = vrot.slane %v572, 4
      %v574 = vsel %vm373, 0, %v573
      %v577 = vpack.i.b16 %v572, %v553
      %v578 = vshrl.u32 %v553, 16
      %v579 = vshrl.u32 %v572, 16
      %v580 = vpack.i.b16 %v579, %v578
      %v583 = vpack.i.b16 %v574, %v555
      %v584 = vshrl.u32 %v555, 16
      %v585 = vshrl.u32 %v574, 16
      %v586 = vpack.i.b16 %v585, %v584
      %v587 = vld [vmem:[%s332] sm:$0xf]
      %589 = vrot.lane.b32.xlu0 %v587, 120
      %v590 = vpop.permute.xlu0 %589
      %591 = vrot.lane.b32.xlu0 %v587, 112
      %v592 = vpop.permute.xlu0 %591
      %593 = vrot.lane.b32.xlu0 %v587, 104
      %v594 = vpop.permute.xlu0 %593
      %v597 = vpack.i.b16 %v590, %v587
      %v598 = vshrl.u32 %v587, 16
      %v599 = vshrl.u32 %v590, 16
      %v600 = vpack.i.b16 %v599, %v598
      %v603 = vpack.i.b16 %v594, %v592
      %v604 = vshrl.u32 %v592, 16
      %v605 = vshrl.u32 %v594, 16
      %v606 = vpack.i.b16 %v605, %v604
      %v609 = vunpack.c.l.s4 1983009808
      %v610 = vunpack.c.0.s8 %v609
      %v611 = vperm.slane %v597, %v610
      %v614 = vunpack.c.l.s4 1983009808
      %v615 = vunpack.c.0.s8 %v614
      %v616 = vperm.slane %v603, %v615
      %v617 = vrot.slane %v616, 4
      %v618 = vsel %vm373, %v617, %v611
      %v619 = vrot.slane %v611, 4
      %v620 = vsel %vm373, %v616, %v619
      %v622 = vunpack.c.l.s4 1934713408
      %v623 = vunpack.c.0.s8 %v622
      %v624 = vperm.slane %v618, %v623
      %v626 = vunpack.c.l.s4 1934713408
      %v627 = vunpack.c.0.s8 %v626
      %v628 = vperm.slane %v620, %v627
      %v629 = vrot.slane %v624, 4
      %v630 = vsel %vm373, 0, %v629
      %v631 = vrot.slane %v628, 4
      %v632 = vsel %vm373, 0, %v631
      %v635 = vunpack.c.l.s4 1983009808
      %v636 = vunpack.c.0.s8 %v635
      %v637 = vperm.slane %v600, %v636
      %v640 = vunpack.c.l.s4 1983009808
      %v641 = vunpack.c.0.s8 %v640
      %v642 = vperm.slane %v606, %v641
      %v643 = vrot.slane %v642, 4
      %v644 = vsel %vm373, %v643, %v637
      %v645 = vrot.slane %v637, 4
      %v646 = vsel %vm373, %v642, %v645
      %v648 = vunpack.c.l.s4 1934713408
      %v649 = vunpack.c.0.s8 %v648
      %v650 = vperm.slane %v644, %v649
      %v652 = vunpack.c.l.s4 1934713408
      %v653 = vunpack.c.0.s8 %v652
      %v654 = vperm.slane %v646, %v653
      %v655 = vrot.slane %v650, 4
      %v656 = vsel %vm373, 0, %v655
      %v657 = vrot.slane %v654, 4
      %v658 = vsel %vm373, 0, %v657
      %v659 = vsel %vm373, %v631, %v624
      %v661 = vunpack.c.l.s4 1983009808
      %v662 = vunpack.c.0.s8 %v661
      %v663 = vperm.slane %v659, %v662
      %v664 = vrot.slane %v632, 4
      %v665 = vsel %vm373, %v664, %v630
      %v667 = vunpack.c.l.s4 1983009808
      %v668 = vunpack.c.0.s8 %v667
      %v669 = vperm.slane %v665, %v668
      %v670 = vrot.slane %v669, 4
      %v671 = vsel %vm373, %v670, %v663
      %v673 = vunpack.c.l.s4 1934713408
      %v674 = vunpack.c.0.s8 %v673
      %v675 = vperm.slane %v671, %v674
      %v676 = vrot.slane %v675, 4
      %v677 = vsel %vm373, 0, %v676
      %v678 = vsel %vm373, %v657, %v650
      %v680 = vunpack.c.l.s4 1983009808
      %v681 = vunpack.c.0.s8 %v680
      %v682 = vperm.slane %v678, %v681
      %v683 = vrot.slane %v658, 4
      %v684 = vsel %vm373, %v683, %v656
      %v686 = vunpack.c.l.s4 1983009808
      %v687 = vunpack.c.0.s8 %v686
      %v688 = vperm.slane %v684, %v687
      %v689 = vrot.slane %v688, 4
      %v690 = vsel %vm373, %v689, %v682
      %v692 = vunpack.c.l.s4 1934713408
      %v693 = vunpack.c.0.s8 %v692
      %v694 = vperm.slane %v690, %v693
      %v695 = vrot.slane %v694, 4
      %v696 = vsel %vm373, 0, %v695
      %v699 = vpack.i.b16 %v694, %v675
      %v700 = vshrl.u32 %v675, 16
      %v701 = vshrl.u32 %v694, 16
      %v702 = vpack.i.b16 %v701, %v700
      %v705 = vpack.i.b16 %v696, %v677
      %v706 = vshrl.u32 %v677, 16
      %v707 = vshrl.u32 %v696, 16
      %v708 = vpack.i.b16 %v707, %v706
      %vm709 = vcmask 64512
      %v711 = vsel %vm709, %v455, 0
      %v714 = vsel %vm709, %v577, 0
      %716 = vmatpush.bf16.xpose.msra.mxu0 0
      %717 = vmatpush.bf16.xpose.msra.mxu0 0
      %718 = vmatpush.bf16.xpose.msra.mxu0 0
      %719 = vmatpush.bf16.xpose.msra.mxu0 0
      %720 = vmatpush.bf16.xpose.msra.mxu0 0
      %721 = vmatpush.bf16.xpose.msra.mxu0 0
      %722 = vmatpush.bf16.xpose.msra.mxu0 0
      %723 = vmatpush.bf16.xpose.msra.mxu0 %v714
      %724 = vmatmul.bf16.gmra.mxu0 %v711
      %v725 = vpop.f32.mrf.mxu0
      %v726 = vadd.f32 0.0, %v725
      %v727 = vpop.f32.mrf.mxu0
      %728 = vdwg.mxu0
      %v730 = vsel %vm709, %v458, 0
      %v733 = vsel %vm709, %v580, 0
      %735 = vmatpush.bf16.xpose.msra.mxu0 0
      %736 = vmatpush.bf16.xpose.msra.mxu0 0
      %737 = vmatpush.bf16.xpose.msra.mxu0 0
      %738 = vmatpush.bf16.xpose.msra.mxu0 0
      %739 = vmatpush.bf16.xpose.msra.mxu0 0
      %740 = vmatpush.bf16.xpose.msra.mxu0 0
      %741 = vmatpush.bf16.xpose.msra.mxu0 0
      %742 = vmatpush.bf16.xpose.msra.mxu0 %v733
      %743 = vmatmul.bf16.gmra.mxu0 %v730
      %v744 = vpop.f32.mrf.mxu0
      %v745 = vadd.f32 0.0, %v744
      %v746 = vpop.f32.mrf.mxu0
      %747 = vdwg.mxu0
      %v749 = vsel %vm709, %v461, 0
      %v752 = vsel %vm709, %v583, 0
      %754 = vmatpush.bf16.xpose.msra.mxu0 0
      %755 = vmatpush.bf16.xpose.msra.mxu0 0
      %756 = vmatpush.bf16.xpose.msra.mxu0 0
      %757 = vmatpush.bf16.xpose.msra.mxu0 0
      %758 = vmatpush.bf16.xpose.msra.mxu0 0
      %759 = vmatpush.bf16.xpose.msra.mxu0 0
      %760 = vmatpush.bf16.xpose.msra.mxu0 0
      %761 = vmatpush.bf16.xpose.msra.mxu0 %v752
      %762 = vmatmul.bf16.gmra.mxu0 %v749
      %v763 = vpop.f32.mrf.mxu0
      %v764 = vadd.f32 0.0, %v763
      %v765 = vpop.f32.mrf.mxu0
      %766 = vdwg.mxu0
      %v768 = vsel %vm709, %v464, 0
      %v771 = vsel %vm709, %v586, 0
      %773 = vmatpush.bf16.xpose.msra.mxu0 0
      %774 = vmatpush.bf16.xpose.msra.mxu0 0
      %775 = vmatpush.bf16.xpose.msra.mxu0 0
      %776 = vmatpush.bf16.xpose.msra.mxu0 0
      %777 = vmatpush.bf16.xpose.msra.mxu0 0
      %778 = vmatpush.bf16.xpose.msra.mxu0 0
      %779 = vmatpush.bf16.xpose.msra.mxu0 0
      %780 = vmatpush.bf16.xpose.msra.mxu0 %v771
      %781 = vmatmul.bf16.gmra.mxu0 %v768
      %v782 = vpop.f32.mrf.mxu0
      %v783 = vadd.f32 0.0, %v782
      %v784 = vpop.f32.mrf.mxu0
      %785 = vdwg.mxu0
      %v786 = vsel %vm709, %v726, -inf
      %787 = vmax.xlane.f32.xlu0 %v786
      %v788 = vpop.xlane.xlu0 %787
      %v789 = vsel %vm709, %v745, -inf
      %790 = vmax.xlane.f32.xlu0 %v789
      %v791 = vpop.xlane.xlu0 %790
      %v792 = vsel %vm709, %v764, -inf
      %793 = vmax.xlane.f32.xlu0 %v792
      %v794 = vpop.xlane.xlu0 %793
      %v795 = vsel %vm709, %v783, -inf
      %796 = vmax.xlane.f32.xlu0 %v795
      %v797 = vpop.xlane.xlu0 %796
      %v798 = vsub.f32 %v726, %v788
      %v799 = vsub.f32 %v745, %v791
      %v800 = vsub.f32 %v764, %v794
      %v801 = vsub.f32 %v783, %v797
      %v802 = vmul.f32 %v798, 1.442695
      %v803 = vpow.pop %v802
      %v804 = vmul.f32 %v799, 1.442695
      %v805 = vpow.pop %v804
      %v806 = vmul.f32 %v800, 1.442695
      %v807 = vpow.pop %v806
      %v808 = vmul.f32 %v801, 1.442695
      %v809 = vpow.pop %v808
      %v810 = vsel %vm709, %v803, 0.0
      %811 = vadd.xlane.f32.xlu0 %v810
      %v812 = vpop.xlane.xlu0 %811
      %v813 = vsel %vm709, %v805, 0.0
      %814 = vadd.xlane.f32.xlu0 %v813
      %v815 = vpop.xlane.xlu0 %814
      %v816 = vsel %vm709, %v807, 0.0
      %817 = vadd.xlane.f32.xlu0 %v816
      %v818 = vpop.xlane.xlu0 %817
      %v819 = vsel %vm709, %v809, 0.0
      %820 = vadd.xlane.f32.xlu0 %v819
      %v821 = vpop.xlane.xlu0 %820
      %v822 = vrcp.pop %v812
      %v823 = vrcp.pop %v815
      %v824 = vrcp.pop %v818
      %v825 = vrcp.pop %v821
      %v826 = vmul.f32 %v803, %v822
      %v827 = vmul.f32 %v805, %v823
      %v828 = vmul.f32 %v807, %v824
      %v829 = vmul.f32 %v809, %v825
      %v830 = vpack.c.bf16 %v826, %v826
      %v831 = vpack.c.bf16 %v827, %v827
      %v832 = vpack.c.bf16 %v828, %v828
      %v833 = vpack.c.bf16 %v829, %v829
      %v835 = vsel %vm709, %v830, 0
      %vm837 = vcmask 1043456
      %v839 = vsel %vm837, %v699, 0
      %841 = vmatpush.bf16.msra.mxu0 0
      %842 = vmatpush.bf16.msra.mxu0 0
      %843 = vmatpush.bf16.msra.mxu0 0
      %844 = vmatpush.bf16.msra.mxu0 0
      %845 = vmatpush.bf16.msra.mxu0 0
      %846 = vmatpush.bf16.msra.mxu0 0
      %847 = vmatpush.bf16.msra.mxu0 0
      %848 = vmatpush.bf16.msra.mxu0 %v839
      %849 = vmatmul.bf16.gmra.mxu0 %v835
      %v850 = vpop.f32.mrf.mxu0
      %v851 = vadd.f32 0.0, %v850
      %v852 = vpop.f32.mrf.mxu0
      %853 = vdwg.mxu0
      %v855 = vsel %vm709, %v831, 0
      %v858 = vsel %vm837, %v702, 0
      %860 = vmatpush.bf16.msra.mxu0 0
      %861 = vmatpush.bf16.msra.mxu0 0
      %862 = vmatpush.bf16.msra.mxu0 0
      %863 = vmatpush.bf16.msra.mxu0 0
      %864 = vmatpush.bf16.msra.mxu0 0
      %865 = vmatpush.bf16.msra.mxu0 0
      %866 = vmatpush.bf16.msra.mxu0 0
      %867 = vmatpush.bf16.msra.mxu0 %v858
      %868 = vmatmul.bf16.gmra.mxu0 %v855
      %v869 = vpop.f32.mrf.mxu0
      %v870 = vadd.f32 0.0, %v869
      %v871 = vpop.f32.mrf.mxu0
      %872 = vdwg.mxu0
      %v874 = vsel %vm709, %v832, 0
      %v877 = vsel %vm837, %v705, 0
      %879 = vmatpush.bf16.msra.mxu0 0
      %880 = vmatpush.bf16.msra.mxu0 0
      %881 = vmatpush.bf16.msra.mxu0 0
      %882 = vmatpush.bf16.msra.mxu0 0
      %883 = vmatpush.bf16.msra.mxu0 0
      %884 = vmatpush.bf16.msra.mxu0 0
      %885 = vmatpush.bf16.msra.mxu0 0
      %886 = vmatpush.bf16.msra.mxu0 %v877
      %887 = vmatmul.bf16.gmra.mxu0 %v874
      %v888 = vpop.f32.mrf.mxu0
      %v889 = vadd.f32 0.0, %v888
      %v890 = vpop.f32.mrf.mxu0
      %891 = vdwg.mxu0
      %v893 = vsel %vm709, %v833, 0
      %v896 = vsel %vm837, %v708, 0
      %898 = vmatpush.bf16.msra.mxu0 0
      %899 = vmatpush.bf16.msra.mxu0 0
      %900 = vmatpush.bf16.msra.mxu0 0
      %901 = vmatpush.bf16.msra.mxu0 0
      %902 = vmatpush.bf16.msra.mxu0 0
      %903 = vmatpush.bf16.msra.mxu0 0
      %904 = vmatpush.bf16.msra.mxu0 0
      %905 = vmatpush.bf16.msra.mxu0 %v896
      %906 = vmatmul.bf16.gmra.mxu0 %v893
      %v907 = vpop.f32.mrf.mxu0
      %v908 = vadd.f32 0.0, %v907
      %v909 = vpop.f32.mrf.mxu0
      %910 = vdwg.mxu0
      %v911 = vrot.slane %v889, 4
      %vm912 = vcmask 1047556
      %v913 = vsel %vm912, %v911, %v851
      %v914 = vrot.slane %v851, 4
      %v915 = vsel %vm912, %v889, %v914
      %v917 = vunpack.c.l.s4 1983009808
      %v918 = vunpack.c.0.s8 %v917
      %v919 = vperm.slane %v913, %v918
      %v921 = vunpack.c.l.s4 1983009808
      %v922 = vunpack.c.0.s8 %v921
      %v923 = vperm.slane %v915, %v922
      %v924 = vrot.slane %v908, 4
      %v925 = vsel %vm912, %v924, %v870
      %v926 = vrot.slane %v870, 4
      %v927 = vsel %vm912, %v908, %v926
      %v929 = vunpack.c.l.s4 1983009808
      %v930 = vunpack.c.0.s8 %v929
      %v931 = vperm.slane %v925, %v930
      %v933 = vunpack.c.l.s4 1983009808
      %v934 = vunpack.c.0.s8 %v933
      %v935 = vperm.slane %v927, %v934
      %v936 = vrot.slane %v931, 4
      %v937 = vsel %vm912, %v936, %v919
      %v938 = vrot.slane %v919, 4
      %v939 = vsel %vm912, %v931, %v938
      %v941 = vunpack.c.l.s4 1934713408
      %v942 = vunpack.c.0.s8 %v941
      %v943 = vperm.slane %v937, %v942
      %v945 = vunpack.c.l.s4 1934713408
      %v946 = vunpack.c.0.s8 %v945
      %v947 = vperm.slane %v939, %v946
      %v948 = vrot.slane %v935, 4
      %v949 = vsel %vm912, %v948, %v923
      %v950 = vrot.slane %v923, 4
      %v951 = vsel %vm912, %v935, %v950
      %v953 = vunpack.c.l.s4 1934713408
      %v954 = vunpack.c.0.s8 %v953
      %v955 = vperm.slane %v949, %v954
      %v957 = vunpack.c.l.s4 1934713408
      %v958 = vunpack.c.0.s8 %v957
      %v959 = vperm.slane %v951, %v958
      %v960 = vrot.slane %v943, 4
      %v961 = vsel %vm912, 0.0, %v960
      %v962 = vrot.slane %v947, 4
      %v963 = vsel %vm912, 0.0, %v962
      %v964 = vrot.slane %v955, 4
      %v965 = vsel %vm912, 0.0, %v964
      %v966 = vrot.slane %v959, 4
      %v967 = vsel %vm912, 0.0, %v966
      %v968 = vsel %vm912, %v962, %v943
      %v970 = vunpack.c.l.s4 1983009808
      %v971 = vunpack.c.0.s8 %v970
      %v972 = vperm.slane %v968, %v971
      %v973 = vrot.slane %v963, 4
      %v974 = vsel %vm912, %v973, %v961
      %v976 = vunpack.c.l.s4 1983009808
      %v977 = vunpack.c.0.s8 %v976
      %v978 = vperm.slane %v974, %v977
      %v979 = vsel %vm912, %v966, %v955
      %v981 = vunpack.c.l.s4 1983009808
      %v982 = vunpack.c.0.s8 %v981
      %v983 = vperm.slane %v979, %v982
      %v984 = vrot.slane %v967, 4
      %v985 = vsel %vm912, %v984, %v965
      %v987 = vunpack.c.l.s4 1983009808
      %v988 = vunpack.c.0.s8 %v987
      %v989 = vperm.slane %v985, %v988
      %v990 = vrot.slane %v978, 4
      %v991 = vsel %vm912, %v990, %v972
      %v992 = vrot.slane %v972, 4
      %v993 = vsel %vm912, %v978, %v992
      %v995 = vunpack.c.l.s4 1934713408
      %v996 = vunpack.c.0.s8 %v995
      %v997 = vperm.slane %v991, %v996
      %v999 = vunpack.c.l.s4 1934713408
      %v1000 = vunpack.c.0.s8 %v999
      %v1001 = vperm.slane %v993, %v1000
      %v1002 = vrot.slane %v989, 4
      %v1003 = vsel %vm912, %v1002, %v983
      %v1004 = vrot.slane %v983, 4
      %v1005 = vsel %vm912, %v989, %v1004
      %v1007 = vunpack.c.l.s4 1934713408
      %v1008 = vunpack.c.0.s8 %v1007
      %v1009 = vperm.slane %v1003, %v1008
      %v1011 = vunpack.c.l.s4 1934713408
      %v1012 = vunpack.c.0.s8 %v1011
      %v1013 = vperm.slane %v1005, %v1012
      %v1014 = vrot.slane %v1009, 4
      %v1015 = vsel %vm912, %v1014, %v997
      %v1016 = vrot.slane %v997, 4
      %v1017 = vsel %vm912, %v1009, %v1016
      %v1018 = vrot.slane %v1013, 4
      %v1019 = vsel %vm912, %v1018, %v1001
      %v1020 = vrot.slane %v1001, 4
      %v1021 = vsel %vm912, %v1013, %v1020
      %1023 = vrot.lane.b32.xlu0 %v1017, 8
      %v1024 = vpop.permute.xlu0 %1023
      %1027 = vrot.lane.b32.xlu0 %v1019, 16
      %v1028 = vpop.permute.xlu0 %1027
      %1031 = vrot.lane.b32.xlu0 %v1021, 24
      %v1032 = vpop.permute.xlu0 %1031
      %v1034 = vsel %vm709, %v1015, %v1024
      %vm1035 = vcmask 130048
      %v1036 = vsel %vm1035, %v1034, %v1028
      %vm1037 = vcmask 195584
      %v1038 = vsel %vm1037, %v1036, %v1032
      %v1039 = vpack.c.bf16 %v1038, %v1038
      %v1040 = vld [vmem:[%s4] sm:$0xf]
      %v1041 = vld [vmem:[%s4 + $0x4] sm:$0xf]
      %v1042 = vld [vmem:[%s4 + $0x8] sm:$0xf]
      %v1043 = vld [vmem:[%s4 + $0xc] sm:$0xf]
      %v1044 = vld [vmem:[%s5] sm:$0x1]
      %v1046 = vperm.slane %v1044, 0
      %v1052 = vunpack.c.l.b16 %v1040
      %v1053 = vunpack.c.l.b16 %v1041
      %v1054 = vunpack.c.l.b16 %v1042
      %v1055 = vunpack.c.l.b16 %v1043
      %v1056 = vpack.c.b16 %v1053, %v1052
      %v1057 = vpack.c.b16 %v1055, %v1054
      %vm1060 = vcmask 261120
      %v1062 = vsel %vm1060, %v1039, 0
      %1064 = vmatpush.bf16.msra.mxu0 0
      %1065 = vmatpush.bf16.msra.mxu0 0
      %1066 = vmatpush.bf16.msra.mxu0 0
      %1067 = vmatpush.bf16.msra.mxu0 0
      %1068 = vmatpush.bf16.msra.mxu0 0
      %1069 = vmatpush.bf16.msra.mxu0 0
      %1070 = vmatpush.bf16.msra.mxu0 %v1057
      %1071 = vmatpush.bf16.msra.mxu0 %v1056
      %1072 = vmatmul.bf16.gmra.mxu0 %v1062
      %v1073 = vpop.f32.mrf.mxu0
      %v1074 = vadd.f32 %v1046, %v1073
      %v1075 = vpop.f32.mrf.mxu0
      %1076 = vdwg.mxu0
      %v1077 = vadd.f32 %v341, %v1074
      %1078 = vst.msk [vmem:[%s339] sm:$0xff] %vm1060, %v1077
      %p1079 = scmp.lt.s32.totalorder %s21, 1
      %s1080 = scalar_select %p1079, %s21, 1
      %p1081 = scmp.lt.s32.totalorder %s22, 0
      %s1082 = scalar_select %p1081, %s22, 0
      %s1083 = sadd.s32 %s1082, %s1080
      %s1084 = smul.addr %s1083, 8
      %s1085 = scalar_lea.vmem %s6, %s1084
      // Predicated region
      $region45: #{transformer_forward.7} parent=43 // pred_check
        %p1086 = pneg %p199
      $region46: #{transformer_forward.7} parent=43 // pred_check_branch
        %1088 = sbr.rel (%p1086) target = $region48
      $region47: #{transformer_forward.7} parent=43 // pred_region
        _
      $region48: #{transformer_forward.7} parent=43 // pred_fallthru
        _
    $region44: #{transformer_forward.7} parent=5 // pred_fallthru
      _
    %p1089 = scmp.le.s32.totalorder 2, %s12
    // Predicated region
    $region49: #{transformer_forward.7} parent=5 // pred_check
      %p1090 = pneg %p1089
    $region50: #{transformer_forward.7} parent=5 // pred_check_branch
      %1092 = sbr.rel (%p1090) target = $region52
    $region51: #{transformer_forward.7} parent=5 // pred_region
      %s1093 = ssub.s32 %s12, 2
      // Predicated region
      $region53: #{transformer_forward.7} parent=51 // pred_check
        %p1094 = pneg %p205
      $region54: #{transformer_forward.7} parent=51 // pred_check_branch
        %1096 = sbr.rel (%p1094) target = $region56
      $region55: #{transformer_forward.7} parent=51 // pred_region
        %p1097 = scmp.lt.s32.totalorder %s23, 1
        %s1098 = scalar_select %p1097, %s23, 1
        %p1099 = scmp.lt.s32.totalorder %s24, 0
        %s1100 = scalar_select %p1099, %s24, 0
        %s1101 = sadd.s32 %s1100, %s1098
        %s1102 = smul.addr %s1101, 8
        %s1103 = scalar_lea.vmem %s6, %s1102
      $region56: #{transformer_forward.7} parent=51 // pred_fallthru
        _
    $region52: #{transformer_forward.7} parent=5 // pred_fallthru
      _
  $region6: #{transformer_forward.7} parent=0 // loop_footer
    %s16 = sadd.s32 1, %s12
  $region7: #{transformer_forward.7} parent=0 // loop_footer_branch
    %11 = sbr.rel target = $region3
  $region8: #{transformer_forward.7} parent=0 // loop_exit
    _

// kernel: transformer_forward.8
$region0: #{transformer_forward.8}
  #allocation0 [shape = 'u32[]', space=smem, size = 0x4, offset = 0x4, fixed_abs, tag = 'smem constant byte address 0x4 - core index']
  #allocation1 [shape = 'u32[72,128]{1,0:T(1,128)}', space=vmem, size = 0x9000, scoped, tag = 'internal scratch']
  %s0 = inlined_call_operand.vmem [shape: f32[16,32], index: 0, kind: input, shape index: {}, may-alias: {0,7}]
  %s1 = inlined_call_operand.vmem [shape: f32[1,32], index: 1, kind: input, shape index: {}]
  %s2 = inlined_call_operand.vmem [shape: f32[1,32], index: 2, kind: input, shape index: {}]
  %s3 = inlined_call_operand.vmem [shape: bf16[32,128], index: 3, kind: input, shape index: {}]
  %s4 = inlined_call_operand.vmem [shape: f32[1,128], index: 4, kind: input, shape index: {}]
  %s5 = inlined_call_operand.vmem [shape: bf16[128,32], index: 5, kind: input, shape index: {}]
  %s6 = inlined_call_operand.vmem [shape: f32[1,32], index: 6, kind: input, shape index: {}]
  %s7 = inlined_call_operand.vmem [shape: f32[16,32], index: 7, kind: output, shape index: {}, may-alias: {0,7}]
  %s8 = sld [smem:[#allocation0]]
  $region38: #{transformer_forward.8} parent=0
    _
  %s10 = ssub.s32 1, %s8
  %s11 = scalar_select 0, %s10, %s8
  // Predicated region
  $region2: #{transformer_forward.8} parent=0 // pred_check
    _
  $region3: #{transformer_forward.8} parent=0 // pred_check_branch
    %13 = sbr.rel (0) target = $region5
  $region4: #{transformer_forward.8} parent=0 // pred_region
    _
  $region5: #{transformer_forward.8} parent=0 // pred_fallthru
    _
  // Predicated region
  $region6: #{transformer_forward.8} parent=0 // pred_check
    _
  $region7: #{transformer_forward.8} parent=0 // pred_check_branch
    %15 = sbr.rel (0) target = $region9
  $region8: #{transformer_forward.8} parent=0 // pred_region
    _
  $region9: #{transformer_forward.8} parent=0 // pred_fallthru
    _
  // Predicated region
  $region10: #{transformer_forward.8} parent=0 // pred_check
    _
  $region11: #{transformer_forward.8} parent=0 // pred_check_branch
    %17 = sbr.rel (0) target = $region13
  $region12: #{transformer_forward.8} parent=0 // pred_region
    _
  $region13: #{transformer_forward.8} parent=0 // pred_fallthru
    _
  // Predicated region
  $region14: #{transformer_forward.8} parent=0 // pred_check
    _
  $region15: #{transformer_forward.8} parent=0 // pred_check_branch
    %19 = sbr.rel (0) target = $region17
  $region16: #{transformer_forward.8} parent=0 // pred_region
    _
  $region17: #{transformer_forward.8} parent=0 // pred_fallthru
    _
  // Predicated region
  $region18: #{transformer_forward.8} parent=0 // pred_check
    _
  $region19: #{transformer_forward.8} parent=0 // pred_check_branch
    %21 = sbr.rel (0) target = $region21
  $region20: #{transformer_forward.8} parent=0 // pred_region
    _
  $region21: #{transformer_forward.8} parent=0 // pred_fallthru
    _
  // Predicated region
  $region22: #{transformer_forward.8} parent=0 // pred_check
    _
  $region23: #{transformer_forward.8} parent=0 // pred_check_branch
    %23 = sbr.rel (0) target = $region25
  $region24: #{transformer_forward.8} parent=0 // pred_region
    _
  $region25: #{transformer_forward.8} parent=0 // pred_fallthru
    _
  // Predicated region
  $region26: #{transformer_forward.8} parent=0 // pred_check
    _
  $region27: #{transformer_forward.8} parent=0 // pred_check_branch
    %25 = sbr.rel (0) target = $region29
  $region28: #{transformer_forward.8} parent=0 // pred_region
    _
  $region29: #{transformer_forward.8} parent=0 // pred_fallthru
    _
  %v27 = vld [vmem:[%s0] sm:$0xff]
  %v28 = vld [vmem:[%s0 + $0x8] sm:$0xff]
  %v29 = vld [vmem:[%s1] sm:$0x1]
  %v30 = vld [vmem:[%s2] sm:$0x1]
  %vm31 = vcmask 261120
  %v32 = vsel %vm31, %v27, 0.0
  %33 = vadd.xlane.f32.xlu0 %v32
  %v34 = vpop.xlane.xlu0 %33
  %v35 = vsel %vm31, %v28, 0.0
  %36 = vadd.xlane.f32.xlu0 %v35
  %v37 = vpop.xlane.xlu0 %36
  %v38 = vrcp.pop 32.0
  %v39 = vmul.f32 32.0, %v38
  %v40 = vsub.f32 1.0, %v39
  %v41 = vmul.f32 %v38, %v40
  %v42 = vadd.f32 %v38, %v41
  %vm43 = vweird.f32 %v38
  %v44 = vsel %vm43, %v38, %v42
  %v45 = vmul.f32 %v34, %v44
  %v46 = vmul.f32 %v37, %v44
  %v47 = vsub.f32 %v27, %v45
  %v48 = vsub.f32 %v28, %v46
  %v49 = vmul.f32 %v47, %v47
  %v50 = vmul.f32 %v48, %v48
  %v51 = vsel %vm31, %v49, 0.0
  %52 = vadd.xlane.f32.xlu0 %v51
  %v53 = vpop.xlane.xlu0 %52
  %v54 = vsel %vm31, %v50, 0.0
  %55 = vadd.xlane.f32.xlu0 %v54
  %v56 = vpop.xlane.xlu0 %55
  %v57 = vmul.f32 %v53, %v44
  %v58 = vmul.f32 %v56, %v44
  %v59 = vadd.f32 %v57, 1e-05
  %v60 = vadd.f32 %v58, 1e-05
  %v61 = vrsqrt.pop %v59
  %v62 = vmul.f32 %v61, %v59
  %v63 = vmul.f32 %v62, %v61
  %v64 = vmul.f32 0.5, %v63
  %v65 = vsub.f32 1.5, %v64
  %v66 = vmul.f32 %v61, %v65
  %vm67 = vweird.f32 %v59
  %vm68 = vweird.f32 %v61
  %vm69 = vmor %vm67, %vm68
  %v70 = vsel %vm69, %v61, %v66
  %v71 = vrsqrt.pop %v60
  %v72 = vmul.f32 %v71, %v60
  %v73 = vmul.f32 %v72, %v71
  %v74 = vmul.f32 0.5, %v73
  %v75 = vsub.f32 1.5, %v74
  %v76 = vmul.f32 %v71, %v75
  %vm77 = vweird.f32 %v60
  %vm78 = vweird.f32 %v71
  %vm79 = vmor %vm77, %vm78
  %v80 = vsel %vm79, %v71, %v76
  %v81 = vmul.f32 %v47, %v70
  %v82 = vmul.f32 %v48, %v80
  %v84 = vperm.slane %v29, 0
  %v86 = vmul.f32 %v81, %v84
  %v87 = vmul.f32 %v82, %v84
  %v89 = vperm.slane %v30, 0
  %v91 = vadd.f32 %v86, %v89
  %v92 = vadd.f32 %v87, %v89
  %v93 = vpack.c.bf16 %v92, %v91
  %v94 = vld [vmem:[%s3] sm:$0xf]
  %v95 = vld [vmem:[%s3 + $0x4] sm:$0xf]
  %v96 = vld [vmem:[%s3 + $0x8] sm:$0xf]
  %v97 = vld [vmem:[%s3 + $0xc] sm:$0xf]
  %v98 = vld [vmem:[%s4] sm:$0x1]
  %v100 = vperm.slane %v98, 0
  %v106 = vunpack.c.l.b16 %v94
  %v107 = vunpack.c.l.b16 %v95
  %v108 = vunpack.c.l.b16 %v96
  %v109 = vunpack.c.l.b16 %v97
  %v110 = vpack.c.b16 %v107, %v106
  %v111 = vpack.c.b16 %v109, %v108
  %v115 = vsel %vm31, %v93, 0
  %117 = vmatpush.bf16.msra.mxu0 0
  %118 = vmatpush.bf16.msra.mxu0 0
  %119 = vmatpush.bf16.msra.mxu0 0
  %120 = vmatpush.bf16.msra.mxu0 0
  %121 = vmatpush.bf16.msra.mxu0 0
  %122 = vmatpush.bf16.msra.mxu0 0
  %123 = vmatpush.bf16.msra.mxu0 %v111
  %124 = vmatpush.bf16.msra.mxu0 %v110
  %125 = vmatmul.bf16.gmra.mxu0 %v115
  %v126 = vpop.f32.mrf.mxu0
  %v127 = vadd.f32 %v100, %v126
  %v128 = vpop.f32.mrf.mxu0
  %v129 = vadd.f32 %v100, %v128
  %130 = vdwg.mxu0
  %v131 = vmul.f32 %v127, 1.702
  %v132 = vmul.f32 %v129, 1.702
  %v133 = vxor.u32 %v131, 2147483648
  %v134 = vxor.u32 %v132, 2147483648
  %v135 = vmul.f32 %v133, 1.442695
  %v136 = vpow.pop %v135
  %v137 = vmul.f32 %v134, 1.442695
  %v138 = vpow.pop %v137
  %v139 = vadd.f32 %v136, 1.0
  %v140 = vadd.f32 %v138, 1.0
  %v141 = vrcp.pop %v139
  %v142 = vmul.f32 %v139, %v141
  %v143 = vsub.f32 1.0, %v142
  %v144 = vmul.f32 %v141, %v143
  %v145 = vadd.f32 %v141, %v144
  %vm146 = vweird.f32 %v139
  %vm147 = vweird.f32 %v141
  %vm148 = vmor %vm146, %vm147
  %v149 = vsel %vm148, %v141, %v145
  %v150 = vand.u32 2147483647, %v139
  %vm151 = vcmp.eq.f32.partialorder %v150, 8.507059e+37
  %v152 = vand.u32 %v139, 2147483648
  %v153 = vor.u32 1.1754944e-38, %v152
  %v154 = vsel %vm151, %v153, %v149
  %v155 = vmul.f32 1.0, %v154
  %v156 = vrcp.pop %v140
  %v157 = vmul.f32 %v140, %v156
  %v158 = vsub.f32 1.0, %v157
  %v159 = vmul.f32 %v156, %v158
  %v160 = vadd.f32 %v156, %v159
  %vm161 = vweird.f32 %v140
  %vm162 = vweird.f32 %v156
  %vm163 = vmor %vm161, %vm162
  %v164 = vsel %vm163, %v156, %v160
  %v165 = vand.u32 2147483647, %v140
  %vm166 = vcmp.eq.f32.partialorder %v165, 8.507059e+37
  %v167 = vand.u32 %v140, 2147483648
  %v168 = vor.u32 1.1754944e-38, %v167
  %v169 = vsel %vm166, %v168, %v164
  %v170 = vmul.f32 1.0, %v169
  %v171 = vmul.f32 %v127, %v155
  %v172 = vmul.f32 %v129, %v170
  %v173 = vpack.c.bf16 %v172, %v171
  %v174 = vld [vmem:[%s5] sm:$0xf]
  %v175 = vld [vmem:[%s5 + $0x4] sm:$0xf]
  %v176 = vld [vmem:[%s5 + $0x8] sm:$0xf]
  %v177 = vld [vmem:[%s5 + $0xc] sm:$0xf]
  %v178 = vld [vmem:[%s5 + $0x10] sm:$0xf]
  %v179 = vld [vmem:[%s5 + $0x14] sm:$0xf]
  %v180 = vld [vmem:[%s5 + $0x18] sm:$0xf]
  %v181 = vld [vmem:[%s5 + $0x1c] sm:$0xf]
  %v182 = vld [vmem:[%s5 + $0x20] sm:$0xf]
  %v183 = vld [vmem:[%s5 + $0x24] sm:$0xf]
  %v184 = vld [vmem:[%s5 + $0x28] sm:$0xf]
  %v185 = vld [vmem:[%s5 + $0x2c] sm:$0xf]
  %v186 = vld [vmem:[%s5 + $0x30] sm:$0xf]
  %v187 = vld [vmem:[%s5 + $0x34] sm:$0xf]
  %v188 = vld [vmem:[%s5 + $0x38] sm:$0xf]
  %v189 = vld [vmem:[%s5 + $0x3c] sm:$0xf]
  %v190 = vld [vmem:[%s6] sm:$0x1]
  %v192 = vperm.slane %v190, 0
  %v210 = vunpack.c.l.b16 %v174
  %v211 = vunpack.c.l.b16 %v175
  %v212 = vunpack.c.l.b16 %v176
  %v213 = vunpack.c.l.b16 %v177
  %v214 = vunpack.c.l.b16 %v178
  %v215 = vunpack.c.l.b16 %v179
  %v216 = vunpack.c.l.b16 %v180
  %v217 = vunpack.c.l.b16 %v181
  %v218 = vunpack.c.l.b16 %v182
  %v219 = vunpack.c.l.b16 %v183
  %v220 = vunpack.c.l.b16 %v184
  %v221 = vunpack.c.l.b16 %v185
  %v222 = vunpack.c.l.b16 %v186
  %v223 = vunpack.c.l.b16 %v187
  %v224 = vunpack.c.l.b16 %v188
  %v225 = vunpack.c.l.b16 %v189
  %v226 = vpack.c.b16 %v211, %v210
  %v227 = vpack.c.b16 %v213, %v212
  %v228 = vpack.c.b16 %v215, %v214
  %v229 = vpack.c.b16 %v217, %v216
  %v230 = vpack.c.b16 %v219, %v218
  %v231 = vpack.c.b16 %v221, %v220
  %v232 = vpack.c.b16 %v223, %v222
  %v233 = vpack.c.b16 %v225, %v224
  %242 = vmatpush.bf16.msra.mxu0 %v233
  %243 = vmatpush.bf16.msra.mxu0 %v232
  %244 = vmatpush.bf16.msra.mxu0 %v231
  %245 = vmatpush.bf16.msra.mxu0 %v230
  %246 = vmatpush.bf16.msra.mxu0 %v229
  %247 = vmatpush.bf16.msra.mxu0 %v228
  %248 = vmatpush.bf16.msra.mxu0 %v227
  %249 = vmatpush.bf16.msra.mxu0 %v226
  %250 = vmatmul.bf16.gmra.mxu0 %v173
  %v251 = vpop.f32.mrf.mxu0
  %v252 = vadd.f32 %v192, %v251
  %v253 = vpop.f32.mrf.mxu0
  %v254 = vadd.f32 %v192, %v253
  %255 = vdwg.mxu0
  %v256 = vadd.f32 %v27, %v252
  %v257 = vadd.f32 %v28, %v254
  %258 = vst.msk [vmem:[%s7] sm:$0xff] %vm31, %v256
  %259 = vst.msk [vmem:[%s7 + $0x8] sm:$0xff] %vm31, %v257
  // Predicated region
  $region30: #{transformer_forward.8} parent=0 // pred_check
    _
  $region31: #{transformer_forward.8} parent=0 // pred_check_branch
    %261 = sbr.rel (0) target = $region33
  $region32: #{transformer_forward.8} parent=0 // pred_region
    _
  $region33: #{transformer_forward.8} parent=0 // pred_fallthru
    _
  // Predicated region
  $region34: #{transformer_forward.8} parent=0 // pred_check
    _
  $region35: #{transformer_forward.8} parent=0 // pred_check_branch
    %263 = sbr.rel (0) target = $region37
  $region36: #{transformer_forward.8} parent=0 // pred_region
    _
  $region37: #{transformer_forward.8} parent=0 // pred_fallthru
    _

// kernel: transformer_forward.6
$region0: #{transformer_forward.6}
  #allocation0 [shape = 'u32[]', space=smem, size = 0x4, offset = 0x4, fixed_abs, tag = 'smem constant byte address 0x4 - core index']
  #allocation1 [shape = 'u32[72,128]{1,0:T(1,128)}', space=vmem, size = 0x9000, scoped, tag = 'internal scratch']
  %s0 = inlined_call_operand.vmem [shape: f32[16,32], index: 0, kind: input, shape index: {}]
  %s1 = inlined_call_operand.vmem [shape: f32[1,32], index: 1, kind: input, shape index: {}]
  %s2 = inlined_call_operand.vmem [shape: f32[1,32], index: 2, kind: input, shape index: {}]
  %s3 = inlined_call_operand.vmem [shape: bf16[32,96], index: 3, kind: input, shape index: {}]
  %s4 = inlined_call_operand.vmem [shape: f32[1,96], index: 4, kind: input, shape index: {}]
  %s5 = inlined_call_operand.vmem [shape: bf16[16,32], index: 5, kind: output, shape index: {0}]
  %s6 = inlined_call_operand.vmem [shape: bf16[16,32], index: 6, kind: output, shape index: {1}]
  %s7 = inlined_call_operand.vmem [shape: bf16[16,32], index: 7, kind: output, shape index: {2}]
  %8 = xla_tuple %s5, %s6, %s7
  %s9 = sld [smem:[#allocation0]]
  $region46: #{transformer_forward.6} parent=0
    _
  %s11 = ssub.s32 1, %s9
  %s12 = scalar_select 0, %s11, %s9
  // Predicated region
  $region2: #{transformer_forward.6} parent=0 // pred_check
    _
  $region3: #{transformer_forward.6} parent=0 // pred_check_branch
    %14 = sbr.rel (0) target = $region5
  $region4: #{transformer_forward.6} parent=0 // pred_region
    _
  $region5: #{transformer_forward.6} parent=0 // pred_fallthru
    _
  // Predicated region
  $region6: #{transformer_forward.6} parent=0 // pred_check
    _
  $region7: #{transformer_forward.6} parent=0 // pred_check_branch
    %16 = sbr.rel (0) target = $region9
  $region8: #{transformer_forward.6} parent=0 // pred_region
    _
  $region9: #{transformer_forward.6} parent=0 // pred_fallthru
    _
  // Predicated region
  $region10: #{transformer_forward.6} parent=0 // pred_check
    _
  $region11: #{transformer_forward.6} parent=0 // pred_check_branch
    %18 = sbr.rel (0) target = $region13
  $region12: #{transformer_forward.6} parent=0 // pred_region
    _
  $region13: #{transformer_forward.6} parent=0 // pred_fallthru
    _
  // Predicated region
  $region14: #{transformer_forward.6} parent=0 // pred_check
    _
  $region15: #{transformer_forward.6} parent=0 // pred_check_branch
    %20 = sbr.rel (0) target = $region17
  $region16: #{transformer_forward.6} parent=0 // pred_region
    _
  $region17: #{transformer_forward.6} parent=0 // pred_fallthru
    _
  // Predicated region
  $region18: #{transformer_forward.6} parent=0 // pred_check
    _
  $region19: #{transformer_forward.6} parent=0 // pred_check_branch
    %22 = sbr.rel (0) target = $region21
  $region20: #{transformer_forward.6} parent=0 // pred_region
    _
  $region21: #{transformer_forward.6} parent=0 // pred_fallthru
    _
  %v24 = vld [vmem:[%s0] sm:$0xff]
  %v25 = vld [vmem:[%s0 + $0x8] sm:$0xff]
  %v26 = vld [vmem:[%s1] sm:$0x1]
  %v27 = vld [vmem:[%s2] sm:$0x1]
  %vm28 = vcmask 261120
  %v29 = vsel %vm28, %v24, 0.0
  %30 = vadd.xlane.f32.xlu0 %v29
  %v31 = vpop.xlane.xlu0 %30
  %v32 = vsel %vm28, %v25, 0.0
  %33 = vadd.xlane.f32.xlu0 %v32
  %v34 = vpop.xlane.xlu0 %33
  %v35 = vrcp.pop 32.0
  %v36 = vmul.f32 32.0, %v35
  %v37 = vsub.f32 1.0, %v36
  %v38 = vmul.f32 %v35, %v37
  %v39 = vadd.f32 %v35, %v38
  %vm40 = vweird.f32 %v35
  %v41 = vsel %vm40, %v35, %v39
  %v42 = vmul.f32 %v31, %v41
  %v43 = vmul.f32 %v34, %v41
  %v44 = vsub.f32 %v24, %v42
  %v45 = vsub.f32 %v25, %v43
  %v46 = vmul.f32 %v44, %v44
  %v47 = vmul.f32 %v45, %v45
  %v48 = vsel %vm28, %v46, 0.0
  %49 = vadd.xlane.f32.xlu0 %v48
  %v50 = vpop.xlane.xlu0 %49
  %v51 = vsel %vm28, %v47, 0.0
  %52 = vadd.xlane.f32.xlu0 %v51
  %v53 = vpop.xlane.xlu0 %52
  %v54 = vmul.f32 %v50, %v41
  %v55 = vmul.f32 %v53, %v41
  %v56 = vadd.f32 %v54, 1e-05
  %v57 = vadd.f32 %v55, 1e-05
  %v58 = vrsqrt.pop %v56
  %v59 = vmul.f32 %v58, %v56
  %v60 = vmul.f32 %v59, %v58
  %v61 = vmul.f32 0.5, %v60
  %v62 = vsub.f32 1.5, %v61
  %v63 = vmul.f32 %v58, %v62
  %vm64 = vweird.f32 %v56
  %vm65 = vweird.f32 %v58
  %vm66 = vmor %vm64, %vm65
  %v67 = vsel %vm66, %v58, %v63
  %v68 = vrsqrt.pop %v57
  %v69 = vmul.f32 %v68, %v57
  %v70 = vmul.f32 %v69, %v68
  %v71 = vmul.f32 0.5, %v70
  %v72 = vsub.f32 1.5, %v71
  %v73 = vmul.f32 %v68, %v72
  %vm74 = vweird.f32 %v57
  %vm75 = vweird.f32 %v68
  %vm76 = vmor %vm74, %vm75
  %v77 = vsel %vm76, %v68, %v73
  %v78 = vmul.f32 %v44, %v67
  %v79 = vmul.f32 %v45, %v77
  %v81 = vperm.slane %v26, 0
  %v83 = vmul.f32 %v78, %v81
  %v84 = vmul.f32 %v79, %v81
  %v86 = vperm.slane %v27, 0
  %v88 = vadd.f32 %v83, %v86
  %v89 = vadd.f32 %v84, %v86
  %v90 = vpack.c.bf16 %v89, %v88
  %v91 = vld [vmem:[%s3] sm:$0xf]
  %v92 = vld [vmem:[%s3 + $0x4] sm:$0xf]
  %v93 = vld [vmem:[%s3 + $0x8] sm:$0xf]
  %v94 = vld [vmem:[%s3 + $0xc] sm:$0xf]
  %v95 = vld [vmem:[%s4] sm:$0x1]
  %v97 = vperm.slane %v95, 0
  %v103 = vunpack.c.l.b16 %v91
  %v104 = vunpack.c.l.b16 %v92
  %v105 = vunpack.c.l.b16 %v93
  %v106 = vunpack.c.l.b16 %v94
  %v107 = vpack.c.b16 %v104, %v103
  %v108 = vpack.c.b16 %v106, %v105
  %v112 = vsel %vm28, %v90, 0
  %114 = vmatpush.bf16.msra.mxu0 0
  %115 = vmatpush.bf16.msra.mxu0 0
  %116 = vmatpush.bf16.msra.mxu0 0
  %117 = vmatpush.bf16.msra.mxu0 0
  %118 = vmatpush.bf16.msra.mxu0 0
  %119 = vmatpush.bf16.msra.mxu0 0
  %120 = vmatpush.bf16.msra.mxu0 %v108
  %121 = vmatpush.bf16.msra.mxu0 %v107
  %122 = vmatmul.bf16.gmra.mxu0 %v112
  %v123 = vpop.f32.mrf.mxu0
  %v124 = vadd.f32 %v97, %v123
  %v125 = vpop.f32.mrf.mxu0
  %v126 = vadd.f32 %v97, %v125
  %127 = vdwg.mxu0
  %v128 = vmul.f32 %v124, 0.35355338
  %v129 = vmul.f32 %v126, 0.35355338
  %v130 = vpack.c.bf16 %v128, %v128
  %v131 = vpack.c.bf16 %v129, %v129
  %vm132 = vcmask 257024
  %133 = vst.msk [vmem:[%s5] sm:$0xf] %vm132, %v130
  %134 = vst.msk [vmem:[%s5 + $0x4] sm:$0xf] %vm132, %v131
  %v135 = vpack.c.bf16 %v124, %v124
  %v136 = vpack.c.bf16 %v126, %v126
  %139 = vrot.lane.b32.xlu0 %v135, 96
  %v140 = vpop.permute.xlu0 %139
  %141 = vrot.lane.b32.xlu0 %v136, 96
  %v142 = vpop.permute.xlu0 %141
  %145 = vst.msk [vmem:[%s6] sm:$0xf] %vm132, %v140
  %146 = vst.msk [vmem:[%s6 + $0x4] sm:$0xf] %vm132, %v142
  %147 = vrot.lane.b32.xlu0 %v135, 64
  %v148 = vpop.permute.xlu0 %147
  %149 = vrot.lane.b32.xlu0 %v136, 64
  %v150 = vpop.permute.xlu0 %149
  %153 = vst.msk [vmem:[%s7] sm:$0xf] %vm132, %v148
  %154 = vst.msk [vmem:[%s7 + $0x4] sm:$0xf] %vm132, %v150
  // Predicated region
  $region22: #{transformer_forward.6} parent=0 // pred_check
    _
  $region23: #{transformer_forward.6} parent=0 // pred_check_branch
    %156 = sbr.rel (0) target = $region25
  $region24: #{transformer_forward.6} parent=0 // pred_region
    _
  $region25: #{transformer_forward.6} parent=0 // pred_fallthru
    _
  // Predicated region
  $region26: #{transformer_forward.6} parent=0 // pred_check
    _
  $region27: #{transformer_forward.6} parent=0 // pred_check_branch
    %158 = sbr.rel (0) target = $region29
  $region28: #{transformer_forward.6} parent=0 // pred_region
    _
  $region29: #{transformer_forward.6} parent=0 // pred_fallthru
    _
  // Predicated region
  $region30: #{transformer_forward.6} parent=0 // pred_check
    _
  $region31: #{transformer_forward.6} parent=0 // pred_check_branch
    %160 = sbr.rel (0) target = $region33
  $region32: #{transformer_forward.6} parent=0 // pred_region
    _
  $region33: #{transformer_forward.6} parent=0 // pred_fallthru
    _
  // Predicated region
  $region34: #{transformer_forward.6} parent=0 // pred_check
    _
  $region35: #{transformer_forward.6} parent=0 // pred_check_branch
    %162 = sbr.rel (0) target = $region37
  $region36: #{transformer_forward.6} parent=0 // pred_region
    _
  $region37: #{transformer_forward.6} parent=0 // pred_fallthru
    _
  // Predicated region
  $region38: #{transformer_forward.6} parent=0 // pred_check
    _
  $region39: #{transformer_forward.6} parent=0 // pred_check_branch
    %164 = sbr.rel (0) target = $region41
  $region40: #{transformer_forward.6} parent=0 // pred_region
    _
  $region41: #{transformer_forward.6} parent=0 // pred_fallthru
    _
  // Predicated region
  $region42: #{transformer_forward.6} parent=0 // pred_check
    _
  $region43: #{transformer_forward.6} parent=0 // pred_check_branch
    %166 = sbr.rel (0) target = $region45
  $region44: #{transformer_forward.6} parent=0 // pred_region
    _
  $region45: #{transformer_forward.6} parent=0 // pred_fallthru
    _

// kernel: transformer_forward.8
$region0: #{transformer_forward.8}
  #allocation0 [shape = 'u32[]', space=smem, size = 0x4, offset = 0x4, fixed_abs, tag = 'smem constant byte address 0x4 - core index']
  #allocation1 [shape = 'u32[72,128]{1,0:T(1,128)}', space=vmem, size = 0x9000, scoped, tag = 'internal scratch']
  %s0 = inlined_call_operand.vmem [shape: f32[16,32], index: 0, kind: input, shape index: {}, may-alias: {0,7}]
  %s1 = inlined_call_operand.vmem [shape: f32[1,32], index: 1, kind: input, shape index: {}]
  %s2 = inlined_call_operand.vmem [shape: f32[1,32], index: 2, kind: input, shape index: {}]
  %s3 = inlined_call_operand.vmem [shape: bf16[32,128], index: 3, kind: input, shape index: {}]
  %s4 = inlined_call_operand.vmem [shape: f32[1,128], index: 4, kind: input, shape index: {}]
  %s5 = inlined_call_operand.vmem [shape: bf16[128,32], index: 5, kind: input, shape index: {}]
  %s6 = inlined_call_operand.vmem [shape: f32[1,32], index: 6, kind: input, shape index: {}]
  %s7 = inlined_call_operand.vmem [shape: f32[16,32], index: 7, kind: output, shape index: {}, may-alias: {0,7}]
  %s8 = sld [smem:[#allocation0]]
  $region38: #{transformer_forward.8} parent=0
    _
  %s10 = ssub.s32 1, %s8
  %s11 = scalar_select 0, %s10, %s8
  // Predicated region
  $region2: #{transformer_forward.8} parent=0 // pred_check
    _
  $region3: #{transformer_forward.8} parent=0 // pred_check_branch
    %13 = sbr.rel (0) target = $region5
  $region4: #{transformer_forward.8} parent=0 // pred_region
    _
  $region5: #{transformer_forward.8} parent=0 // pred_fallthru
    _
  // Predicated region
  $region6: #{transformer_forward.8} parent=0 // pred_check
    _
  $region7: #{transformer_forward.8} parent=0 // pred_check_branch
    %15 = sbr.rel (0) target = $region9
  $region8: #{transformer_forward.8} parent=0 // pred_region
    _
  $region9: #{transformer_forward.8} parent=0 // pred_fallthru
    _
  // Predicated region
  $region10: #{transformer_forward.8} parent=0 // pred_check
    _
  $region11: #{transformer_forward.8} parent=0 // pred_check_branch
    %17 = sbr.rel (0) target = $region13
  $region12: #{transformer_forward.8} parent=0 // pred_region
    _
  $region13: #{transformer_forward.8} parent=0 // pred_fallthru
    _
  // Predicated region
  $region14: #{transformer_forward.8} parent=0 // pred_check
    _
  $region15: #{transformer_forward.8} parent=0 // pred_check_branch
    %19 = sbr.rel (0) target = $region17
  $region16: #{transformer_forward.8} parent=0 // pred_region
    _
  $region17: #{transformer_forward.8} parent=0 // pred_fallthru
    _
  // Predicated region
  $region18: #{transformer_forward.8} parent=0 // pred_check
    _
  $region19: #{transformer_forward.8} parent=0 // pred_check_branch
    %21 = sbr.rel (0) target = $region21
  $region20: #{transformer_forward.8} parent=0 // pred_region
    _
  $region21: #{transformer_forward.8} parent=0 // pred_fallthru
    _
  // Predicated region
  $region22: #{transformer_forward.8} parent=0 // pred_check
    _
  $region23: #{transformer_forward.8} parent=0 // pred_check_branch
    %23 = sbr.rel (0) target = $region25
  $region24: #{transformer_forward.8} parent=0 // pred_region
    _
  $region25: #{transformer_forward.8} parent=0 // pred_fallthru
    _
  // Predicated region
  $region26: #{transformer_forward.8} parent=0 // pred_check
    _
  $region27: #{transformer_forward.8} parent=0 // pred_check_branch
    %25 = sbr.rel (0) target = $region29
  $region28: #{transformer_forward.8} parent=0 // pred_region
    _
  $region29: #{transformer_forward.8} parent=0 // pred_fallthru
    _
  %v27 = vld [vmem:[%s0] sm:$0xff]
  %v28 = vld [vmem:[%s0 + $0x8] sm:$0xff]
  %v29 = vld [vmem:[%s1] sm:$0x1]
  %v30 = vld [vmem:[%s2] sm:$0x1]
  %vm31 = vcmask 261120
  %v32 = vsel %vm31, %v27, 0.0
  %33 = vadd.xlane.f32.xlu0 %v32
  %v34 = vpop.xlane.xlu0 %33
  %v35 = vsel %vm31, %v28, 0.0
  %36 = vadd.xlane.f32.xlu0 %v35
  %v37 = vpop.xlane.xlu0 %36
  %v38 = vrcp.pop 32.0
  %v39 = vmul.f32 32.0, %v38
  %v40 = vsub.f32 1.0, %v39
  %v41 = vmul.f32 %v38, %v40
  %v42 = vadd.f32 %v38, %v41
  %vm43 = vweird.f32 %v38
  %v44 = vsel %vm43, %v38, %v42
  %v45 = vmul.f32 %v34, %v44
  %v46 = vmul.f32 %v37, %v44
  %v47 = vsub.f32 %v27, %v45
  %v48 = vsub.f32 %v28, %v46
  %v49 = vmul.f32 %v47, %v47
  %v50 = vmul.f32 %v48, %v48
  %v51 = vsel %vm31, %v49, 0.0
  %52 = vadd.xlane.f32.xlu0 %v51
  %v53 = vpop.xlane.xlu0 %52
  %v54 = vsel %vm31, %v50, 0.0
  %55 = vadd.xlane.f32.xlu0 %v54
  %v56 = vpop.xlane.xlu0 %55
  %v57 = vmul.f32 %v53, %v44
  %v58 = vmul.f32 %v56, %v44
  %v59 = vadd.f32 %v57, 1e-05
  %v60 = vadd.f32 %v58, 1e-05
  %v61 = vrsqrt.pop %v59
  %v62 = vmul.f32 %v61, %v59
  %v63 = vmul.f32 %v62, %v61
  %v64 = vmul.f32 0.5, %v63
  %v65 = vsub.f32 1.5, %v64
  %v66 = vmul.f32 %v61, %v65
  %vm67 = vweird.f32 %v59
  %vm68 = vweird.f32 %v61
  %vm69 = vmor %vm67, %vm68
  %v70 = vsel %vm69, %v61, %v66
  %v71 = vrsqrt.pop %v60
  %v72 = vmul.f32 %v71, %v60
  %v73 = vmul.f32 %v72, %v71
  %v74 = vmul.f32 0.5, %v73
  %v75 = vsub.f32 1.5, %v74
  %v76 = vmul.f32 %v71, %v75
  %vm77 = vweird.f32 %v60
  %vm78 = vweird.f32 %v71
  %vm79 = vmor %vm77, %vm78
  %v80 = vsel %vm79, %v71, %v76
  %v81 = vmul.f32 %v47, %v70
  %v82 = vmul.f32 %v48, %v80
  %v84 = vperm.slane %v29, 0
  %v86 = vmul.f32 %v81, %v84
  %v87 = vmul.f32 %v82, %v84
  %v89 = vperm.slane %v30, 0
  %v91 = vadd.f32 %v86, %v89
  %v92 = vadd.f32 %v87, %v89
  %v93 = vpack.c.bf16 %v92, %v91
  %v94 = vld [vmem:[%s3] sm:$0xf]
  %v95 = vld [vmem:[%s3 + $0x4] sm:$0xf]
  %v96 = vld [vmem:[%s3 + $0x8] sm:$0xf]
  %v97 = vld [vmem:[%s3 + $0xc] sm:$0xf]
  %v98 = vld [vmem:[%s4] sm:$0x1]
  %v100 = vperm.slane %v98, 0
  %v106 = vunpack.c.l.b16 %v94
  %v107 = vunpack.c.l.b16 %v95
  %v108 = vunpack.c.l.b16 %v96
  %v109 = vunpack.c.l.b16 %v97
  %v110 = vpack.c.b16 %v107, %v106
  %v111 = vpack.c.b16 %v109, %v108
  %v115 = vsel %vm31, %v93, 0
  %117 = vmatpush.bf16.msra.mxu0 0
  %118 = vmatpush.bf16.msra.mxu0 0
  %119 = vmatpush.bf16.msra.mxu0 0
  %120 = vmatpush.bf16.msra.mxu0 0
  %121 = vmatpush.bf16.msra.mxu0 0
  %122 = vmatpush.bf16.msra.mxu0 0
  %123 = vmatpush.bf16.msra.mxu0 %v111
  %124 = vmatpush.bf16.msra.mxu0 %v110
  %125 = vmatmul.bf16.gmra.mxu0 %v115
  %v126 = vpop.f32.mrf.mxu0
  %v127 = vadd.f32 %v100, %v126
  %v128 = vpop.f32.mrf.mxu0
  %v129 = vadd.f32 %v100, %v128
  %130 = vdwg.mxu0
  %v131 = vmul.f32 %v127, 1.702
  %v132 = vmul.f32 %v129, 1.702
  %v133 = vxor.u32 %v131, 2147483648
  %v134 = vxor.u32 %v132, 2147483648
  %v135 = vmul.f32 %v133, 1.442695
  %v136 = vpow.pop %v135
  %v137 = vmul.f32 %v134, 1.442695
  %v138 = vpow.pop %v137
  %v139 = vadd.f32 %v136, 1.0
  %v140 = vadd.f32 %v138, 1.0
  %v141 = vrcp.pop %v139
  %v142 = vmul.f32 %v139, %v141
  %v143 = vsub.f32 1.0, %v142
  %v144 = vmul.f32 %v141, %v143
  %v145 = vadd.f32 %v141, %v144
  %vm146 = vweird.f32 %v139
  %vm147 = vweird.f32 %v141
  %vm148 = vmor %vm146, %vm147
  %v149 = vsel %vm148, %v141, %v145
  %v150 = vand.u32 2147483647, %v139
  %vm151 = vcmp.eq.f32.partialorder %v150, 8.507059e+37
  %v152 = vand.u32 %v139, 2147483648
  %v153 = vor.u32 1.1754944e-38, %v152
  %v154 = vsel %vm151, %v153, %v149
  %v155 = vmul.f32 1.0, %v154
  %v156 = vrcp.pop %v140
  %v157 = vmul.f32 %v140, %v156
  %v158 = vsub.f32 1.0, %v157
  %v159 = vmul.f32 %v156, %v158
  %v160 = vadd.f32 %v156, %v159
  %vm161 = vweird.f32 %v140
  %vm162 = vweird.f32 %v156
  %vm163 = vmor %vm161, %vm162
  %v164 = vsel %vm163, %v156, %v160
  %v165 = vand.u32 2147483647, %v140
  %vm166 = vcmp.eq.f32.partialorder %v165, 8.507059e+37
  %v167 = vand.u32 %v140, 2147483648
  %v168 = vor.u32 1.1754944e-38, %v167
  %v169 = vsel %vm166, %v168, %v164
  %v170 = vmul.f32 1.0, %v169
  %v171 = vmul.f32 %v127, %v155
  %v172 = vmul.f32 %v129, %v170
  %v173 = vpack.c.bf16 %v172, %v171
  %v174 = vld [vmem:[%s5] sm:$0xf]
  %v175 = vld [vmem:[%s5 + $0x4] sm:$0xf]
  %v176 = vld [vmem:[%s5 + $0x8] sm:$0xf]
  %v177 = vld [vmem:[%s5 + $0xc] sm:$0xf]
  %v178 = vld [vmem:[%s5 + $0x10] sm:$0xf]
  %v179 = vld [vmem:[%s5 + $0x14] sm:$0xf]
  %v180 = vld [vmem:[%s5 + $0x18] sm:$0xf]
  %v181 = vld [vmem:[%s5 + $0x1c] sm:$0xf]
  %v182 = vld [vmem:[%s5 + $0x20] sm:$0xf]
  %v183 = vld [vmem:[%s5 + $0x24] sm:$0xf]
  %v184 = vld [vmem:[%s5 + $0x28] sm:$0xf]
  %v185 = vld [vmem:[%s5 + $0x2c] sm:$0xf]
  %v186 = vld [vmem:[%s5 + $0x30] sm:$0xf]
  %v187 = vld [vmem:[%s5 + $0x34] sm:$0xf]
  %v188 = vld [vmem:[%s5 + $0x38] sm:$0xf]
  %v189 = vld [vmem:[%s5 + $0x3c] sm:$0xf]
  %v190 = vld [vmem:[%s6] sm:$0x1]
  %v192 = vperm.slane %v190, 0
  %v210 = vunpack.c.l.b16 %v174
  %v211 = vunpack.c.l.b16 %v175
  %v212 = vunpack.c.l.b16 %v176
  %v213 = vunpack.c.l.b16 %v177
  %v214 = vunpack.c.l.b16 %v178
  %v215 = vunpack.c.l.b16 %v179
  %v216 = vunpack.c.l.b16 %v180
  %v217 = vunpack.c.l.b16 %v181
  %v218 = vunpack.c.l.b16 %v182
  %v219 = vunpack.c.l.b16 %v183
  %v220 = vunpack.c.l.b16 %v184
  %v221 = vunpack.c.l.b16 %v185
  %v222 = vunpack.c.l.b16 %v186
  %v223 = vunpack.c.l.b16 %v187
  %v224 = vunpack.c.l.b16 %v188
  %v225 = vunpack.c.l.b16 %v189
  %v226 = vpack.c.b16 %v211, %v210
  %v227 = vpack.c.b16 %v213, %v212
  %v228 = vpack.c.b16 %v215, %v214
  %v229 = vpack.c.b16 %v217, %v216
  %v230 = vpack.c.b16 %v219, %v218
  %v231 = vpack.c.b16 %v221, %v220
  %v232 = vpack.c.b16 %v223, %v222
  %v233 = vpack.c.b16 %v225, %v224
  %242 = vmatpush.bf16.msra.mxu0 %v233
  %243 = vmatpush.bf16.msra.mxu0 %v232
  %244 = vmatpush.bf16.msra.mxu0 %v231
  %245 = vmatpush.bf16.msra.mxu0 %v230
  %246 = vmatpush.bf16.msra.mxu0 %v229
  %247 = vmatpush.bf16.msra.mxu0 %v228
  %248 = vmatpush.bf16.msra.mxu0 %v227
  %249 = vmatpush.bf16.msra.mxu0 %v226
  %250 = vmatmul.bf16.gmra.mxu0 %v173
  %v251 = vpop.f32.mrf.mxu0
  %v252 = vadd.f32 %v192, %v251
  %v253 = vpop.f32.mrf.mxu0
  %v254 = vadd.f32 %v192, %v253
  %255 = vdwg.mxu0
  %v256 = vadd.f32 %v27, %v252
  %v257 = vadd.f32 %v28, %v254
  %258 = vst.msk [vmem:[%s7] sm:$0xff] %vm31, %v256
  %259 = vst.msk [vmem:[%s7 + $0x8] sm:$0xff] %vm31, %v257
  // Predicated region
  $region30: #{transformer_forward.8} parent=0 // pred_check
    _
  $region31: #{transformer_forward.8} parent=0 // pred_check_branch
    %261 = sbr.rel (0) target = $region33
  $region32: #{transformer_forward.8} parent=0 // pred_region
    _
  $region33: #{transformer_forward.8} parent=0 // pred_fallthru
    _
  // Predicated region
  $region34: #{transformer_forward.8} parent=0 // pred_check
    _
  $region35: #{transformer_forward.8} parent=0 // pred_check_branch
    %263 = sbr.rel (0) target = $region37
  $region36: #{transformer_forward.8} parent=0 // pred_region
    _
  $region37: #{transformer_forward.8} parent=0 // pred_fallthru
    _

// kernel: transformer_forward.7
$region0: #{transformer_forward.7}
  #allocation0 [shape = 'u32[]', space=smem, size = 0x4, offset = 0x4, fixed_abs, tag = 'smem constant byte address 0x4 - core index']
  #allocation1 [shape = 'u32[72,128]{1,0:T(1,128)}', space=vmem, size = 0x9000, scoped, tag = 'internal scratch']
  %s0 = inlined_call_operand.vmem [shape: f32[2,8,32], index: 0, kind: input, shape index: {}, may-alias: {0,6}]
  %s1 = inlined_call_operand.vmem [shape: bf16[2,8,32], index: 1, kind: input, shape index: {}]
  %s2 = inlined_call_operand.vmem [shape: bf16[2,8,32], index: 2, kind: input, shape index: {}]
  %s3 = inlined_call_operand.vmem [shape: bf16[2,8,32], index: 3, kind: input, shape index: {}]
  %s4 = inlined_call_operand.vmem [shape: bf16[32,32], index: 4, kind: input, shape index: {}]
  %s5 = inlined_call_operand.vmem [shape: f32[1,32], index: 5, kind: input, shape index: {}]
  %s6 = inlined_call_operand.vmem [shape: f32[2,8,32], index: 6, kind: output, shape index: {}, may-alias: {0,6}]
  %s7 = sld [smem:[#allocation0]]
  $region57: #{transformer_forward.7} parent=0
    _
  %s9 = ssub.s32 1, %s7
  %s10 = scalar_select 0, %s9, %s7
  loop: start=0, step=1, limit=4
  $region2: #{transformer_forward.7} parent=0 // loop_pre_header
    _
  $region3: #{transformer_forward.7} parent=0 // loop_header
    %s12 = sphi 0, %s16
    %p13 = scmp.ge.s32.totalorder %s12, 4
    %s19 = sphi 0, %s31
    %s20 = sphi 0, %s27
    %s21 = sphi 0, %s19
    %s22 = sphi 0, %s20
    %s23 = sphi 0, %s21
    %s24 = sphi 0, %s22
    %s36 = sphi 0, %s38
    %s39 = sphi 0, %s36
    %s40 = sphi 0, %s39
    %s56 = sphi 0, %s40
    %s64 = sphi 0, %s66
    %s67 = sphi 0, %s64
    %s68 = sphi 0, %s67
    %s84 = sphi 0, %s68
    %s90 = sphi 0, %s92
    %s93 = sphi 0, %s90
    %s94 = sphi 0, %s93
    %s110 = sphi 0, %s94
    %s116 = sphi 0, %s118
    %s119 = sphi 0, %s116
    %s120 = sphi 0, %s119
    %s136 = sphi 0, %s120
    %s140 = sphi 0, %s140
    %s142 = sphi 0, %s140
    %s143 = sphi 0, %s142
    %s157 = sphi 0, %s143
    %s161 = sphi 0, %s161
    %s163 = sphi 0, %s161
    %s164 = sphi 0, %s163
    %s178 = sphi 0, %s164
    %s186 = sphi 0, %s188
    %s189 = sphi 0, %s186
    %s190 = sphi 0, %s189
    %s206 = sphi 0, %s190
  $region4: #{transformer_forward.7} parent=0 // loop_header_branch
    %15 = sbr.rel (%p13) target = $region8
  $region5: #{transformer_forward.7} parent=0 // loop_body
    %s17 = ssub.s32 %s12, 1
    %s18 = ssub.s32 %s12, 2
    %s25 = sadd.s32 1, %s20
    %p26 = scmp.ge.s32.totalorder %s25, 1
    %s27 = scalar_select %p26, 0, %s25
    %s28 = sadd.s32 1, %s19
    %s29 = scalar_select %p26, %s28, %s19
    %p30 = scmp.ge.s32.totalorder %s29, 2
    %s31 = scalar_select %p30, 0, %s29
    %s32 = ssub.s32 %s19, %s31
    %s33 = ssub.s32 %s20, %s27
    %s34 = sor.u32 %s32, %s33
    %p35 = scmp.eq.s32.totalorder %s34, 0
    %s37 = sadd.s32 %s36, 1
    %s38 = scalar_select %p35, %s36, %s37
    %p41 = pneg %p35
    %p42 = scmp.eq.s32.totalorder %s12, 1
    %p43 = por %p41, %p42
    %p44 = scmp.ne.s32.totalorder %s36, %s39
    %p45 = scmp.eq.s32.totalorder %s12, 0
    %p46 = por %p44, %p45
    %p47 = scmp.ne.s32.totalorder %s36, %s39
    %p48 = scmp.eq.s32.totalorder %s17, 1
    %p49 = por %p47, %p48
    %p50 = scmp.ne.s32.totalorder %s39, %s40
    %p51 = scmp.eq.s32.totalorder %s17, 0
    %p52 = por %p50, %p51
    %p53 = scmp.ne.s32.totalorder %s39, %s40
    %p54 = scmp.eq.s32.totalorder %s18, 1
    %p55 = por %p53, %p54
    %p57 = scmp.ne.s32.totalorder %s40, %s56
    %p58 = scmp.eq.s32.totalorder %s18, 0
    %p59 = por %p57, %p58
    %s60 = ssub.s32 %s19, %s31
    %s61 = ssub.s32 %s20, %s27
    %s62 = sor.u32 %s60, %s61
    %p63 = scmp.eq.s32.totalorder %s62, 0
    %s65 = sadd.s32 %s64, 1
    %s66 = scalar_select %p63, %s64, %s65
    %p69 = pneg %p63
    %p70 = scmp.eq.s32.totalorder %s12, 1
    %p71 = por %p69, %p70
    %p72 = scmp.ne.s32.totalorder %s64, %s67
    %p73 = scmp.eq.s32.totalorder %s12, 0
    %p74 = por %p72, %p73
    %p75 = scmp.ne.s32.totalorder %s64, %s67
    %p76 = scmp.eq.s32.totalorder %s17, 1
    %p77 = por %p75, %p76
    %p78 = scmp.ne.s32.totalorder %s67, %s68
    %p79 = scmp.eq.s32.totalorder %s17, 0
    %p80 = por %p78, %p79
    %p81 = scmp.ne.s32.totalorder %s67, %s68
    %p82 = scmp.eq.s32.totalorder %s18, 1
    %p83 = por %p81, %p82
    %p85 = scmp.ne.s32.totalorder %s68, %s84
    %p86 = scmp.eq.s32.totalorder %s18, 0
    %p87 = por %p85, %p86
    %s88 = ssub.s32 %s19, %s31
    %p89 = scmp.eq.s32.totalorder %s88, 0
    %s91 = sadd.s32 %s90, 1
    %s92 = scalar_select %p89, %s90, %s91
    %p95 = pneg %p89
    %p96 = scmp.eq.s32.totalorder %s12, 1
    %p97 = por %p95, %p96
    %p98 = scmp.ne.s32.totalorder %s90, %s93
    %p99 = scmp.eq.s32.totalorder %s12, 0
    %p100 = por %p98, %p99
    %p101 = scmp.ne.s32.totalorder %s90, %s93
    %p102 = scmp.eq.s32.totalorder %s17, 1
    %p103 = por %p101, %p102
    %p104 = scmp.ne.s32.totalorder %s93, %s94
    %p105 = scmp.eq.s32.totalorder %s17, 0
    %p106 = por %p104, %p105
    %p107 = scmp.ne.s32.totalorder %s93, %s94
    %p108 = scmp.eq.s32.totalorder %s18, 1
    %p109 = por %p107, %p108
    %p111 = scmp.ne.s32.totalorder %s94, %s110
    %p112 = scmp.eq.s32.totalorder %s18, 0
    %p113 = por %p111, %p112
    %s114 = ssub.s32 %s19, %s31
    %p115 = scmp.eq.s32.totalorder %s114, 0
    %s117 = sadd.s32 %s116, 1
    %s118 = scalar_select %p115, %s116, %s117
    %p121 = pneg %p115
    %p122 = scmp.eq.s32.totalorder %s12, 1
    %p123 = por %p121, %p122
    %p124 = scmp.ne.s32.totalorder %s116, %s119
    %p125 = scmp.eq.s32.totalorder %s12, 0
    %p126 = por %p124, %p125
    %p127 = scmp.ne.s32.totalorder %s116, %s119
    %p128 = scmp.eq.s32.totalorder %s17, 1
    %p129 = por %p127, %p128
    %p130 = scmp.ne.s32.totalorder %s119, %s120
    %p131 = scmp.eq.s32.totalorder %s17, 0
    %p132 = por %p130, %p131
    %p133 = scmp.ne.s32.totalorder %s119, %s120
    %p134 = scmp.eq.s32.totalorder %s18, 1
    %p135 = por %p133, %p134
    %p137 = scmp.ne.s32.totalorder %s120, %s136
    %p138 = scmp.eq.s32.totalorder %s18, 0
    %p139 = por %p137, %p138
    %s141 = sadd.s32 %s140, 1
    %p144 = scmp.eq.s32.totalorder %s12, 1
    %p145 = scmp.ne.s32.totalorder %s140, %s142
    %p146 = scmp.eq.s32.totalorder %s12, 0
    %p147 = por %p145, %p146
    %p148 = scmp.ne.s32.totalorder %s140, %s142
    %p149 = scmp.eq.s32.totalorder %s17, 1
    %p150 = por %p148, %p149
    %p151 = scmp.ne.s32.totalorder %s142, %s143
    %p152 = scmp.eq.s32.totalorder %s17, 0
    %p153 = por %p151, %p152
    %p154 = scmp.ne.s32.totalorder %s142, %s143
    %p155 = scmp.eq.s32.totalorder %s18, 1
    %p156 = por %p154, %p155
    %p158 = scmp.ne.s32.totalorder %s143, %s157
    %p159 = scmp.eq.s32.totalorder %s18, 0
    %p160 = por %p158, %p159
    %s162 = sadd.s32 %s161, 1
    %p165 = scmp.eq.s32.totalorder %s12, 1
    %p166 = scmp.ne.s32.totalorder %s161, %s163
    %p167 = scmp.eq.s32.totalorder %s12, 0
    %p168 = por %p166, %p167
    %p169 = scmp.ne.s32.totalorder %s161, %s163
    %p170 = scmp.eq.s32.totalorder %s17, 1
    %p171 = por %p169, %p170
    %p172 = scmp.ne.s32.totalorder %s163, %s164
    %p173 = scmp.eq.s32.totalorder %s17, 0
    %p174 = por %p172, %p173
    %p175 = scmp.ne.s32.totalorder %s163, %s164
    %p176 = scmp.eq.s32.totalorder %s18, 1
    %p177 = por %p175, %p176
    %p179 = scmp.ne.s32.totalorder %s164, %s178
    %p180 = scmp.eq.s32.totalorder %s18, 0
    %p181 = por %p179, %p180
    %s182 = ssub.s32 %s19, %s31
    %s183 = ssub.s32 %s20, %s27
    %s184 = sor.u32 %s182, %s183
    %p185 = scmp.eq.s32.totalorder %s184, 0
    %s187 = sadd.s32 %s186, 1
    %s188 = scalar_select %p185, %s186, %s187
    %p191 = pneg %p185
    %p192 = scmp.eq.s32.totalorder %s12, 1
    %p193 = por %p191, %p192
    %p194 = scmp.ne.s32.totalorder %s186, %s189
    %p195 = scmp.eq.s32.totalorder %s12, 0
    %p196 = por %p194, %p195
    %p197 = scmp.ne.s32.totalorder %s186, %s189
    %p198 = scmp.eq.s32.totalorder %s17, 1
    %p199 = por %p197, %p198
    %p200 = scmp.ne.s32.totalorder %s189, %s190
    %p201 = scmp.eq.s32.totalorder %s17, 0
    %p202 = por %p200, %p201
    %p203 = scmp.ne.s32.totalorder %s189, %s190
    %p204 = scmp.eq.s32.totalorder %s18, 1
    %p205 = por %p203, %p204
    %p207 = scmp.ne.s32.totalorder %s190, %s206
    %p208 = scmp.eq.s32.totalorder %s18, 0
    %p209 = por %p207, %p208
    %p210 = scmp.le.s32.totalorder 1, %s12
    %p211 = scmp.lt.s32.totalorder %s12, 3
    %p212 = pnand %p210, %p211
    %p213 = pneg %p212
    // Predicated region
    $region9: #{transformer_forward.7} parent=5 // pred_check
      _
    $region10: #{transformer_forward.7} parent=5 // pred_check_branch
      %215 = sbr.rel (%p212) target = $region12
    $region11: #{transformer_forward.7} parent=5 // pred_region
      %s216 = ssub.s32 %s12, 1
      // Predicated region
      $region13: #{transformer_forward.7} parent=11 // pred_check
        %p217 = pneg %p153
      $region14: #{transformer_forward.7} parent=11 // pred_check_branch
        %219 = sbr.rel (%p217) target = $region16
      $region15: #{transformer_forward.7} parent=11 // pred_region
        _
      $region16: #{transformer_forward.7} parent=11 // pred_fallthru
        _
      // Predicated region
      $region17: #{transformer_forward.7} parent=11 // pred_check
        %p220 = pneg %p174
      $region18: #{transformer_forward.7} parent=11 // pred_check_branch
        %222 = sbr.rel (%p220) target = $region20
      $region19: #{transformer_forward.7} parent=11 // pred_region
        _
      $region20: #{transformer_forward.7} parent=11 // pred_fallthru
        _
    $region12: #{transformer_forward.7} parent=5 // pred_fallthru
      _
    %p223 = scmp.lt.s32.totalorder %s12, 2
    // Predicated region
    $region21: #{transformer_forward.7} parent=5 // pred_check
      %p224 = pneg %p223
    $region22: #{transformer_forward.7} parent=5 // pred_check_branch
      %226 = sbr.rel (%p224) target = $region24
    $region23: #{transformer_forward.7} parent=5 // pred_region
      // Predicated region
      $region25: #{transformer_forward.7} parent=23 // pred_check
        %p227 = pneg %p46
      $region26: #{transformer_forward.7} parent=23 // pred_check_branch
        %229 = sbr.rel (%p227) target = $region28
      $region27: #{transformer_forward.7} parent=23 // pred_region
        %p230 = scmp.lt.s32.totalorder %s19, 1
        %s231 = scalar_select %p230, %s19, 1
        %p232 = scmp.lt.s32.totalorder %s20, 0
        %s233 = scalar_select %p232, %s20, 0
        %s234 = sadd.s32 %s233, %s231
        %s235 = smul.addr %s234, 8
        %s236 = scalar_lea.vmem %s0, %s235
      $region28: #{transformer_forward.7} parent=23 // pred_fallthru
        _
      // Predicated region
      $region29: #{transformer_forward.7} parent=23 // pred_check
        %p237 = pneg %p74
      $region30: #{transformer_forward.7} parent=23 // pred_check_branch
        %239 = sbr.rel (%p237) target = $region32
      $region31: #{transformer_forward.7} parent=23 // pred_region
        %p240 = scmp.lt.s32.totalorder %s19, 1
        %s241 = scalar_select %p240, %s19, 1
        %p242 = scmp.lt.s32.totalorder %s20, 0
        %s243 = scalar_select %p242, %s20, 0
        %s244 = sadd.s32 %s243, %s241
        %s245 = smul.addr %s244, 4
        %s246 = scalar_lea.vmem %s1, %s245
      $region32: #{transformer_forward.7} parent=23 // pred_fallthru
        _
      // Predicated region
      $region33: #{transformer_forward.7} parent=23 // pred_check
        %p247 = pneg %p100
      $region34: #{transformer_forward.7} parent=23 // pred_check_branch
        %249 = sbr.rel (%p247) target = $region36
      $region35: #{transformer_forward.7} parent=23 // pred_region
        %p250 = scmp.lt.s32.totalorder %s19, 1
        %s251 = scalar_select %p250, %s19, 1
        %s252 = smul.addr %s251, 4
        %s253 = scalar_lea.vmem %s2, %s252
      $region36: #{transformer_forward.7} parent=23 // pred_fallthru
        _
      // Predicated region
      $region37: #{transformer_forward.7} parent=23 // pred_check
        %p254 = pneg %p126
      $region38: #{transformer_forward.7} parent=23 // pred_check_branch
        %256 = sbr.rel (%p254) target = $region40
      $region39: #{transformer_forward.7} parent=23 // pred_region
        %p257 = scmp.lt.s32.totalorder %s19, 1
        %s258 = scalar_select %p257, %s19, 1
        %s259 = smul.addr %s258, 4
        %s260 = scalar_lea.vmem %s3, %s259
      $region40: #{transformer_forward.7} parent=23 // pred_fallthru
        _
    $region24: #{transformer_forward.7} parent=5 // pred_fallthru
      _
    %p261 = scmp.le.s32.totalorder 1, %s12
    %p262 = scmp.lt.s32.totalorder %s12, 3
    %p263 = pnand %p261, %p262
    %p264 = pneg %p263
    // Predicated region
    $region41: #{transformer_forward.7} parent=5 // pred_check
      _
    $region42: #{transformer_forward.7} parent=5 // pred_check_branch
      %266 = sbr.rel (%p263) target = $region44
    $region43: #{transformer_forward.7} parent=5 // pred_region
      %s267 = ssub.s32 %s12, 1
      %p268 = scmp.lt.s32.totalorder %s21, 1
      %s269 = scalar_select %p268, %s21, 1
      %p270 = scmp.lt.s32.totalorder %s22, 0
      %s271 = scalar_select %p270, %s22, 0
      %s272 = sadd.s32 %s271, %s269
      %s273 = smul.addr %s272, 8
      %s274 = scalar_lea.vmem %s0, %s273
      %p275 = pneg %p52
      %p276 = pneg %p49
      %p277 = scmp.lt.s32.totalorder %s21, 1
      %s278 = scalar_select %p277, %s21, 1
      %p279 = scmp.lt.s32.totalorder %s22, 0
      %s280 = scalar_select %p279, %s22, 0
      %s281 = sadd.s32 %s280, %s278
      %s282 = smul.addr %s281, 4
      %s283 = scalar_lea.vmem %s1, %s282
      %p284 = pneg %p80
      %p285 = pneg %p77
      %p286 = scmp.lt.s32.totalorder %s21, 1
      %s287 = scalar_select %p286, %s21, 1
      %s288 = smul.addr %s287, 4
      %s289 = scalar_lea.vmem %s2, %s288
      %p290 = pneg %p106
      %p291 = pneg %p103
      %p292 = scmp.lt.s32.totalorder %s21, 1
      %s293 = scalar_select %p292, %s21, 1
      %s294 = smul.addr %s293, 4
      %s295 = scalar_lea.vmem %s3, %s294
      %p296 = pneg %p132
      %p297 = pneg %p129
      %p298 = pneg %p153
      %p299 = pneg %p150
      %p300 = pneg %p174
      %p301 = pneg %p171
      %p302 = pneg %p202
      %p303 = pneg %p199
      %p304 = scmp.lt.s32.totalorder %s21, 1
      %s305 = scalar_select %p304, %s21, 1
      %p306 = scmp.lt.s32.totalorder %s22, 0
      %s307 = scalar_select %p306, %s22, 0
      %s308 = sadd.s32 %s307, %s305
      %s309 = smul.addr %s308, 8
      %s310 = scalar_lea.vmem %s6, %s309
      %p311 = scmp.lt.s32.totalorder %s21, 1
      %s312 = scalar_select %p311, %s21, 1
      %p313 = scmp.lt.s32.totalorder %s22, 0
      %s314 = scalar_select %p313, %s22, 0
      %s315 = sadd.s32 %s314, %s312
      %s316 = smul.addr %s315, 8
      %s317 = scalar_lea.vmem %s0, %s316
      %p318 = scmp.lt.s32.totalorder %s21, 1
      %s319 = scalar_select %p318, %s21, 1
      %p320 = scmp.lt.s32.totalorder %s22, 0
      %s321 = scalar_select %p320, %s22, 0
      %s322 = sadd.s32 %s321, %s319
      %s323 = smul.addr %s322, 4
      %s324 = scalar_lea.vmem %s1, %s323
      %p325 = scmp.lt.s32.totalorder %s21, 1
      %s326 = scalar_select %p325, %s21, 1
      %s327 = smul.addr %s326, 4
      %s328 = scalar_lea.vmem %s2, %s327
      %p329 = scmp.lt.s32.totalorder %s21, 1
      %s330 = scalar_select %p329, %s21, 1
      %s331 = smul.addr %s330, 4
      %s332 = scalar_lea.vmem %s3, %s331
      %p333 = scmp.lt.s32.totalorder %s21, 1
      %s334 = scalar_select %p333, %s21, 1
      %p335 = scmp.lt.s32.totalorder %s22, 0
      %s336 = scalar_select %p335, %s22, 0
      %s337 = sadd.s32 %s336, %s334
      %s338 = smul.addr %s337, 8
      %s339 = scalar_lea.vmem %s6, %s338
      %v341 = vld [vmem:[%s317] sm:$0xff]
      %v342 = vld [vmem:[%s324] sm:$0xf]
      %344 = vrot.lane.b32.xlu0 %v342, 120
      %v345 = vpop.permute.xlu0 %344
      %346 = vrot.lane.b32.xlu0 %v342, 112
      %v347 = vpop.permute.xlu0 %346
      %348 = vrot.lane.b32.xlu0 %v342, 104
      %v349 = vpop.permute.xlu0 %348
      %v352 = vpack.i.b16 %v345, %v342
      %v353 = vshrl.u32 %v342, 16
      %v354 = vshrl.u32 %v345, 16
      %v355 = vpack.i.b16 %v354, %v353
      %v358 = vpack.i.b16 %v349, %v347
      %v359 = vshrl.u32 %v347, 16
      %v360 = vshrl.u32 %v349, 16
      %v361 = vpack.i.b16 %v360, %v359
      %v364 = vunpack.c.l.s4 1983009808
      %v365 = vunpack.c.0.s8 %v364
      %v366 = vperm.slane %v352, %v365
      %v369 = vunpack.c.l.s4 1983009808
      %v370 = vunpack.c.0.s8 %v369
      %v371 = vperm.slane %v358, %v370
      %v372 = vrot.slane %v371, 4
      %vm373 = vcmask 1047556
      %v374 = vsel %vm373, %v372, %v366
      %v375 = vrot.slane %v366, 4
      %v376 = vsel %vm373, %v371, %v375
      %v378 = vunpack.c.l.s4 1934713408
      %v379 = vunpack.c.0.s8 %v378
      %v380 = vperm.slane %v374, %v379
      %v382 = vunpack.c.l.s4 1934713408
      %v383 = vunpack.c.0.s8 %v382
      %v384 = vperm.slane %v376, %v383
      %v385 = vrot.slane %v380, 4
      %v386 = vsel %vm373, 0, %v385
      %v387 = vrot.slane %v384, 4
      %v388 = vsel %vm373, 0, %v387
      %v391 = vunpack.c.l.s4 1983009808
      %v392 = vunpack.c.0.s8 %v391
      %v393 = vperm.slane %v355, %v392
      %v396 = vunpack.c.l.s4 1983009808
      %v397 = vunpack.c.0.s8 %v396
      %v398 = vperm.slane %v361, %v397
      %v399 = vrot.slane %v398, 4
      %v400 = vsel %vm373, %v399, %v393
      %v401 = vrot.slane %v393, 4
      %v402 = vsel %vm373, %v398, %v401
      %v404 = vunpack.c.l.s4 1934713408
      %v405 = vunpack.c.0.s8 %v404
      %v406 = vperm.slane %v400, %v405
      %v408 = vunpack.c.l.s4 1934713408
      %v409 = vunpack.c.0.s8 %v408
      %v410 = vperm.slane %v402, %v409
      %v411 = vrot.slane %v406, 4
      %v412 = vsel %vm373, 0, %v411
      %v413 = vrot.slane %v410, 4
      %v414 = vsel %vm373, 0, %v413
      %v415 = vsel %vm373, %v387, %v380
      %v417 = vunpack.c.l.s4 1983009808
      %v418 = vunpack.c.0.s8 %v417
      %v419 = vperm.slane %v415, %v418
      %v420 = vrot.slane %v388, 4
      %v421 = vsel %vm373, %v420, %v386
      %v423 = vunpack.c.l.s4 1983009808
      %v424 = vunpack.c.0.s8 %v423
      %v425 = vperm.slane %v421, %v424
      %v426 = vrot.slane %v425, 4
      %v427 = vsel %vm373, %v426, %v419
      %v429 = vunpack.c.l.s4 1934713408
      %v430 = vunpack.c.0.s8 %v429
      %v431 = vperm.slane %v427, %v430
      %v432 = vrot.slane %v431, 4
      %v433 = vsel %vm373, 0, %v432
      %v434 = vsel %vm373, %v413, %v406
      %v436 = vunpack.c.l.s4 1983009808
      %v437 = vunpack.c.0.s8 %v436
      %v438 = vperm.slane %v434, %v437
      %v439 = vrot.slane %v414, 4
      %v440 = vsel %vm373, %v439, %v412
      %v442 = vunpack.c.l.s4 1983009808
      %v443 = vunpack.c.0.s8 %v442
      %v444 = vperm.slane %v440, %v443
      %v445 = vrot.slane %v444, 4
      %v446 = vsel %vm373, %v445, %v438
      %v448 = vunpack.c.l.s4 1934713408
      %v449 = vunpack.c.0.s8 %v448
      %v450 = vperm.slane %v446, %v449
      %v451 = vrot.slane %v450, 4
      %v452 = vsel %vm373, 0, %v451
      %v455 = vpack.i.b16 %v450, %v431
      %v456 = vshrl.u32 %v431, 16
      %v457 = vshrl.u32 %v450, 16
      %v458 = vpack.i.b16 %v457, %v456
      %v461 = vpack.i.b16 %v452, %v433
      %v462 = vshrl.u32 %v433, 16
      %v463 = vshrl.u32 %v452, 16
      %v464 = vpack.i.b16 %v463, %v462
      %v465 = vld [vmem:[%s328] sm:$0xf]
      %467 = vrot.lane.b32.xlu0 %v465, 120
      %v468 = vpop.permute.xlu0 %467
      %469 = vrot.lane.b32.xlu0 %v465, 112
      %v470 = vpop.permute.xlu0 %469
      %471 = vrot.lane.b32.xlu0 %v465, 104
      %v472 = vpop.permute.xlu0 %471
      %v475 = vpack.i.b16 %v468, %v465
      %v476 = vshrl.u32 %v465, 16
      %v477 = vshrl.u32 %v468, 16
      %v478 = vpack.i.b16 %v477, %v476
      %v481 = vpack.i.b16 %v472, %v470
      %v482 = vshrl.u32 %v470, 16
      %v483 = vshrl.u32 %v472, 16
      %v484 = vpack.i.b16 %v483, %v482
      %v487 = vunpack.c.l.s4 1983009808
      %v488 = vunpack.c.0.s8 %v487
      %v489 = vperm.slane %v475, %v488
      %v492 = vunpack.c.l.s4 1983009808
      %v493 = vunpack.c.0.s8 %v492
      %v494 = vperm.slane %v481, %v493
      %v495 = vrot.slane %v494, 4
      %v496 = vsel %vm373, %v495, %v489
      %v497 = vrot.slane %v489, 4
      %v498 = vsel %vm373, %v494, %v497
      %v500 = vunpack.c.l.s4 1934713408
      %v501 = vunpack.c.0.s8 %v500
      %v502 = vperm.slane %v496, %v501
      %v504 = vunpack.c.l.s4 1934713408
      %v505 = vunpack.c.0.s8 %v504
      %v506 = vperm.slane %v498, %v505
      %v507 = vrot.slane %v502, 4
      %v508 = vsel %vm373, 0, %v507
      %v509 = vrot.slane %v506, 4
      %v510 = vsel %vm373, 0, %v509
      %v513 = vunpack.c.l.s4 1983009808
      %v514 = vunpack.c.0.s8 %v513
      %v515 = vperm.slane %v478, %v514
      %v518 = vunpack.c.l.s4 1983009808
      %v519 = vunpack.c.0.s8 %v518
      %v520 = vperm.slane %v484, %v519
      %v521 = vrot.slane %v520, 4
      %v522 = vsel %vm373, %v521, %v515
      %v523 = vrot.slane %v515, 4
      %v524 = vsel %vm373, %v520, %v523
      %v526 = vunpack.c.l.s4 1934713408
      %v527 = vunpack.c.0.s8 %v526
      %v528 = vperm.slane %v522, %v527
      %v530 = vunpack.c.l.s4 1934713408
      %v531 = vunpack.c.0.s8 %v530
      %v532 = vperm.slane %v524, %v531
      %v533 = vrot.slane %v528, 4
      %v534 = vsel %vm373, 0, %v533
      %v535 = vrot.slane %v532, 4
      %v536 = vsel %vm373, 0, %v535
      %v537 = vsel %vm373, %v509, %v502
      %v539 = vunpack.c.l.s4 1983009808
      %v540 = vunpack.c.0.s8 %v539
      %v541 = vperm.slane %v537, %v540
      %v542 = vrot.slane %v510, 4
      %v543 = vsel %vm373, %v542, %v508
      %v545 = vunpack.c.l.s4 1983009808
      %v546 = vunpack.c.0.s8 %v545
      %v547 = vperm.slane %v543, %v546
      %v548 = vrot.slane %v547, 4
      %v549 = vsel %vm373, %v548, %v541
      %v551 = vunpack.c.l.s4 1934713408
      %v552 = vunpack.c.0.s8 %v551
      %v553 = vperm.slane %v549, %v552
      %v554 = vrot.slane %v553, 4
      %v555 = vsel %vm373, 0, %v554
      %v556 = vsel %vm373, %v535, %v528
      %v558 = vunpack.c.l.s4 1983009808
      %v559 = vunpack.c.0.s8 %v558
      %v560 = vperm.slane %v556, %v559
      %v561 = vrot.slane %v536, 4
      %v562 = vsel %vm373, %v561, %v534
      %v564 = vunpack.c.l.s4 1983009808
      %v565 = vunpack.c.0.s8 %v564
      %v566 = vperm.slane %v562, %v565
      %v567 = vrot.slane %v566, 4
      %v568 = vsel %vm373, %v567, %v560
      %v570 = vunpack.c.l.s4 1934713408
      %v571 = vunpack.c.0.s8 %v570
      %v572 = vperm.slane %v568, %v571
      %v573 = vrot.slane %v572, 4
      %v574 = vsel %vm373, 0, %v573
      %v577 = vpack.i.b16 %v572, %v553
      %v578 = vshrl.u32 %v553, 16
      %v579 = vshrl.u32 %v572, 16
      %v580 = vpack.i.b16 %v579, %v578
      %v583 = vpack.i.b16 %v574, %v555
      %v584 = vshrl.u32 %v555, 16
      %v585 = vshrl.u32 %v574, 16
      %v586 = vpack.i.b16 %v585, %v584
      %v587 = vld [vmem:[%s332] sm:$0xf]
      %589 = vrot.lane.b32.xlu0 %v587, 120
      %v590 = vpop.permute.xlu0 %589
      %591 = vrot.lane.b32.xlu0 %v587, 112
      %v592 = vpop.permute.xlu0 %591
      %593 = vrot.lane.b32.xlu0 %v587, 104
      %v594 = vpop.permute.xlu0 %593
      %v597 = vpack.i.b16 %v590, %v587
      %v598 = vshrl.u32 %v587, 16
      %v599 = vshrl.u32 %v590, 16
      %v600 = vpack.i.b16 %v599, %v598
      %v603 = vpack.i.b16 %v594, %v592
      %v604 = vshrl.u32 %v592, 16
      %v605 = vshrl.u32 %v594, 16
      %v606 = vpack.i.b16 %v605, %v604
      %v609 = vunpack.c.l.s4 1983009808
      %v610 = vunpack.c.0.s8 %v609
      %v611 = vperm.slane %v597, %v610
      %v614 = vunpack.c.l.s4 1983009808
      %v615 = vunpack.c.0.s8 %v614
      %v616 = vperm.slane %v603, %v615
      %v617 = vrot.slane %v616, 4
      %v618 = vsel %vm373, %v617, %v611
      %v619 = vrot.slane %v611, 4
      %v620 = vsel %vm373, %v616, %v619
      %v622 = vunpack.c.l.s4 1934713408
      %v623 = vunpack.c.0.s8 %v622
      %v624 = vperm.slane %v618, %v623
      %v626 = vunpack.c.l.s4 1934713408
      %v627 = vunpack.c.0.s8 %v626
      %v628 = vperm.slane %v620, %v627
      %v629 = vrot.slane %v624, 4
      %v630 = vsel %vm373, 0, %v629
      %v631 = vrot.slane %v628, 4
      %v632 = vsel %vm373, 0, %v631
      %v635 = vunpack.c.l.s4 1983009808
      %v636 = vunpack.c.0.s8 %v635
      %v637 = vperm.slane %v600, %v636
      %v640 = vunpack.c.l.s4 1983009808
      %v641 = vunpack.c.0.s8 %v640
      %v642 = vperm.slane %v606, %v641
      %v643 = vrot.slane %v642, 4
      %v644 = vsel %vm373, %v643, %v637
      %v645 = vrot.slane %v637, 4
      %v646 = vsel %vm373, %v642, %v645
      %v648 = vunpack.c.l.s4 1934713408
      %v649 = vunpack.c.0.s8 %v648
      %v650 = vperm.slane %v644, %v649
      %v652 = vunpack.c.l.s4 1934713408
      %v653 = vunpack.c.0.s8 %v652
      %v654 = vperm.slane %v646, %v653
      %v655 = vrot.slane %v650, 4
      %v656 = vsel %vm373, 0, %v655
      %v657 = vrot.slane %v654, 4
      %v658 = vsel %vm373, 0, %v657
      %v659 = vsel %vm373, %v631, %v624
      %v661 = vunpack.c.l.s4 1983009808
      %v662 = vunpack.c.0.s8 %v661
      %v663 = vperm.slane %v659, %v662
      %v664 = vrot.slane %v632, 4
      %v665 = vsel %vm373, %v664, %v630
      %v667 = vunpack.c.l.s4 1983009808
      %v668 = vunpack.c.0.s8 %v667
      %v669 = vperm.slane %v665, %v668
      %v670 = vrot.slane %v669, 4
      %v671 = vsel %vm373, %v670, %v663
      %v673 = vunpack.c.l.s4 1934713408
      %v674 = vunpack.c.0.s8 %v673
      %v675 = vperm.slane %v671, %v674
      %v676 = vrot.slane %v675, 4
      %v677 = vsel %vm373, 0, %v676
      %v678 = vsel %vm373, %v657, %v650
      %v680 = vunpack.c.l.s4 1983009808
      %v681 = vunpack.c.0.s8 %v680
      %v682 = vperm.slane %v678, %v681
      %v683 = vrot.slane %v658, 4
      %v684 = vsel %vm373, %v683, %v656
      %v686 = vunpack.c.l.s4 1983009808
      %v687 = vunpack.c.0.s8 %v686
      %v688 = vperm.slane %v684, %v687
      %v689 = vrot.slane %v688, 4
      %v690 = vsel %vm373, %v689, %v682
      %v692 = vunpack.c.l.s4 1934713408
      %v693 = vunpack.c.0.s8 %v692
      %v694 = vperm.slane %v690, %v693
      %v695 = vrot.slane %v694, 4
      %v696 = vsel %vm373, 0, %v695
      %v699 = vpack.i.b16 %v694, %v675
      %v700 = vshrl.u32 %v675, 16
      %v701 = vshrl.u32 %v694, 16
      %v702 = vpack.i.b16 %v701, %v700
      %v705 = vpack.i.b16 %v696, %v677
      %v706 = vshrl.u32 %v677, 16
      %v707 = vshrl.u32 %v696, 16
      %v708 = vpack.i.b16 %v707, %v706
      %vm709 = vcmask 64512
      %v711 = vsel %vm709, %v455, 0
      %v714 = vsel %vm709, %v577, 0
      %716 = vmatpush.bf16.xpose.msra.mxu0 0
      %717 = vmatpush.bf16.xpose.msra.mxu0 0
      %718 = vmatpush.bf16.xpose.msra.mxu0 0
      %719 = vmatpush.bf16.xpose.msra.mxu0 0
      %720 = vmatpush.bf16.xpose.msra.mxu0 0
      %721 = vmatpush.bf16.xpose.msra.mxu0 0
      %722 = vmatpush.bf16.xpose.msra.mxu0 0
      %723 = vmatpush.bf16.xpose.msra.mxu0 %v714
      %724 = vmatmul.bf16.gmra.mxu0 %v711
      %v725 = vpop.f32.mrf.mxu0
      %v726 = vadd.f32 0.0, %v725
      %v727 = vpop.f32.mrf.mxu0
      %728 = vdwg.mxu0
      %v730 = vsel %vm709, %v458, 0
      %v733 = vsel %vm709, %v580, 0
      %735 = vmatpush.bf16.xpose.msra.mxu0 0
      %736 = vmatpush.bf16.xpose.msra.mxu0 0
      %737 = vmatpush.bf16.xpose.msra.mxu0 0
      %738 = vmatpush.bf16.xpose.msra.mxu0 0
      %739 = vmatpush.bf16.xpose.msra.mxu0 0
      %740 = vmatpush.bf16.xpose.msra.mxu0 0
      %741 = vmatpush.bf16.xpose.msra.mxu0 0
      %742 = vmatpush.bf16.xpose.msra.mxu0 %v733
      %743 = vmatmul.bf16.gmra.mxu0 %v730
      %v744 = vpop.f32.mrf.mxu0
      %v745 = vadd.f32 0.0, %v744
      %v746 = vpop.f32.mrf.mxu0
      %747 = vdwg.mxu0
      %v749 = vsel %vm709, %v461, 0
      %v752 = vsel %vm709, %v583, 0
      %754 = vmatpush.bf16.xpose.msra.mxu0 0
      %755 = vmatpush.bf16.xpose.msra.mxu0 0
      %756 = vmatpush.bf16.xpose.msra.mxu0 0
      %757 = vmatpush.bf16.xpose.msra.mxu0 0
      %758 = vmatpush.bf16.xpose.msra.mxu0 0
      %759 = vmatpush.bf16.xpose.msra.mxu0 0
      %760 = vmatpush.bf16.xpose.msra.mxu0 0
      %761 = vmatpush.bf16.xpose.msra.mxu0 %v752
      %762 = vmatmul.bf16.gmra.mxu0 %v749
      %v763 = vpop.f32.mrf.mxu0
      %v764 = vadd.f32 0.0, %v763
      %v765 = vpop.f32.mrf.mxu0
      %766 = vdwg.mxu0
      %v768 = vsel %vm709, %v464, 0
      %v771 = vsel %vm709, %v586, 0
      %773 = vmatpush.bf16.xpose.msra.mxu0 0
      %774 = vmatpush.bf16.xpose.msra.mxu0 0
      %775 = vmatpush.bf16.xpose.msra.mxu0 0
      %776 = vmatpush.bf16.xpose.msra.mxu0 0
      %777 = vmatpush.bf16.xpose.msra.mxu0 0
      %778 = vmatpush.bf16.xpose.msra.mxu0 0
      %779 = vmatpush.bf16.xpose.msra.mxu0 0
      %780 = vmatpush.bf16.xpose.msra.mxu0 %v771
      %781 = vmatmul.bf16.gmra.mxu0 %v768
      %v782 = vpop.f32.mrf.mxu0
      %v783 = vadd.f32 0.0, %v782
      %v784 = vpop.f32.mrf.mxu0
      %785 = vdwg.mxu0
      %v786 = vsel %vm709, %v726, -inf
      %787 = vmax.xlane.f32.xlu0 %v786
      %v788 = vpop.xlane.xlu0 %787
      %v789 = vsel %vm709, %v745, -inf
      %790 = vmax.xlane.f32.xlu0 %v789
      %v791 = vpop.xlane.xlu0 %790
      %v792 = vsel %vm709, %v764, -inf
      %793 = vmax.xlane.f32.xlu0 %v792
      %v794 = vpop.xlane.xlu0 %793
      %v795 = vsel %vm709, %v783, -inf
      %796 = vmax.xlane.f32.xlu0 %v795
      %v797 = vpop.xlane.xlu0 %796
      %v798 = vsub.f32 %v726, %v788
      %v799 = vsub.f32 %v745, %v791
      %v800 = vsub.f32 %v764, %v794
      %v801 = vsub.f32 %v783, %v797
      %v802 = vmul.f32 %v798, 1.442695
      %v803 = vpow.pop %v802
      %v804 = vmul.f32 %v799, 1.442695
      %v805 = vpow.pop %v804
      %v806 = vmul.f32 %v800, 1.442695
      %v807 = vpow.pop %v806
      %v808 = vmul.f32 %v801, 1.442695
      %v809 = vpow.pop %v808
      %v810 = vsel %vm709, %v803, 0.0
      %811 = vadd.xlane.f32.xlu0 %v810
      %v812 = vpop.xlane.xlu0 %811
      %v813 = vsel %vm709, %v805, 0.0
      %814 = vadd.xlane.f32.xlu0 %v813
      %v815 = vpop.xlane.xlu0 %814
      %v816 = vsel %vm709, %v807, 0.0
      %817 = vadd.xlane.f32.xlu0 %v816
      %v818 = vpop.xlane.xlu0 %817
      %v819 = vsel %vm709, %v809, 0.0
      %820 = vadd.xlane.f32.xlu0 %v819
      %v821 = vpop.xlane.xlu0 %820
      %v822 = vrcp.pop %v812
      %v823 = vrcp.pop %v815
      %v824 = vrcp.pop %v818
      %v825 = vrcp.pop %v821
      %v826 = vmul.f32 %v803, %v822
      %v827 = vmul.f32 %v805, %v823
      %v828 = vmul.f32 %v807, %v824
      %v829 = vmul.f32 %v809, %v825
      %v830 = vpack.c.bf16 %v826, %v826
      %v831 = vpack.c.bf16 %v827, %v827
      %v832 = vpack.c.bf16 %v828, %v828
      %v833 = vpack.c.bf16 %v829, %v829
      %v835 = vsel %vm709, %v830, 0
      %vm837 = vcmask 1043456
      %v839 = vsel %vm837, %v699, 0
      %841 = vmatpush.bf16.msra.mxu0 0
      %842 = vmatpush.bf16.msra.mxu0 0
      %843 = vmatpush.bf16.msra.mxu0 0
      %844 = vmatpush.bf16.msra.mxu0 0
      %845 = vmatpush.bf16.msra.mxu0 0
      %846 = vmatpush.bf16.msra.mxu0 0
      %847 = vmatpush.bf16.msra.mxu0 0
      %848 = vmatpush.bf16.msra.mxu0 %v839
      %849 = vmatmul.bf16.gmra.mxu0 %v835
      %v850 = vpop.f32.mrf.mxu0
      %v851 = vadd.f32 0.0, %v850
      %v852 = vpop.f32.mrf.mxu0
      %853 = vdwg.mxu0
      %v855 = vsel %vm709, %v831, 0
      %v858 = vsel %vm837, %v702, 0
      %860 = vmatpush.bf16.msra.mxu0 0
      %861 = vmatpush.bf16.msra.mxu0 0
      %862 = vmatpush.bf16.msra.mxu0 0
      %863 = vmatpush.bf16.msra.mxu0 0
      %864 = vmatpush.bf16.msra.mxu0 0
      %865 = vmatpush.bf16.msra.mxu0 0
      %866 = vmatpush.bf16.msra.mxu0 0
      %867 = vmatpush.bf16.msra.mxu0 %v858
      %868 = vmatmul.bf16.gmra.mxu0 %v855
      %v869 = vpop.f32.mrf.mxu0
      %v870 = vadd.f32 0.0, %v869
      %v871 = vpop.f32.mrf.mxu0
      %872 = vdwg.mxu0
      %v874 = vsel %vm709, %v832, 0
      %v877 = vsel %vm837, %v705, 0
      %879 = vmatpush.bf16.msra.mxu0 0
      %880 = vmatpush.bf16.msra.mxu0 0
      %881 = vmatpush.bf16.msra.mxu0 0
      %882 = vmatpush.bf16.msra.mxu0 0
      %883 = vmatpush.bf16.msra.mxu0 0
      %884 = vmatpush.bf16.msra.mxu0 0
      %885 = vmatpush.bf16.msra.mxu0 0
      %886 = vmatpush.bf16.msra.mxu0 %v877
      %887 = vmatmul.bf16.gmra.mxu0 %v874
      %v888 = vpop.f32.mrf.mxu0
      %v889 = vadd.f32 0.0, %v888
      %v890 = vpop.f32.mrf.mxu0
      %891 = vdwg.mxu0
      %v893 = vsel %vm709, %v833, 0
      %v896 = vsel %vm837, %v708, 0
      %898 = vmatpush.bf16.msra.mxu0 0
      %899 = vmatpush.bf16.msra.mxu0 0
      %900 = vmatpush.bf16.msra.mxu0 0
      %901 = vmatpush.bf16.msra.mxu0 0
      %902 = vmatpush.bf16.msra.mxu0 0
      %903 = vmatpush.bf16.msra.mxu0 0
      %904 = vmatpush.bf16.msra.mxu0 0
      %905 = vmatpush.bf16.msra.mxu0 %v896
      %906 = vmatmul.bf16.gmra.mxu0 %v893
      %v907 = vpop.f32.mrf.mxu0
      %v908 = vadd.f32 0.0, %v907
      %v909 = vpop.f32.mrf.mxu0
      %910 = vdwg.mxu0
      %v911 = vrot.slane %v889, 4
      %vm912 = vcmask 1047556
      %v913 = vsel %vm912, %v911, %v851
      %v914 = vrot.slane %v851, 4
      %v915 = vsel %vm912, %v889, %v914
      %v917 = vunpack.c.l.s4 1983009808
      %v918 = vunpack.c.0.s8 %v917
      %v919 = vperm.slane %v913, %v918
      %v921 = vunpack.c.l.s4 1983009808
      %v922 = vunpack.c.0.s8 %v921
      %v923 = vperm.slane %v915, %v922
      %v924 = vrot.slane %v908, 4
      %v925 = vsel %vm912, %v924, %v870
      %v926 = vrot.slane %v870, 4
      %v927 = vsel %vm912, %v908, %v926
      %v929 = vunpack.c.l.s4 1983009808
      %v930 = vunpack.c.0.s8 %v929
      %v931 = vperm.slane %v925, %v930
      %v933 = vunpack.c.l.s4 1983009808
      %v934 = vunpack.c.0.s8 %v933
      %v935 = vperm.slane %v927, %v934
      %v936 = vrot.slane %v931, 4
      %v937 = vsel %vm912, %v936, %v919
      %v938 = vrot.slane %v919, 4
      %v939 = vsel %vm912, %v931, %v938
      %v941 = vunpack.c.l.s4 1934713408
      %v942 = vunpack.c.0.s8 %v941
      %v943 = vperm.slane %v937, %v942
      %v945 = vunpack.c.l.s4 1934713408
      %v946 = vunpack.c.0.s8 %v945
      %v947 = vperm.slane %v939, %v946
      %v948 = vrot.slane %v935, 4
      %v949 = vsel %vm912, %v948, %v923
      %v950 = vrot.slane %v923, 4
      %v951 = vsel %vm912, %v935, %v950
      %v953 = vunpack.c.l.s4 1934713408
      %v954 = vunpack.c.0.s8 %v953
      %v955 = vperm.slane %v949, %v954
      %v957 = vunpack.c.l.s4 1934713408
      %v958 = vunpack.c.0.s8 %v957
      %v959 = vperm.slane %v951, %v958
      %v960 = vrot.slane %v943, 4
      %v961 = vsel %vm912, 0.0, %v960
      %v962 = vrot.slane %v947, 4
      %v963 = vsel %vm912, 0.0, %v962
      %v964 = vrot.slane %v955, 4
      %v965 = vsel %vm912, 0.0, %v964
      %v966 = vrot.slane %v959, 4
      %v967 = vsel %vm912, 0.0, %v966
      %v968 = vsel %vm912, %v962, %v943
      %v970 = vunpack.c.l.s4 1983009808
      %v971 = vunpack.c.0.s8 %v970
      %v972 = vperm.slane %v968, %v971
      %v973 = vrot.slane %v963, 4
      %v974 = vsel %vm912, %v973, %v961
      %v976 = vunpack.c.l.s4 1983009808
      %v977 = vunpack.c.0.s8 %v976
      %v978 = vperm.slane %v974, %v977
      %v979 = vsel %vm912, %v966, %v955
      %v981 = vunpack.c.l.s4 1983009808
      %v982 = vunpack.c.0.s8 %v981
      %v983 = vperm.slane %v979, %v982
      %v984 = vrot.slane %v967, 4
      %v985 = vsel %vm912, %v984, %v965
      %v987 = vunpack.c.l.s4 1983009808
      %v988 = vunpack.c.0.s8 %v987
      %v989 = vperm.slane %v985, %v988
      %v990 = vrot.slane %v978, 4
      %v991 = vsel %vm912, %v990, %v972
      %v992 = vrot.slane %v972, 4
      %v993 = vsel %vm912, %v978, %v992
      %v995 = vunpack.c.l.s4 1934713408
      %v996 = vunpack.c.0.s8 %v995
      %v997 = vperm.slane %v991, %v996
      %v999 = vunpack.c.l.s4 1934713408
      %v1000 = vunpack.c.0.s8 %v999
      %v1001 = vperm.slane %v993, %v1000
      %v1002 = vrot.slane %v989, 4
      %v1003 = vsel %vm912, %v1002, %v983
      %v1004 = vrot.slane %v983, 4
      %v1005 = vsel %vm912, %v989, %v1004
      %v1007 = vunpack.c.l.s4 1934713408
      %v1008 = vunpack.c.0.s8 %v1007
      %v1009 = vperm.slane %v1003, %v1008
      %v1011 = vunpack.c.l.s4 1934713408
      %v1012 = vunpack.c.0.s8 %v1011
      %v1013 = vperm.slane %v1005, %v1012
      %v1014 = vrot.slane %v1009, 4
      %v1015 = vsel %vm912, %v1014, %v997
      %v1016 = vrot.slane %v997, 4
      %v1017 = vsel %vm912, %v1009, %v1016
      %v1018 = vrot.slane %v1013, 4
      %v1019 = vsel %vm912, %v1018, %v1001
      %v1020 = vrot.slane %v1001, 4
      %v1021 = vsel %vm912, %v1013, %v1020
      %1023 = vrot.lane.b32.xlu0 %v1017, 8
      %v1024 = vpop.permute.xlu0 %1023
      %1027 = vrot.lane.b32.xlu0 %v1019, 16
      %v1028 = vpop.permute.xlu0 %1027
      %1031 = vrot.lane.b32.xlu0 %v1021, 24
      %v1032 = vpop.permute.xlu0 %1031
      %v1034 = vsel %vm709, %v1015, %v1024
      %vm1035 = vcmask 130048
      %v1036 = vsel %vm1035, %v1034, %v1028
      %vm1037 = vcmask 195584
      %v1038 = vsel %vm1037, %v1036, %v1032
      %v1039 = vpack.c.bf16 %v1038, %v1038
      %v1040 = vld [vmem:[%s4] sm:$0xf]
      %v1041 = vld [vmem:[%s4 + $0x4] sm:$0xf]
      %v1042 = vld [vmem:[%s4 + $0x8] sm:$0xf]
      %v1043 = vld [vmem:[%s4 + $0xc] sm:$0xf]
      %v1044 = vld [vmem:[%s5] sm:$0x1]
      %v1046 = vperm.slane %v1044, 0
      %v1052 = vunpack.c.l.b16 %v1040
      %v1053 = vunpack.c.l.b16 %v1041
      %v1054 = vunpack.c.l.b16 %v1042
      %v1055 = vunpack.c.l.b16 %v1043
      %v1056 = vpack.c.b16 %v1053, %v1052
      %v1057 = vpack.c.b16 %v1055, %v1054
      %vm1060 = vcmask 261120
      %v1062 = vsel %vm1060, %v1039, 0
      %1064 = vmatpush.bf16.msra.mxu0 0
      %1065 = vmatpush.bf16.msra.mxu0 0
      %1066 = vmatpush.bf16.msra.mxu0 0
      %1067 = vmatpush.bf16.msra.mxu0 0
      %1068 = vmatpush.bf16.msra.mxu0 0
      %1069 = vmatpush.bf16.msra.mxu0 0
      %1070 = vmatpush.bf16.msra.mxu0 %v1057
      %1071 = vmatpush.bf16.msra.mxu0 %v1056
      %1072 = vmatmul.bf16.gmra.mxu0 %v1062
      %v1073 = vpop.f32.mrf.mxu0
      %v1074 = vadd.f32 %v1046, %v1073
      %v1075 = vpop.f32.mrf.mxu0
      %1076 = vdwg.mxu0
      %v1077 = vadd.f32 %v341, %v1074
      %1078 = vst.msk [vmem:[%s339] sm:$0xff] %vm1060, %v1077
      %p1079 = scmp.lt.s32.totalorder %s21, 1
      %s1080 = scalar_select %p1079, %s21, 1
      %p1081 = scmp.lt.s32.totalorder %s22, 0
      %s1082 = scalar_select %p1081, %s22, 0
      %s1083 = sadd.s32 %s1082, %s1080
      %s1084 = smul.addr %s1083, 8
      %s1085 = scalar_lea.vmem %s6, %s1084
      // Predicated region
      $region45: #{transformer_forward.7} parent=43 // pred_check
        %p1086 = pneg %p199
      $region46: #{transformer_forward.7} parent=43 // pred_check_branch
        %1088 = sbr.rel (%p1086) target = $region48
      $region47: #{transformer_forward.7} parent=43 // pred_region
        _
      $region48: #{transformer_forward.7} parent=43 // pred_fallthru
        _
    $region44: #{transformer_forward.7} parent=5 // pred_fallthru
      _
    %p1089 = scmp.le.s32.totalorder 2, %s12
    // Predicated region
    $region49: #{transformer_forward.7} parent=5 // pred_check
      %p1090 = pneg %p1089
    $region50: #{transformer_forward.7} parent=5 // pred_check_branch
      %1092 = sbr.rel (%p1090) target = $region52
    $region51: #{transformer_forward.7} parent=5 // pred_region
      %s1093 = ssub.s32 %s12, 2
      // Predicated region
      $region53: #{transformer_forward.7} parent=51 // pred_check
        %p1094 = pneg %p205
      $region54: #{transformer_forward.7} parent=51 // pred_check_branch
        %1096 = sbr.rel (%p1094) target = $region56
      $region55: #{transformer_forward.7} parent=51 // pred_region
        %p1097 = scmp.lt.s32.totalorder %s23, 1
        %s1098 = scalar_select %p1097, %s23, 1
        %p1099 = scmp.lt.s32.totalorder %s24, 0
        %s1100 = scalar_select %p1099, %s24, 0
        %s1101 = sadd.s32 %s1100, %s1098
        %s1102 = smul.addr %s1101, 8
        %s1103 = scalar_lea.vmem %s6, %s1102
      $region56: #{transformer_forward.7} parent=51 // pred_fallthru
        _
    $region52: #{transformer_forward.7} parent=5 // pred_fallthru
      _
  $region6: #{transformer_forward.7} parent=0 // loop_footer
    %s16 = sadd.s32 1, %s12
  $region7: #{transformer_forward.7} parent=0 // loop_footer_branch
    %11 = sbr.rel target = $region3
  $region8: #{transformer_forward.7} parent=0 // loop_exit
    _

</llo_original>
